<compile_context>
chip_gen: v7x
topology: tpu7x:2x2x1
jax: 0.10.0
libtpu: 0.0.40
codegen_flags: <defaults>
</compile_context>

<pallas_src>
import functools

import jax
import jax.numpy as jnp
from jax.experimental import pallas as pl
from jax.experimental.pallas import tpu as pltpu


# ---------------------------------------------------------------------------
# Kernel: one (batch, layer) grid step of the stacked cross-domain attention;
# the classifier is fused into the last layer step.
# ---------------------------------------------------------------------------
def _decoder_kernel(a_ref, b_ref,
                    wq_ref, bq_ref, wk_ref, bk_ref, wv_ref, bv_ref,
                    wo_ref, bo_ref,
                    g1_ref, be1_ref, w1_ref, bf1_ref, w2_ref, bf2_ref,
                    g2_ref, be2_ref,
                    wc_ref, bc_ref,
                    o_ref,
                    a_scr,
                    *, num_heads):
    layer = pl.program_id(1)
    n_layers = pl.num_programs(1)

    # Carry the activation in VMEM scratch across the layer axis.
    @pl.when(layer == 0)
    def _init():
        a_scr[...] = a_ref[0]

    A = a_scr[...]                      # (La, E)  current activation
    Bm = b_ref[0]                       # (Lb, E)  fixed across layers
    La, E = A.shape
    H = num_heads
    hd = E // H
    scale = jnp.float32(1.0 / (hd ** 0.5))

    # ---- split projections: Q from A, K/V from B (no concat, no waste) -----
    Q = jnp.dot(A, wq_ref[0], preferred_element_type=jnp.float32) + bq_ref[0]
    K = jnp.dot(Bm, wk_ref[0], preferred_element_type=jnp.float32) + bk_ref[0]
    V = jnp.dot(Bm, wv_ref[0], preferred_element_type=jnp.float32) + bv_ref[0]

    # ---- per-head scaled-dot-product attention (2-D MXU calls only) --------
    # TODO(synk): attention dropout omitted (inference semantics).
    ctx_heads = []
    for h in range(H):                  # static unroll, H is small
        hs, he = h * hd, (h + 1) * hd
        q_h = Q[:, hs:he]               # (La, hd)
        k_h = K[:, hs:he]               # (Lb, hd)
        v_h = V[:, hs:he]               # (Lb, hd)
        s = jnp.einsum('qd,kd->qk', q_h, k_h,
                       preferred_element_type=jnp.float32) * scale
        s = s - jnp.max(s, axis=-1, keepdims=True)
        p = jnp.exp(s)
        p = p / jnp.sum(p, axis=-1, keepdims=True)     # exact normalization
        ctx_heads.append(jnp.dot(p, v_h, preferred_element_type=jnp.float32))

    # Merge heads once (lane concat) -> single depth-E output projection.
    ctx = jnp.concatenate(ctx_heads, axis=-1)          # (La, E)
    C = jnp.dot(ctx, wo_ref[0], preferred_element_type=jnp.float32) + bo_ref[0]

    # ---- residual + LayerNorm 1 (two-pass variance) -------------------------
    x = A + C
    mu = jnp.mean(x, axis=-1, keepdims=True)
    xc = x - mu
    var = jnp.mean(xc * xc, axis=-1, keepdims=True)
    A1 = xc * jax.lax.rsqrt(var + 1e-5) * g1_ref[0] + be1_ref[0]

    # ---- FFN: Linear -> ReLU -> Linear (dropout = identity) ----------------
    hmid = jnp.dot(A1, w1_ref[0], preferred_element_type=jnp.float32) + bf1_ref[0]
    hmid = jnp.maximum(hmid, 0.0)
    ffn_out = jnp.dot(hmid, w2_ref[0],
                      preferred_element_type=jnp.float32) + bf2_ref[0]

    # ---- residual + LayerNorm 2 ---------------------------------------------
    y = A1 + ffn_out
    mu2 = jnp.mean(y, axis=-1, keepdims=True)
    yc = y - mu2
    var2 = jnp.mean(yc * yc, axis=-1, keepdims=True)
    A2 = yc * jax.lax.rsqrt(var2 + 1e-5) * g2_ref[0] + be2_ref[0]

    a_scr[...] = A2                     # carry to next layer

    # ---- fused classifier on the last layer; lane-dense padded store -------
    @pl.when(layer == n_layers - 1)
    def _classify():
        o_ref[0] = jnp.dot(A2, wc_ref[...],
                           preferred_element_type=jnp.float32) + bc_ref[...]


# ---------------------------------------------------------------------------
# pallas_call wrapper: batch axis parallel (megacore), layer axis arbitrary
# ---------------------------------------------------------------------------
def decoder_fused(A, B, params, *, num_heads):
    """StackedCrossDomainAttention + classifier.  A: (batch, La, E),
    B: (batch, Lb, E).  Returns (batch, La, Cpad) padded logits."""
    batch, La, E = A.shape
    Lb = B.shape[1]
    num_layers = params["wq"].shape[0]
    Cpad = params["wc_pad"].shape[1]

    def layer_spec(shape):
        # streamed per-layer weight: leading dim indexed by the layer axis
        block = (1,) + tuple(shape[1:])
        return pl.BlockSpec(block,
                            lambda b, l, _n=len(shape): (l,) + (0,) * (_n - 1))

    def const_spec(shape):
        zeros = (0,) * len(shape)
        return pl.BlockSpec(tuple(shape), lambda b, l, _z=zeros: _z)

    layer_args = (params["wq"], params["bq"], params["wk"], params["bk"],
                  params["wv"], params["bv"], params["wo"], params["bo"],
                  params["g1"], params["be1"], params["w1"], params["bf1"],
                  params["w2"], params["bf2"], params["g2"], params["be2"])
    layer_specs = [layer_spec(w.shape) for w in layer_args]
    cls_args = (params["wc_pad"], params["bc_pad"])
    cls_specs = [const_spec(w.shape) for w in cls_args]

    kernel = functools.partial(_decoder_kernel, num_heads=num_heads)
    return pl.pallas_call(
        kernel,
        out_shape=jax.ShapeDtypeStruct((batch, La, Cpad), jnp.float32),
        grid=(batch, num_layers),
        in_specs=[pl.BlockSpec((1, La, E), lambda b, l: (b, 0, 0)),
                  pl.BlockSpec((1, Lb, E), lambda b, l: (b, 0, 0))]
                 + layer_specs + cls_specs,
        out_specs=pl.BlockSpec((1, La, Cpad), lambda b, l: (b, 0, 0)),
        scratch_shapes=[pltpu.VMEM((La, E), jnp.float32)],
        compiler_params=pltpu.CompilerParams(
            dimension_semantics=("parallel", "arbitrary"),
            vmem_limit_bytes=64 * 1024 * 1024),
    )(A, B, *layer_args, *cls_args)


# ---------------------------------------------------------------------------
# Parameter init: per-layer stacked, pre-transposed, classifier lane-padded
# ---------------------------------------------------------------------------
def init_params(key, embed_dim, num_heads, ff_dim, num_layers, num_classes):
    E, F, L = embed_dim, ff_dim, num_layers
    Cpad = max(128, ((num_classes + 127) // 128) * 128)

    key, *ks = jax.random.split(key, 13)

    def rnd(k, shape, s=0.05):
        return jax.random.normal(k, shape, jnp.float32) * s

    wq = rnd(ks[0], (L, E, E));  bq = rnd(ks[1], (L, 1, E), 0.02)
    wk = rnd(ks[2], (L, E, E));  bk = rnd(ks[3], (L, 1, E), 0.02)
    wv = rnd(ks[4], (L, E, E));  bv = rnd(ks[5], (L, 1, E), 0.02)
    wo = rnd(ks[6], (L, E, E));  bo = jnp.zeros((L, 1, E), jnp.float32)
    g1 = jnp.ones((L, 1, E), jnp.float32);  be1 = jnp.zeros((L, 1, E), jnp.float32)
    w1 = rnd(ks[7], (L, E, F));  bf1 = rnd(ks[8], (L, 1, F), 0.02)
    w2 = rnd(ks[9], (L, F, E));  bf2 = jnp.zeros((L, 1, E), jnp.float32)
    g2 = jnp.ones((L, 1, E), jnp.float32);  be2 = jnp.zeros((L, 1, E), jnp.float32)

    wc = rnd(ks[10], (E, num_classes))
    bc = rnd(ks[11], (1, num_classes), 0.02)
    wc_pad = jnp.zeros((E, Cpad), jnp.float32).at[:, :num_classes].set(wc)
    bc_pad = jnp.zeros((1, Cpad), jnp.float32).at[:, :num_classes].set(bc)

    return dict(wq=wq, bq=bq, wk=wk, bk=bk, wv=wv, bv=bv, wo=wo, bo=bo,
                g1=g1, be1=be1, w1=w1, bf1=bf1, w2=w2, bf2=bf2, g2=g2, be2=be2,
                wc_pad=wc_pad, bc_pad=bc_pad, num_classes=num_classes)


# ---------------------------------------------------------------------------
# EntityAttentionDecoder.forward (loss / argmax glue in plain JAX)
# ---------------------------------------------------------------------------
def entity_attention_decoder_forward(params, encoded_matrix, describe_matrix,
                                     attention_mask_A, candidate_entities,
                                     labels=None, weight=5.0, num_heads=4):
    num_classes = params["num_classes"]

    emissions_pad = decoder_fused(encoded_matrix, describe_matrix, params,
                                  num_heads=num_heads)
    emissions = emissions_pad[:, :, :num_classes]        # drop lane padding

    # CrossEntropyLoss(reduction='none') * per-sample weights, mean over valid.
    if labels is not None:
        logits = emissions.reshape(-1, num_classes)
        lab = labels.reshape(-1)
        valid = attention_mask_A.reshape(-1) == 1
        logz = jax.nn.logsumexp(logits, axis=-1)
        picked = jnp.take_along_axis(logits, lab[:, None], axis=-1)[:, 0]
        nll = logz - picked
        w = jnp.where(lab == 1, jnp.float32(weight), jnp.float32(1.0))
        losses = nll * w
        cnt = jnp.sum(valid.astype(jnp.float32))
        total_loss = jnp.where(
            cnt > 0,
            jnp.sum(jnp.where(valid, losses, 0.0)) / jnp.maximum(cnt, 1.0),
            jnp.float32(0.0))
    else:
        total_loss = jnp.float32(0.0)

    predicted = jnp.argmax(emissions, axis=-1)
    predicted_labels = jnp.where(
        (candidate_entities == 1) & (predicted == 1), 1, 0).astype(jnp.int32)
    return total_loss, predicted_labels


# ---------------------------------------------------------------------------
if __name__ == "__main__":
    batch, seq_a, seq_b = 2, 8, 8
    embed_dim, num_heads, ff_dim = 32, 4, 64
    num_layers, num_classes = 2, 2

    key = jax.random.PRNGKey(0)
    kp, k1, k2, k3, k4, k5 = jax.random.split(key, 6)

    params = init_params(kp, embed_dim, num_heads, ff_dim, num_layers, num_classes)

    encoded_matrix = jax.random.normal(k1, (batch, seq_a, embed_dim), jnp.float32)
    describe_matrix = jax.random.normal(k2, (batch, seq_b, embed_dim), jnp.float32)
    attention_mask_A = (jax.random.uniform(k3, (batch, seq_a)) > 0.2).astype(jnp.int32)
    candidate_entities = jax.random.bernoulli(k4, 0.5, (batch, seq_a)).astype(jnp.int32)
    labels = jax.random.bernoulli(k5, 0.3, (batch, seq_a)).astype(jnp.int32)

    total_loss, predicted_labels = entity_attention_decoder_forward(
        params, encoded_matrix, describe_matrix, attention_mask_A,
        candidate_entities, labels=labels, weight=5.0, num_heads=num_heads)

    jax.block_until_ready((total_loss, predicted_labels))
    assert predicted_labels.shape == candidate_entities.shape
    assert total_loss.shape == ()
    print("KERNEL_OK")
</pallas_src>

<mosaic_0001>
module attributes {stable_mosaic.version = 11 : i64} {
  func.func @_decoder_kernel(%arg0: i32, %arg1: i32, %arg2: memref<1x8x32xf32, #tpu.memory_space<vmem>>, %arg3: memref<1x8x32xf32, #tpu.memory_space<vmem>>, %arg4: memref<1x32x32xf32, #tpu.memory_space<vmem>>, %arg5: memref<1x1x32xf32, #tpu.memory_space<vmem>>, %arg6: memref<1x32x32xf32, #tpu.memory_space<vmem>>, %arg7: memref<1x1x32xf32, #tpu.memory_space<vmem>>, %arg8: memref<1x32x32xf32, #tpu.memory_space<vmem>>, %arg9: memref<1x1x32xf32, #tpu.memory_space<vmem>>, %arg10: memref<1x32x32xf32, #tpu.memory_space<vmem>>, %arg11: memref<1x1x32xf32, #tpu.memory_space<vmem>>, %arg12: memref<1x1x32xf32, #tpu.memory_space<vmem>>, %arg13: memref<1x1x32xf32, #tpu.memory_space<vmem>>, %arg14: memref<1x32x64xf32, #tpu.memory_space<vmem>>, %arg15: memref<1x1x64xf32, #tpu.memory_space<vmem>>, %arg16: memref<1x64x32xf32, #tpu.memory_space<vmem>>, %arg17: memref<1x1x32xf32, #tpu.memory_space<vmem>>, %arg18: memref<1x1x32xf32, #tpu.memory_space<vmem>>, %arg19: memref<1x1x32xf32, #tpu.memory_space<vmem>>, %arg20: memref<32x128xf32, #tpu.memory_space<vmem>>, %arg21: memref<1x128xf32, #tpu.memory_space<vmem>>, %arg22: memref<1x8x128xf32, #tpu.memory_space<vmem>>, %arg23: memref<8x32xf32, #tpu.memory_space<vmem>>) attributes {dimension_semantics = [#tpu.dimension_semantics<parallel>, #tpu.dimension_semantics<arbitrary>], iteration_bounds = array<i64: 2, 2>, scalar_prefetch = 0 : i64, scratch_operands = 1 : i64, tpu.core_type = #tpu.core_type<tc>, window_params = [{transform_indices = @transform_0, window_bounds = array<i64: 1, 8, 32>}, {transform_indices = @transform_1, window_bounds = array<i64: 1, 8, 32>}, {transform_indices = @transform_2, window_bounds = array<i64: 1, 32, 32>}, {transform_indices = @transform_3, window_bounds = array<i64: 1, 1, 32>}, {transform_indices = @transform_4, window_bounds = array<i64: 1, 32, 32>}, {transform_indices = @transform_5, window_bounds = array<i64: 1, 1, 32>}, {transform_indices = @transform_6, window_bounds = array<i64: 1, 32, 32>}, {transform_indices = @transform_7, window_bounds = array<i64: 1, 1, 32>}, {transform_indices = @transform_8, window_bounds = array<i64: 1, 32, 32>}, {transform_indices = @transform_9, window_bounds = array<i64: 1, 1, 32>}, {transform_indices = @transform_10, window_bounds = array<i64: 1, 1, 32>}, {transform_indices = @transform_11, window_bounds = array<i64: 1, 1, 32>}, {transform_indices = @transform_12, window_bounds = array<i64: 1, 32, 64>}, {transform_indices = @transform_13, window_bounds = array<i64: 1, 1, 64>}, {transform_indices = @transform_14, window_bounds = array<i64: 1, 64, 32>}, {transform_indices = @transform_15, window_bounds = array<i64: 1, 1, 32>}, {transform_indices = @transform_16, window_bounds = array<i64: 1, 1, 32>}, {transform_indices = @transform_17, window_bounds = array<i64: 1, 1, 32>}, {pipeline_mode = #tpu.pipeline_mode<synchronous>, transform_indices = @transform_18, window_bounds = array<i64: 32, 128>}, {pipeline_mode = #tpu.pipeline_mode<synchronous>, transform_indices = @transform_19, window_bounds = array<i64: 1, 128>}, {transform_indices = @transform_20, window_bounds = array<i64: 1, 8, 128>}]} {
    %c0_i32 = arith.constant 0 : i32
    %0 = arith.cmpi eq, %arg1, %c0_i32 : i32
    %1 = arith.extui %0 : i1 to i32
    %c0_i32_0 = arith.constant 0 : i32
    %2 = arith.cmpi ne, %1, %c0_i32_0 : i32
    scf.if %2 {
      %c0_92 = arith.constant 0 : index
      %c0_93 = arith.constant 0 : index
      %c0_94 = arith.constant 0 : index
      %169 = vector.load %arg2[%c0_92, %c0_93, %c0_94] : memref<1x8x32xf32, #tpu.memory_space<vmem>>, vector<1x8x32xf32>
      %170 = vector.shape_cast %169 : vector<1x8x32xf32> to vector<8x32xf32>
      %c0_95 = arith.constant 0 : index
      %c0_96 = arith.constant 0 : index
      %171 = vector.load %arg23[%c0_95, %c0_96] : memref<8x32xf32, #tpu.memory_space<vmem>>, vector<8x32xf32>
      tpu.vector_store %arg23[%c0_95, %c0_96], %170 {strides = array<i32>} : memref<8x32xf32, #tpu.memory_space<vmem>>, vector<8x32xf32>,
    } else {
    }
    %c0 = arith.constant 0 : index
    %c0_1 = arith.constant 0 : index
    %3 = vector.load %arg23[%c0, %c0_1] : memref<8x32xf32, #tpu.memory_space<vmem>>, vector<8x32xf32>
    %c0_2 = arith.constant 0 : index
    %c0_3 = arith.constant 0 : index
    %c0_4 = arith.constant 0 : index
    %4 = vector.load %arg3[%c0_2, %c0_3, %c0_4] : memref<1x8x32xf32, #tpu.memory_space<vmem>>, vector<1x8x32xf32>
    %5 = vector.shape_cast %4 : vector<1x8x32xf32> to vector<8x32xf32>
    %c0_5 = arith.constant 0 : index
    %c0_6 = arith.constant 0 : index
    %c0_7 = arith.constant 0 : index
    %6 = vector.load %arg4[%c0_5, %c0_6, %c0_7] : memref<1x32x32xf32, #tpu.memory_space<vmem>>, vector<1x32x32xf32>
    %7 = vector.shape_cast %6 : vector<1x32x32xf32> to vector<32x32xf32>
    %cst = arith.constant dense<0.000000e+00> : vector<8x32xf32>
    %8 = tpu.matmul %3, %7, %cst {dimension_numbers = #tpu.dot_dimension_numbers<[1], [0], [0], [1], [0, 0, 1, 1], [], []>} : vector<8x32xf32>, vector<32x32xf32>, vector<8x32xf32> -> vector<8x32xf32>
    %c0_8 = arith.constant 0 : index
    %c0_9 = arith.constant 0 : index
    %c0_10 = arith.constant 0 : index
    %9 = vector.load %arg5[%c0_8, %c0_9, %c0_10] : memref<1x1x32xf32, #tpu.memory_space<vmem>>, vector<1x1x32xf32>
    %10 = vector.shape_cast %9 : vector<1x1x32xf32> to vector<1x32xf32>
    %11 = vector.broadcast %10 : vector<1x32xf32> to vector<8x32xf32>
    %12 = arith.addf %8, %11 : vector<8x32xf32>
    %c0_11 = arith.constant 0 : index
    %c0_12 = arith.constant 0 : index
    %c0_13 = arith.constant 0 : index
    %13 = vector.load %arg6[%c0_11, %c0_12, %c0_13] : memref<1x32x32xf32, #tpu.memory_space<vmem>>, vector<1x32x32xf32>
    %14 = vector.shape_cast %13 : vector<1x32x32xf32> to vector<32x32xf32>
    %cst_14 = arith.constant dense<0.000000e+00> : vector<8x32xf32>
    %15 = tpu.matmul %5, %14, %cst_14 {dimension_numbers = #tpu.dot_dimension_numbers<[1], [0], [0], [1], [0, 0, 1, 1], [], []>} : vector<8x32xf32>, vector<32x32xf32>, vector<8x32xf32> -> vector<8x32xf32>
    %c0_15 = arith.constant 0 : index
    %c0_16 = arith.constant 0 : index
    %c0_17 = arith.constant 0 : index
    %16 = vector.load %arg7[%c0_15, %c0_16, %c0_17] : memref<1x1x32xf32, #tpu.memory_space<vmem>>, vector<1x1x32xf32>
    %17 = vector.shape_cast %16 : vector<1x1x32xf32> to vector<1x32xf32>
    %18 = vector.broadcast %17 : vector<1x32xf32> to vector<8x32xf32>
    %19 = arith.addf %15, %18 : vector<8x32xf32>
    %c0_18 = arith.constant 0 : index
    %c0_19 = arith.constant 0 : index
    %c0_20 = arith.constant 0 : index
    %20 = vector.load %arg8[%c0_18, %c0_19, %c0_20] : memref<1x32x32xf32, #tpu.memory_space<vmem>>, vector<1x32x32xf32>
    %21 = vector.shape_cast %20 : vector<1x32x32xf32> to vector<32x32xf32>
    %cst_21 = arith.constant dense<0.000000e+00> : vector<8x32xf32>
    %22 = tpu.matmul %5, %21, %cst_21 {dimension_numbers = #tpu.dot_dimension_numbers<[1], [0], [0], [1], [0, 0, 1, 1], [], []>} : vector<8x32xf32>, vector<32x32xf32>, vector<8x32xf32> -> vector<8x32xf32>
    %c0_22 = arith.constant 0 : index
    %c0_23 = arith.constant 0 : index
    %c0_24 = arith.constant 0 : index
    %23 = vector.load %arg9[%c0_22, %c0_23, %c0_24] : memref<1x1x32xf32, #tpu.memory_space<vmem>>, vector<1x1x32xf32>
    %24 = vector.shape_cast %23 : vector<1x1x32xf32> to vector<1x32xf32>
    %25 = vector.broadcast %24 : vector<1x32xf32> to vector<8x32xf32>
    %26 = arith.addf %22, %25 : vector<8x32xf32>
    %27 = vector.extract_strided_slice %12 {offsets = [0, 0], sizes = [8, 8], strides = [1, 1]} : vector<8x32xf32> to vector<8x8xf32>
    %28 = vector.extract_strided_slice %19 {offsets = [0, 0], sizes = [8, 8], strides = [1, 1]} : vector<8x32xf32> to vector<8x8xf32>
    %29 = vector.extract_strided_slice %26 {offsets = [0, 0], sizes = [8, 8], strides = [1, 1]} : vector<8x32xf32> to vector<8x8xf32>
    "tpu.trace_start"() <{level = 10 : i32, message = "qd,kd->qk"}> : () -> ()
    %cst_25 = arith.constant dense<0.000000e+00> : vector<8x8xf32>
    %30 = tpu.matmul %27, %28, %cst_25 {dimension_numbers = #tpu.dot_dimension_numbers<[1], [1], [0], [0], [0, 0, 1, 0], [], []>} : vector<8x8xf32>, vector<8x8xf32>, vector<8x8xf32> -> vector<8x8xf32>
    "tpu.trace_stop"() : () -> ()
    %cst_26 = arith.constant 0.353553385 : f32
    %31 = vector.broadcast %cst_26 : f32 to vector<8x8xf32>
    %32 = arith.mulf %30, %31 : vector<8x8xf32>
    %cst_27 = arith.constant dense<0xFF800000> : vector<8xf32>
    %33 = vector.multi_reduction <maximumf>, %32, %cst_27 [1] : vector<8x8xf32> to vector<8xf32>
    %34 = vector.shape_cast %33 : vector<8xf32> to vector<8x1xf32>
    %35 = vector.broadcast %34 : vector<8x1xf32> to vector<8x8xf32>
    %36 = arith.subf %32, %35 : vector<8x8xf32>
    %37 = math.exp %36 : vector<8x8xf32>
    %cst_28 = arith.constant dense<0.000000e+00> : vector<8xf32>
    %38 = vector.multi_reduction <add>, %37, %cst_28 [1] : vector<8x8xf32> to vector<8xf32>
    %39 = vector.shape_cast %38 : vector<8xf32> to vector<8x1xf32>
    %40 = vector.broadcast %39 : vector<8x1xf32> to vector<8x8xf32>
    %41 = arith.divf %37, %40 : vector<8x8xf32>
    %cst_29 = arith.constant dense<0.000000e+00> : vector<8x8xf32>
    %42 = tpu.matmul %41, %29, %cst_29 {dimension_numbers = #tpu.dot_dimension_numbers<[1], [0], [0], [1], [0, 0, 1, 1], [], []>} : vector<8x8xf32>, vector<8x8xf32>, vector<8x8xf32> -> vector<8x8xf32>
    %43 = vector.extract_strided_slice %12 {offsets = [0, 8], sizes = [8, 8], strides = [1, 1]} : vector<8x32xf32> to vector<8x8xf32>
    %44 = vector.extract_strided_slice %19 {offsets = [0, 8], sizes = [8, 8], strides = [1, 1]} : vector<8x32xf32> to vector<8x8xf32>
    %45 = vector.extract_strided_slice %26 {offsets = [0, 8], sizes = [8, 8], strides = [1, 1]} : vector<8x32xf32> to vector<8x8xf32>
    "tpu.trace_start"() <{level = 10 : i32, message = "qd,kd->qk"}> : () -> ()
    %cst_30 = arith.constant dense<0.000000e+00> : vector<8x8xf32>
    %46 = tpu.matmul %43, %44, %cst_30 {dimension_numbers = #tpu.dot_dimension_numbers<[1], [1], [0], [0], [0, 0, 1, 0], [], []>} : vector<8x8xf32>, vector<8x8xf32>, vector<8x8xf32> -> vector<8x8xf32>
    "tpu.trace_stop"() : () -> ()
    %cst_31 = arith.constant 0.353553385 : f32
    %47 = vector.broadcast %cst_31 : f32 to vector<8x8xf32>
    %48 = arith.mulf %46, %47 : vector<8x8xf32>
    %cst_32 = arith.constant dense<0xFF800000> : vector<8xf32>
    %49 = vector.multi_reduction <maximumf>, %48, %cst_32 [1] : vector<8x8xf32> to vector<8xf32>
    %50 = vector.shape_cast %49 : vector<8xf32> to vector<8x1xf32>
    %51 = vector.broadcast %50 : vector<8x1xf32> to vector<8x8xf32>
    %52 = arith.subf %48, %51 : vector<8x8xf32>
    %53 = math.exp %52 : vector<8x8xf32>
    %cst_33 = arith.constant dense<0.000000e+00> : vector<8xf32>
    %54 = vector.multi_reduction <add>, %53, %cst_33 [1] : vector<8x8xf32> to vector<8xf32>
    %55 = vector.shape_cast %54 : vector<8xf32> to vector<8x1xf32>
    %56 = vector.broadcast %55 : vector<8x1xf32> to vector<8x8xf32>
    %57 = arith.divf %53, %56 : vector<8x8xf32>
    %cst_34 = arith.constant dense<0.000000e+00> : vector<8x8xf32>
    %58 = tpu.matmul %57, %45, %cst_34 {dimension_numbers = #tpu.dot_dimension_numbers<[1], [0], [0], [1], [0, 0, 1, 1], [], []>} : vector<8x8xf32>, vector<8x8xf32>, vector<8x8xf32> -> vector<8x8xf32>
    %59 = vector.extract_strided_slice %12 {offsets = [0, 16], sizes = [8, 8], strides = [1, 1]} : vector<8x32xf32> to vector<8x8xf32>
    %60 = vector.extract_strided_slice %19 {offsets = [0, 16], sizes = [8, 8], strides = [1, 1]} : vector<8x32xf32> to vector<8x8xf32>
    %61 = vector.extract_strided_slice %26 {offsets = [0, 16], sizes = [8, 8], strides = [1, 1]} : vector<8x32xf32> to vector<8x8xf32>
    "tpu.trace_start"() <{level = 10 : i32, message = "qd,kd->qk"}> : () -> ()
    %cst_35 = arith.constant dense<0.000000e+00> : vector<8x8xf32>
    %62 = tpu.matmul %59, %60, %cst_35 {dimension_numbers = #tpu.dot_dimension_numbers<[1], [1], [0], [0], [0, 0, 1, 0], [], []>} : vector<8x8xf32>, vector<8x8xf32>, vector<8x8xf32> -> vector<8x8xf32>
    "tpu.trace_stop"() : () -> ()
    %cst_36 = arith.constant 0.353553385 : f32
    %63 = vector.broadcast %cst_36 : f32 to vector<8x8xf32>
    %64 = arith.mulf %62, %63 : vector<8x8xf32>
    %cst_37 = arith.constant dense<0xFF800000> : vector<8xf32>
    %65 = vector.multi_reduction <maximumf>, %64, %cst_37 [1] : vector<8x8xf32> to vector<8xf32>
    %66 = vector.shape_cast %65 : vector<8xf32> to vector<8x1xf32>
    %67 = vector.broadcast %66 : vector<8x1xf32> to vector<8x8xf32>
    %68 = arith.subf %64, %67 : vector<8x8xf32>
    %69 = math.exp %68 : vector<8x8xf32>
    %cst_38 = arith.constant dense<0.000000e+00> : vector<8xf32>
    %70 = vector.multi_reduction <add>, %69, %cst_38 [1] : vector<8x8xf32> to vector<8xf32>
    %71 = vector.shape_cast %70 : vector<8xf32> to vector<8x1xf32>
    %72 = vector.broadcast %71 : vector<8x1xf32> to vector<8x8xf32>
    %73 = arith.divf %69, %72 : vector<8x8xf32>
    %cst_39 = arith.constant dense<0.000000e+00> : vector<8x8xf32>
    %74 = tpu.matmul %73, %61, %cst_39 {dimension_numbers = #tpu.dot_dimension_numbers<[1], [0], [0], [1], [0, 0, 1, 1], [], []>} : vector<8x8xf32>, vector<8x8xf32>, vector<8x8xf32> -> vector<8x8xf32>
    %75 = vector.extract_strided_slice %12 {offsets = [0, 24], sizes = [8, 8], strides = [1, 1]} : vector<8x32xf32> to vector<8x8xf32>
    %76 = vector.extract_strided_slice %19 {offsets = [0, 24], sizes = [8, 8], strides = [1, 1]} : vector<8x32xf32> to vector<8x8xf32>
    %77 = vector.extract_strided_slice %26 {offsets = [0, 24], sizes = [8, 8], strides = [1, 1]} : vector<8x32xf32> to vector<8x8xf32>
    "tpu.trace_start"() <{level = 10 : i32, message = "qd,kd->qk"}> : () -> ()
    %cst_40 = arith.constant dense<0.000000e+00> : vector<8x8xf32>
    %78 = tpu.matmul %75, %76, %cst_40 {dimension_numbers = #tpu.dot_dimension_numbers<[1], [1], [0], [0], [0, 0, 1, 0], [], []>} : vector<8x8xf32>, vector<8x8xf32>, vector<8x8xf32> -> vector<8x8xf32>
    "tpu.trace_stop"() : () -> ()
    %cst_41 = arith.constant 0.353553385 : f32
    %79 = vector.broadcast %cst_41 : f32 to vector<8x8xf32>
    %80 = arith.mulf %78, %79 : vector<8x8xf32>
    %cst_42 = arith.constant dense<0xFF800000> : vector<8xf32>
    %81 = vector.multi_reduction <maximumf>, %80, %cst_42 [1] : vector<8x8xf32> to vector<8xf32>
    %82 = vector.shape_cast %81 : vector<8xf32> to vector<8x1xf32>
    %83 = vector.broadcast %82 : vector<8x1xf32> to vector<8x8xf32>
    %84 = arith.subf %80, %83 : vector<8x8xf32>
    %85 = math.exp %84 : vector<8x8xf32>
    %cst_43 = arith.constant dense<0.000000e+00> : vector<8xf32>
    %86 = vector.multi_reduction <add>, %85, %cst_43 [1] : vector<8x8xf32> to vector<8xf32>
    %87 = vector.shape_cast %86 : vector<8xf32> to vector<8x1xf32>
    %88 = vector.broadcast %87 : vector<8x1xf32> to vector<8x8xf32>
    %89 = arith.divf %85, %88 : vector<8x8xf32>
    %cst_44 = arith.constant dense<0.000000e+00> : vector<8x8xf32>
    %90 = tpu.matmul %89, %77, %cst_44 {dimension_numbers = #tpu.dot_dimension_numbers<[1], [0], [0], [1], [0, 0, 1, 1], [], []>} : vector<8x8xf32>, vector<8x8xf32>, vector<8x8xf32> -> vector<8x8xf32>
    %91 = tpu.concatenate %42, %58, %74, %90 in 1 : vector<8x8xf32>, vector<8x8xf32>, vector<8x8xf32>, vector<8x8xf32> -> vector<8x32xf32>
    %c0_45 = arith.constant 0 : index
    %c0_46 = arith.constant 0 : index
    %c0_47 = arith.constant 0 : index
    %92 = vector.load %arg10[%c0_45, %c0_46, %c0_47] : memref<1x32x32xf32, #tpu.memory_space<vmem>>, vector<1x32x32xf32>
    %93 = vector.shape_cast %92 : vector<1x32x32xf32> to vector<32x32xf32>
    %cst_48 = arith.constant dense<0.000000e+00> : vector<8x32xf32>
    %94 = tpu.matmul %91, %93, %cst_48 {dimension_numbers = #tpu.dot_dimension_numbers<[1], [0], [0], [1], [0, 0, 1, 1], [], []>} : vector<8x32xf32>, vector<32x32xf32>, vector<8x32xf32> -> vector<8x32xf32>
    %c0_49 = arith.constant 0 : index
    %c0_50 = arith.constant 0 : index
    %c0_51 = arith.constant 0 : index
    %95 = vector.load %arg11[%c0_49, %c0_50, %c0_51] : memref<1x1x32xf32, #tpu.memory_space<vmem>>, vector<1x1x32xf32>
    %96 = vector.shape_cast %95 : vector<1x1x32xf32> to vector<1x32xf32>
    %97 = vector.broadcast %96 : vector<1x32xf32> to vector<8x32xf32>
    %98 = arith.addf %94, %97 : vector<8x32xf32>
    %99 = arith.addf %3, %98 : vector<8x32xf32>
    %cst_52 = arith.constant dense<0.000000e+00> : vector<8xf32>
    %100 = vector.multi_reduction <add>, %99, %cst_52 [1] : vector<8x32xf32> to vector<8xf32>
    %101 = vector.shape_cast %100 : vector<8xf32> to vector<8x1xf32>
    %cst_53 = arith.constant 3.200000e+01 : f32
    %102 = vector.broadcast %cst_53 : f32 to vector<8x1xf32>
    %103 = arith.divf %101, %102 : vector<8x1xf32>
    %104 = vector.broadcast %103 : vector<8x1xf32> to vector<8x32xf32>
    %105 = arith.subf %99, %104 : vector<8x32xf32>
    %106 = arith.mulf %105, %105 : vector<8x32xf32>
    %cst_54 = arith.constant dense<0.000000e+00> : vector<8xf32>
    %107 = vector.multi_reduction <add>, %106, %cst_54 [1] : vector<8x32xf32> to vector<8xf32>
    %108 = vector.shape_cast %107 : vector<8xf32> to vector<8x1xf32>
    %cst_55 = arith.constant 3.200000e+01 : f32
    %109 = vector.broadcast %cst_55 : f32 to vector<8x1xf32>
    %110 = arith.divf %108, %109 : vector<8x1xf32>
    %cst_56 = arith.constant 9.99999974E-6 : f32
    %111 = vector.broadcast %cst_56 : f32 to vector<8x1xf32>
    %112 = arith.addf %110, %111 : vector<8x1xf32>
    %113 = math.rsqrt %112 : vector<8x1xf32>
    %114 = vector.broadcast %113 : vector<8x1xf32> to vector<8x32xf32>
    %115 = arith.mulf %105, %114 : vector<8x32xf32>
    %c0_57 = arith.constant 0 : index
    %c0_58 = arith.constant 0 : index
    %c0_59 = arith.constant 0 : index
    %116 = vector.load %arg12[%c0_57, %c0_58, %c0_59] : memref<1x1x32xf32, #tpu.memory_space<vmem>>, vector<1x1x32xf32>
    %117 = vector.shape_cast %116 : vector<1x1x32xf32> to vector<1x32xf32>
    %118 = vector.broadcast %117 : vector<1x32xf32> to vector<8x32xf32>
    %119 = arith.mulf %115, %118 : vector<8x32xf32>
    %c0_60 = arith.constant 0 : index
    %c0_61 = arith.constant 0 : index
    %c0_62 = arith.constant 0 : index
    %120 = vector.load %arg13[%c0_60, %c0_61, %c0_62] : memref<1x1x32xf32, #tpu.memory_space<vmem>>, vector<1x1x32xf32>
    %121 = vector.shape_cast %120 : vector<1x1x32xf32> to vector<1x32xf32>
    %122 = vector.broadcast %121 : vector<1x32xf32> to vector<8x32xf32>
    %123 = arith.addf %119, %122 : vector<8x32xf32>
    %c0_63 = arith.constant 0 : index
    %c0_64 = arith.constant 0 : index
    %c0_65 = arith.constant 0 : index
    %124 = vector.load %arg14[%c0_63, %c0_64, %c0_65] : memref<1x32x64xf32, #tpu.memory_space<vmem>>, vector<1x32x64xf32>
    %125 = vector.shape_cast %124 : vector<1x32x64xf32> to vector<32x64xf32>
    %cst_66 = arith.constant dense<0.000000e+00> : vector<8x64xf32>
    %126 = tpu.matmul %123, %125, %cst_66 {dimension_numbers = #tpu.dot_dimension_numbers<[1], [0], [0], [1], [0, 0, 1, 1], [], []>} : vector<8x32xf32>, vector<32x64xf32>, vector<8x64xf32> -> vector<8x64xf32>
    %c0_67 = arith.constant 0 : index
    %c0_68 = arith.constant 0 : index
    %c0_69 = arith.constant 0 : index
    %127 = vector.load %arg15[%c0_67, %c0_68, %c0_69] : memref<1x1x64xf32, #tpu.memory_space<vmem>>, vector<1x1x64xf32>
    %128 = vector.shape_cast %127 : vector<1x1x64xf32> to vector<1x64xf32>
    %129 = vector.broadcast %128 : vector<1x64xf32> to vector<8x64xf32>
    %130 = arith.addf %126, %129 : vector<8x64xf32>
    %cst_70 = arith.constant 0.000000e+00 : f32
    %131 = vector.broadcast %cst_70 : f32 to vector<8x64xf32>
    %132 = arith.maximumf %130, %131 : vector<8x64xf32>
    %c0_71 = arith.constant 0 : index
    %c0_72 = arith.constant 0 : index
    %c0_73 = arith.constant 0 : index
    %133 = vector.load %arg16[%c0_71, %c0_72, %c0_73] : memref<1x64x32xf32, #tpu.memory_space<vmem>>, vector<1x64x32xf32>
    %134 = vector.shape_cast %133 : vector<1x64x32xf32> to vector<64x32xf32>
    %cst_74 = arith.constant dense<0.000000e+00> : vector<8x32xf32>
    %135 = tpu.matmul %132, %134, %cst_74 {dimension_numbers = #tpu.dot_dimension_numbers<[1], [0], [0], [1], [0, 0, 1, 1], [], []>} : vector<8x64xf32>, vector<64x32xf32>, vector<8x32xf32> -> vector<8x32xf32>
    %c0_75 = arith.constant 0 : index
    %c0_76 = arith.constant 0 : index
    %c0_77 = arith.constant 0 : index
    %136 = vector.load %arg17[%c0_75, %c0_76, %c0_77] : memref<1x1x32xf32, #tpu.memory_space<vmem>>, vector<1x1x32xf32>
    %137 = vector.shape_cast %136 : vector<1x1x32xf32> to vector<1x32xf32>
    %138 = vector.broadcast %137 : vector<1x32xf32> to vector<8x32xf32>
    %139 = arith.addf %135, %138 : vector<8x32xf32>
    %140 = arith.addf %123, %139 : vector<8x32xf32>
    %cst_78 = arith.constant dense<0.000000e+00> : vector<8xf32>
    %141 = vector.multi_reduction <add>, %140, %cst_78 [1] : vector<8x32xf32> to vector<8xf32>
    %142 = vector.shape_cast %141 : vector<8xf32> to vector<8x1xf32>
    %cst_79 = arith.constant 3.200000e+01 : f32
    %143 = vector.broadcast %cst_79 : f32 to vector<8x1xf32>
    %144 = arith.divf %142, %143 : vector<8x1xf32>
    %145 = vector.broadcast %144 : vector<8x1xf32> to vector<8x32xf32>
    %146 = arith.subf %140, %145 : vector<8x32xf32>
    %147 = arith.mulf %146, %146 : vector<8x32xf32>
    %cst_80 = arith.constant dense<0.000000e+00> : vector<8xf32>
    %148 = vector.multi_reduction <add>, %147, %cst_80 [1] : vector<8x32xf32> to vector<8xf32>
    %149 = vector.shape_cast %148 : vector<8xf32> to vector<8x1xf32>
    %cst_81 = arith.constant 3.200000e+01 : f32
    %150 = vector.broadcast %cst_81 : f32 to vector<8x1xf32>
    %151 = arith.divf %149, %150 : vector<8x1xf32>
    %cst_82 = arith.constant 9.99999974E-6 : f32
    %152 = vector.broadcast %cst_82 : f32 to vector<8x1xf32>
    %153 = arith.addf %151, %152 : vector<8x1xf32>
    %154 = math.rsqrt %153 : vector<8x1xf32>
    %155 = vector.broadcast %154 : vector<8x1xf32> to vector<8x32xf32>
    %156 = arith.mulf %146, %155 : vector<8x32xf32>
    %c0_83 = arith.constant 0 : index
    %c0_84 = arith.constant 0 : index
    %c0_85 = arith.constant 0 : index
    %157 = vector.load %arg18[%c0_83, %c0_84, %c0_85] : memref<1x1x32xf32, #tpu.memory_space<vmem>>, vector<1x1x32xf32>
    %158 = vector.shape_cast %157 : vector<1x1x32xf32> to vector<1x32xf32>
    %159 = vector.broadcast %158 : vector<1x32xf32> to vector<8x32xf32>
    %160 = arith.mulf %156, %159 : vector<8x32xf32>
    %c0_86 = arith.constant 0 : index
    %c0_87 = arith.constant 0 : index
    %c0_88 = arith.constant 0 : index
    %161 = vector.load %arg19[%c0_86, %c0_87, %c0_88] : memref<1x1x32xf32, #tpu.memory_space<vmem>>, vector<1x1x32xf32>
    %162 = vector.shape_cast %161 : vector<1x1x32xf32> to vector<1x32xf32>
    %163 = vector.broadcast %162 : vector<1x32xf32> to vector<8x32xf32>
    %164 = arith.addf %160, %163 : vector<8x32xf32>
    %c0_89 = arith.constant 0 : index
    %c0_90 = arith.constant 0 : index
    %165 = vector.load %arg23[%c0_89, %c0_90] : memref<8x32xf32, #tpu.memory_space<vmem>>, vector<8x32xf32>
    tpu.vector_store %arg23[%c0_89, %c0_90], %164 {strides = array<i32>} : memref<8x32xf32, #tpu.memory_space<vmem>>, vector<8x32xf32>,
    %c1_i32 = arith.constant 1 : i32
    %166 = arith.cmpi eq, %arg1, %c1_i32 : i32
    %167 = arith.extui %166 : i1 to i32
    %c0_i32_91 = arith.constant 0 : i32
    %168 = arith.cmpi ne, %167, %c0_i32_91 : i32
    scf.if %168 {
      %c0_92 = arith.constant 0 : index
      %c0_93 = arith.constant 0 : index
      %169 = vector.load %arg20[%c0_92, %c0_93] : memref<32x128xf32, #tpu.memory_space<vmem>>, vector<32x128xf32>
      %cst_94 = arith.constant dense<0.000000e+00> : vector<8x128xf32>
      %170 = tpu.matmul %164, %169, %cst_94 {dimension_numbers = #tpu.dot_dimension_numbers<[1], [0], [0], [1], [0, 0, 1, 1], [], []>} : vector<8x32xf32>, vector<32x128xf32>, vector<8x128xf32> -> vector<8x128xf32>
      %c0_95 = arith.constant 0 : index
      %c0_96 = arith.constant 0 : index
      %171 = vector.load %arg21[%c0_95, %c0_96] : memref<1x128xf32, #tpu.memory_space<vmem>>, vector<1x128xf32>
      %172 = vector.broadcast %171 : vector<1x128xf32> to vector<8x128xf32>
      %173 = arith.addf %170, %172 : vector<8x128xf32>
      %c0_97 = arith.constant 0 : index
      %c0_98 = arith.constant 0 : index
      %c0_99 = arith.constant 0 : index
      %174 = vector.load %arg22[%c0_97, %c0_98, %c0_99] : memref<1x8x128xf32, #tpu.memory_space<vmem>>, vector<1x8x128xf32>
      %175 = vector.shape_cast %174 : vector<1x8x128xf32> to vector<8x128xf32>
      %176 = vector.shape_cast %173 : vector<8x128xf32> to vector<1x8x128xf32>
      tpu.vector_store %arg22[%c0_97, %c0_98, %c0_99], %176 {strides = array<i32>} : memref<1x8x128xf32, #tpu.memory_space<vmem>>, vector<1x8x128xf32>,
    } else {
    }
    return
  }
  func.func @transform_0(%arg0: i32, %arg1: i32) -> (i32, i32, i32) {
    %c0_i32 = arith.constant 0 : i32
    %c0_i32_0 = arith.constant 0 : i32
    %c0_i32_1 = arith.constant 0 : i32
    return %arg0, %c0_i32, %c0_i32_0 : i32, i32, i32
  }
  func.func @transform_1(%arg0: i32, %arg1: i32) -> (i32, i32, i32) {
    %c0_i32 = arith.constant 0 : i32
    %c0_i32_0 = arith.constant 0 : i32
    %c0_i32_1 = arith.constant 0 : i32
    return %arg0, %c0_i32, %c0_i32_0 : i32, i32, i32
  }
  func.func @transform_2(%arg0: i32, %arg1: i32) -> (i32, i32, i32) {
    %c0_i32 = arith.constant 0 : i32
    %c0_i32_0 = arith.constant 0 : i32
    %c0_i32_1 = arith.constant 0 : i32
    return %arg1, %c0_i32, %c0_i32_0 : i32, i32, i32
  }
  func.func @transform_3(%arg0: i32, %arg1: i32) -> (i32, i32, i32) {
    %c0_i32 = arith.constant 0 : i32
    %c0_i32_0 = arith.constant 0 : i32
    %c0_i32_1 = arith.constant 0 : i32
    return %arg1, %c0_i32, %c0_i32_0 : i32, i32, i32
  }
  func.func @transform_4(%arg0: i32, %arg1: i32) -> (i32, i32, i32) {
    %c0_i32 = arith.constant 0 : i32
    %c0_i32_0 = arith.constant 0 : i32
    %c0_i32_1 = arith.constant 0 : i32
    return %arg1, %c0_i32, %c0_i32_0 : i32, i32, i32
  }
  func.func @transform_5(%arg0: i32, %arg1: i32) -> (i32, i32, i32) {
    %c0_i32 = arith.constant 0 : i32
    %c0_i32_0 = arith.constant 0 : i32
    %c0_i32_1 = arith.constant 0 : i32
    return %arg1, %c0_i32, %c0_i32_0 : i32, i32, i32
  }
  func.func @transform_6(%arg0: i32, %arg1: i32) -> (i32, i32, i32) {
    %c0_i32 = arith.constant 0 : i32
    %c0_i32_0 = arith.constant 0 : i32
    %c0_i32_1 = arith.constant 0 : i32
    return %arg1, %c0_i32, %c0_i32_0 : i32, i32, i32
  }
  func.func @transform_7(%arg0: i32, %arg1: i32) -> (i32, i32, i32) {
    %c0_i32 = arith.constant 0 : i32
    %c0_i32_0 = arith.constant 0 : i32
    %c0_i32_1 = arith.constant 0 : i32
    return %arg1, %c0_i32, %c0_i32_0 : i32, i32, i32
  }
  func.func @transform_8(%arg0: i32, %arg1: i32) -> (i32, i32, i32) {
    %c0_i32 = arith.constant 0 : i32
    %c0_i32_0 = arith.constant 0 : i32
    %c0_i32_1 = arith.constant 0 : i32
    return %arg1, %c0_i32, %c0_i32_0 : i32, i32, i32
  }
  func.func @transform_9(%arg0: i32, %arg1: i32) -> (i32, i32, i32) {
    %c0_i32 = arith.constant 0 : i32
    %c0_i32_0 = arith.constant 0 : i32
    %c0_i32_1 = arith.constant 0 : i32
    return %arg1, %c0_i32, %c0_i32_0 : i32, i32, i32
  }
  func.func @transform_10(%arg0: i32, %arg1: i32) -> (i32, i32, i32) {
    %c0_i32 = arith.constant 0 : i32
    %c0_i32_0 = arith.constant 0 : i32
    %c0_i32_1 = arith.constant 0 : i32
    return %arg1, %c0_i32, %c0_i32_0 : i32, i32, i32
  }
  func.func @transform_11(%arg0: i32, %arg1: i32) -> (i32, i32, i32) {
    %c0_i32 = arith.constant 0 : i32
    %c0_i32_0 = arith.constant 0 : i32
    %c0_i32_1 = arith.constant 0 : i32
    return %arg1, %c0_i32, %c0_i32_0 : i32, i32, i32
  }
  func.func @transform_12(%arg0: i32, %arg1: i32) -> (i32, i32, i32) {
    %c0_i32 = arith.constant 0 : i32
    %c0_i32_0 = arith.constant 0 : i32
    %c0_i32_1 = arith.constant 0 : i32
    return %arg1, %c0_i32, %c0_i32_0 : i32, i32, i32
  }
  func.func @transform_13(%arg0: i32, %arg1: i32) -> (i32, i32, i32) {
    %c0_i32 = arith.constant 0 : i32
    %c0_i32_0 = arith.constant 0 : i32
    %c0_i32_1 = arith.constant 0 : i32
    return %arg1, %c0_i32, %c0_i32_0 : i32, i32, i32
  }
  func.func @transform_14(%arg0: i32, %arg1: i32) -> (i32, i32, i32) {
    %c0_i32 = arith.constant 0 : i32
    %c0_i32_0 = arith.constant 0 : i32
    %c0_i32_1 = arith.constant 0 : i32
    return %arg1, %c0_i32, %c0_i32_0 : i32, i32, i32
  }
  func.func @transform_15(%arg0: i32, %arg1: i32) -> (i32, i32, i32) {
    %c0_i32 = arith.constant 0 : i32
    %c0_i32_0 = arith.constant 0 : i32
    %c0_i32_1 = arith.constant 0 : i32
    return %arg1, %c0_i32, %c0_i32_0 : i32, i32, i32
  }
  func.func @transform_16(%arg0: i32, %arg1: i32) -> (i32, i32, i32) {
    %c0_i32 = arith.constant 0 : i32
    %c0_i32_0 = arith.constant 0 : i32
    %c0_i32_1 = arith.constant 0 : i32
    return %arg1, %c0_i32, %c0_i32_0 : i32, i32, i32
  }
  func.func @transform_17(%arg0: i32, %arg1: i32) -> (i32, i32, i32) {
    %c0_i32 = arith.constant 0 : i32
    %c0_i32_0 = arith.constant 0 : i32
    %c0_i32_1 = arith.constant 0 : i32
    return %arg1, %c0_i32, %c0_i32_0 : i32, i32, i32
  }
  func.func @transform_18(%arg0: i32, %arg1: i32) -> (i32, i32) {
    %c0_i32 = arith.constant 0 : i32
    %c0_i32_0 = arith.constant 0 : i32
    %c0_i32_1 = arith.constant 0 : i32
    return %c0_i32, %c0_i32_0 : i32, i32
  }
  func.func @transform_19(%arg0: i32, %arg1: i32) -> (i32, i32) {
    %c0_i32 = arith.constant 0 : i32
    %c0_i32_0 = arith.constant 0 : i32
    %c0_i32_1 = arith.constant 0 : i32
    return %c0_i32, %c0_i32_0 : i32, i32
  }
  func.func @transform_20(%arg0: i32, %arg1: i32) -> (i32, i32, i32) {
    %c0_i32 = arith.constant 0 : i32
    %c0_i32_0 = arith.constant 0 : i32
    %c0_i32_1 = arith.constant 0 : i32
    return %arg0, %c0_i32, %c0_i32_0 : i32, i32, i32
  }
}

</mosaic_0001>

<llo_original>
// kernel: tpu_custom_call.1
$region0: #{tpu_custom_call.1}
  #allocation0 [shape = 'u32[]', space=smem, size = 0x4, offset = 0x4, fixed_abs, tag = 'smem constant byte address 0x4 - core index']
  #allocation1 [shape = 'u32[144,128]{1,0:T(1,128)}', space=vmem, size = 0x12000, scoped, tag = 'internal scratch']
  #allocation2 [shape = 'f32[8,32]{1,0:T(8,128)}', space=vmem, size = 0x1000, scoped, tag = 'scratch operand']
  %s0 = inlined_call_operand.hbm [shape: f32[2,8,32], index: 0, kind: input, shape index: {}]
  %s1 = inlined_call_operand.hbm [shape: f32[2,8,32], index: 1, kind: input, shape index: {}]
  %s2 = inlined_call_operand.hbm [shape: f32[2,32,32], index: 2, kind: input, shape index: {}]
  %s3 = inlined_call_operand.hbm [shape: f32[2,1,32], index: 3, kind: input, shape index: {}]
  %s4 = inlined_call_operand.hbm [shape: f32[2,32,32], index: 4, kind: input, shape index: {}]
  %s5 = inlined_call_operand.hbm [shape: f32[2,1,32], index: 5, kind: input, shape index: {}]
  %s6 = inlined_call_operand.hbm [shape: f32[2,32,32], index: 6, kind: input, shape index: {}]
  %s7 = inlined_call_operand.hbm [shape: f32[2,1,32], index: 7, kind: input, shape index: {}]
  %s8 = inlined_call_operand.hbm [shape: f32[2,32,32], index: 8, kind: input, shape index: {}]
  %s9 = inlined_call_operand.hbm [shape: f32[2,1,32], index: 9, kind: input, shape index: {}]
  %s10 = inlined_call_operand.hbm [shape: f32[2,1,32], index: 10, kind: input, shape index: {}]
  %s11 = inlined_call_operand.hbm [shape: f32[2,1,32], index: 11, kind: input, shape index: {}]
  %s12 = inlined_call_operand.hbm [shape: f32[2,32,64], index: 12, kind: input, shape index: {}]
  %s13 = inlined_call_operand.hbm [shape: f32[2,1,64], index: 13, kind: input, shape index: {}]
  %s14 = inlined_call_operand.hbm [shape: f32[2,64,32], index: 14, kind: input, shape index: {}]
  %s15 = inlined_call_operand.hbm [shape: f32[2,1,32], index: 15, kind: input, shape index: {}]
  %s16 = inlined_call_operand.hbm [shape: f32[2,1,32], index: 16, kind: input, shape index: {}]
  %s17 = inlined_call_operand.hbm [shape: f32[2,1,32], index: 17, kind: input, shape index: {}]
  %s18 = inlined_call_operand.hbm [shape: f32[32,128], index: 18, kind: input, shape index: {}]
  %s19 = inlined_call_operand.hbm [shape: f32[1,128], index: 19, kind: input, shape index: {}]
  %s20 = inlined_call_operand.hbm [shape: f32[2,8,128], index: 20, kind: output, shape index: {}]
  %s21 = sld [smem:[#allocation0]]
  $region201: #{tpu_custom_call.1} parent=0
    _
  %s23 = ssub.s32 1, %s21
  %s24 = scalar_select 0, %s23, %s21
  $region1: #{tpu_custom_call.1} parent=0
    #allocation3 [shape = 'u8[8192]{0}', space=vmem, size = 0x2000, scoped, tag = 'input window, operand 0']
    #allocation4 [shape = 's32[2]{0}', space=sflag, size = 0x8, scoped, tag = 'scoped memory for tpu_custom_call.1']
    #allocation5 [shape = 's32[2]{0}', space=sflag, size = 0x8, scoped, tag = 'scoped memory for tpu_custom_call.1']
    #allocation6 [shape = 'u8[8192]{0}', space=vmem, size = 0x2000, scoped, tag = 'input window, operand 1']
    #allocation7 [shape = 's32[2]{0}', space=sflag, size = 0x8, scoped, tag = 'scoped memory for tpu_custom_call.1']
    #allocation8 [shape = 'u8[32768]{0}', space=vmem, size = 0x8000, scoped, tag = 'input window, operand 2']
    #allocation9 [shape = 'u8[1024]{0}', space=vmem, size = 0x400, scoped, tag = 'input window, operand 3']
    #allocation10 [shape = 's32[2]{0}', space=sflag, size = 0x8, scoped, tag = 'scoped memory for tpu_custom_call.1']
    #allocation11 [shape = 'u8[32768]{0}', space=vmem, size = 0x8000, scoped, tag = 'input window, operand 4']
    #allocation12 [shape = 'u8[1024]{0}', space=vmem, size = 0x400, scoped, tag = 'input window, operand 5']
    #allocation13 [shape = 's32[2]{0}', space=sflag, size = 0x8, scoped, tag = 'scoped memory for tpu_custom_call.1']
    #allocation14 [shape = 'u8[32768]{0}', space=vmem, size = 0x8000, scoped, tag = 'input window, operand 6']
    #allocation15 [shape = 'u8[1024]{0}', space=vmem, size = 0x400, scoped, tag = 'input window, operand 7']
    #allocation16 [shape = 's32[2]{0}', space=sflag, size = 0x8, scoped, tag = 'scoped memory for tpu_custom_call.1']
    #allocation17 [shape = 'u8[32768]{0}', space=vmem, size = 0x8000, scoped, tag = 'input window, operand 8']
    #allocation18 [shape = 'u8[1024]{0}', space=vmem, size = 0x400, scoped, tag = 'input window, operand 9']
    #allocation19 [shape = 's32[2]{0}', space=sflag, size = 0x8, scoped, tag = 'scoped memory for tpu_custom_call.1']
    #allocation20 [shape = 'u8[1024]{0}', space=vmem, size = 0x400, scoped, tag = 'input window, operand 10']
    #allocation21 [shape = 'u8[1024]{0}', space=vmem, size = 0x400, scoped, tag = 'input window, operand 11']
    #allocation22 [shape = 's32[2]{0}', space=sflag, size = 0x8, scoped, tag = 'scoped memory for tpu_custom_call.1']
    #allocation23 [shape = 'u8[32768]{0}', space=vmem, size = 0x8000, scoped, tag = 'input window, operand 12']
    #allocation24 [shape = 'u8[1024]{0}', space=vmem, size = 0x400, scoped, tag = 'input window, operand 13']
    #allocation25 [shape = 's32[2]{0}', space=sflag, size = 0x8, scoped, tag = 'scoped memory for tpu_custom_call.1']
    #allocation26 [shape = 'u8[65536]{0}', space=vmem, size = 0x10000, scoped, tag = 'input window, operand 14']
    #allocation27 [shape = 'u8[1024]{0}', space=vmem, size = 0x400, scoped, tag = 'input window, operand 15']
    #allocation28 [shape = 's32[2]{0}', space=sflag, size = 0x8, scoped, tag = 'scoped memory for tpu_custom_call.1']
    #allocation29 [shape = 'u8[1024]{0}', space=vmem, size = 0x400, scoped, tag = 'input window, operand 16']
    #allocation30 [shape = 'u8[1024]{0}', space=vmem, size = 0x400, scoped, tag = 'input window, operand 17']
    #allocation31 [shape = 's32[2]{0}', space=sflag, size = 0x8, scoped, tag = 'scoped memory for tpu_custom_call.1']
    #allocation32 [shape = 'u8[16384]{0}', space=vmem, size = 0x4000, scoped, tag = 'input window, operand 18, single buffered']
    #allocation33 [shape = 'u8[512]{0}', space=vmem, size = 0x400, scoped, tag = 'input window, operand 19, single buffered']
    #allocation34 [shape = 's32[1]{0}', space=sflag, size = 0x4, scoped, tag = 'scoped memory for tpu_custom_call.1']
    #allocation35 [shape = 'u8[8192]{0}', space=vmem, size = 0x2000, scoped, tag = 'output window, operand 0']
    %25 = vsyncpa [#allocation4], 0
    %s26 = scalar_lea.sflag [#allocation4], 1
    %27 = vsyncpa %s26, 0
    %28 = vsyncpa [#allocation7], 0
    %s29 = scalar_lea.sflag [#allocation7], 1
    %30 = vsyncpa %s29, 0
    %31 = vsyncpa [#allocation10], 0
    %s32 = scalar_lea.sflag [#allocation10], 1
    %33 = vsyncpa %s32, 0
    %34 = vsyncpa [#allocation13], 0
    %s35 = scalar_lea.sflag [#allocation13], 1
    %36 = vsyncpa %s35, 0
    %37 = vsyncpa [#allocation16], 0
    %s38 = scalar_lea.sflag [#allocation16], 1
    %39 = vsyncpa %s38, 0
    %40 = vsyncpa [#allocation19], 0
    %s41 = scalar_lea.sflag [#allocation19], 1
    %42 = vsyncpa %s41, 0
    %43 = vsyncpa [#allocation22], 0
    %s44 = scalar_lea.sflag [#allocation22], 1
    %45 = vsyncpa %s44, 0
    %46 = vsyncpa [#allocation25], 0
    %s47 = scalar_lea.sflag [#allocation25], 1
    %48 = vsyncpa %s47, 0
    %49 = vsyncpa [#allocation28], 0
    %s50 = scalar_lea.sflag [#allocation28], 1
    %51 = vsyncpa %s50, 0
    %52 = vsyncpa [#allocation31], 0
    %s53 = scalar_lea.sflag [#allocation31], 1
    %54 = vsyncpa %s53, 0
    %55 = vsyncpa [#allocation34], 0
    %56 = vsyncpa [#allocation5], 0
    %s57 = scalar_lea.sflag [#allocation5], 1
    %58 = vsyncpa %s57, 0
    loop: start=0, step=1, limit=6
    $region2: #{tpu_custom_call.1} parent=1 // loop_pre_header
      _
    $region3: #{tpu_custom_call.1} parent=1 // loop_header
      %s60 = sphi 0, %s64
      %p61 = scmp.ge.s32.totalorder %s60, 6
      %s67 = sphi 0, %s79
      %s68 = sphi 0, %s75
      %s69 = sphi 0, %s67
      %s70 = sphi 0, %s68
      %s71 = sphi 0, %s69
      %s72 = sphi 0, %s70
      %s82 = sphi 0, %s84
      %s85 = sphi 0, %s82
      %s86 = sphi 0, %s85
      %s102 = sphi 0, %s86
      %s108 = sphi 0, %s110
      %s111 = sphi 0, %s108
      %s112 = sphi 0, %s111
      %s128 = sphi 0, %s112
      %s134 = sphi 0, %s136
      %s137 = sphi 0, %s134
      %s138 = sphi 0, %s137
      %s154 = sphi 0, %s138
      %s160 = sphi 0, %s162
      %s163 = sphi 0, %s160
      %s164 = sphi 0, %s163
      %s180 = sphi 0, %s164
      %s186 = sphi 0, %s188
      %s189 = sphi 0, %s186
      %s190 = sphi 0, %s189
      %s206 = sphi 0, %s190
      %s212 = sphi 0, %s214
      %s215 = sphi 0, %s212
      %s216 = sphi 0, %s215
      %s232 = sphi 0, %s216
      %s238 = sphi 0, %s240
      %s241 = sphi 0, %s238
      %s242 = sphi 0, %s241
      %s258 = sphi 0, %s242
      %s264 = sphi 0, %s266
      %s267 = sphi 0, %s264
      %s268 = sphi 0, %s267
      %s284 = sphi 0, %s268
      %s290 = sphi 0, %s292
      %s293 = sphi 0, %s290
      %s294 = sphi 0, %s293
      %s310 = sphi 0, %s294
      %s316 = sphi 0, %s318
      %s319 = sphi 0, %s316
      %s320 = sphi 0, %s319
      %s336 = sphi 0, %s320
      %s342 = sphi 0, %s344
      %s345 = sphi 0, %s342
      %s346 = sphi 0, %s345
      %s362 = sphi 0, %s346
      %s368 = sphi 0, %s370
      %s371 = sphi 0, %s368
      %s372 = sphi 0, %s371
      %s388 = sphi 0, %s372
      %s394 = sphi 0, %s396
      %s397 = sphi 0, %s394
      %s398 = sphi 0, %s397
      %s414 = sphi 0, %s398
      %s420 = sphi 0, %s422
      %s423 = sphi 0, %s420
      %s424 = sphi 0, %s423
      %s440 = sphi 0, %s424
      %s446 = sphi 0, %s448
      %s449 = sphi 0, %s446
      %s450 = sphi 0, %s449
      %s466 = sphi 0, %s450
      %s472 = sphi 0, %s474
      %s475 = sphi 0, %s472
      %s476 = sphi 0, %s475
      %s492 = sphi 0, %s476
      %s498 = sphi 0, %s500
      %s501 = sphi 0, %s498
      %s502 = sphi 0, %s501
      %s518 = sphi 0, %s502
      %s524 = sphi 0, %s526
      %s527 = sphi 0, %s524
      %s528 = sphi 0, %s527
      %s544 = sphi 0, %s528
      %s548 = sphi 0, %s548
      %s550 = sphi 0, %s548
      %s551 = sphi 0, %s550
      %s565 = sphi 0, %s551
      %s569 = sphi 0, %s569
      %s571 = sphi 0, %s569
      %s572 = sphi 0, %s571
      %s586 = sphi 0, %s572
      %s592 = sphi 0, %s594
      %s595 = sphi 0, %s592
      %s596 = sphi 0, %s595
      %s612 = sphi 0, %s596
    $region4: #{tpu_custom_call.1} parent=1 // loop_header_branch
      %63 = sbr.rel (%p61) target = $region8
    $region5: #{tpu_custom_call.1} parent=1 // loop_body
      %s65 = ssub.s32 %s60, 1
      %s66 = ssub.s32 %s60, 2
      %s73 = sadd.s32 1, %s68
      %p74 = scmp.ge.s32.totalorder %s73, 2
      %s75 = scalar_select %p74, 0, %s73
      %s76 = sadd.s32 1, %s67
      %s77 = scalar_select %p74, %s76, %s67
      %p78 = scmp.ge.s32.totalorder %s77, 2
      %s79 = scalar_select %p78, 0, %s77
      %s80 = ssub.s32 %s67, %s79
      %p81 = scmp.eq.s32.totalorder %s80, 0
      %s83 = sadd.s32 %s82, 1
      %s84 = scalar_select %p81, %s82, %s83
      %p87 = pneg %p81
      %p88 = scmp.eq.s32.totalorder %s60, 3
      %p89 = por %p87, %p88
      %p90 = scmp.ne.s32.totalorder %s82, %s85
      %p91 = scmp.eq.s32.totalorder %s60, 0
      %p92 = por %p90, %p91
      %p93 = scmp.ne.s32.totalorder %s82, %s85
      %p94 = scmp.eq.s32.totalorder %s65, 3
      %p95 = por %p93, %p94
      %p96 = scmp.ne.s32.totalorder %s85, %s86
      %p97 = scmp.eq.s32.totalorder %s65, 0
      %p98 = por %p96, %p97
      %p99 = scmp.ne.s32.totalorder %s85, %s86
      %p100 = scmp.eq.s32.totalorder %s66, 3
      %p101 = por %p99, %p100
      %p103 = scmp.ne.s32.totalorder %s86, %s102
      %p104 = scmp.eq.s32.totalorder %s66, 0
      %p105 = por %p103, %p104
      %s106 = ssub.s32 %s67, %s79
      %p107 = scmp.eq.s32.totalorder %s106, 0
      %s109 = sadd.s32 %s108, 1
      %s110 = scalar_select %p107, %s108, %s109
      %p113 = pneg %p107
      %p114 = scmp.eq.s32.totalorder %s60, 3
      %p115 = por %p113, %p114
      %p116 = scmp.ne.s32.totalorder %s108, %s111
      %p117 = scmp.eq.s32.totalorder %s60, 0
      %p118 = por %p116, %p117
      %p119 = scmp.ne.s32.totalorder %s108, %s111
      %p120 = scmp.eq.s32.totalorder %s65, 3
      %p121 = por %p119, %p120
      %p122 = scmp.ne.s32.totalorder %s111, %s112
      %p123 = scmp.eq.s32.totalorder %s65, 0
      %p124 = por %p122, %p123
      %p125 = scmp.ne.s32.totalorder %s111, %s112
      %p126 = scmp.eq.s32.totalorder %s66, 3
      %p127 = por %p125, %p126
      %p129 = scmp.ne.s32.totalorder %s112, %s128
      %p130 = scmp.eq.s32.totalorder %s66, 0
      %p131 = por %p129, %p130
      %s132 = ssub.s32 %s68, %s75
      %p133 = scmp.eq.s32.totalorder %s132, 0
      %s135 = sadd.s32 %s134, 1
      %s136 = scalar_select %p133, %s134, %s135
      %p139 = pneg %p133
      %p140 = scmp.eq.s32.totalorder %s60, 3
      %p141 = por %p139, %p140
      %p142 = scmp.ne.s32.totalorder %s134, %s137
      %p143 = scmp.eq.s32.totalorder %s60, 0
      %p144 = por %p142, %p143
      %p145 = scmp.ne.s32.totalorder %s134, %s137
      %p146 = scmp.eq.s32.totalorder %s65, 3
      %p147 = por %p145, %p146
      %p148 = scmp.ne.s32.totalorder %s137, %s138
      %p149 = scmp.eq.s32.totalorder %s65, 0
      %p150 = por %p148, %p149
      %p151 = scmp.ne.s32.totalorder %s137, %s138
      %p152 = scmp.eq.s32.totalorder %s66, 3
      %p153 = por %p151, %p152
      %p155 = scmp.ne.s32.totalorder %s138, %s154
      %p156 = scmp.eq.s32.totalorder %s66, 0
      %p157 = por %p155, %p156
      %s158 = ssub.s32 %s68, %s75
      %p159 = scmp.eq.s32.totalorder %s158, 0
      %s161 = sadd.s32 %s160, 1
      %s162 = scalar_select %p159, %s160, %s161
      %p165 = pneg %p159
      %p166 = scmp.eq.s32.totalorder %s60, 3
      %p167 = por %p165, %p166
      %p168 = scmp.ne.s32.totalorder %s160, %s163
      %p169 = scmp.eq.s32.totalorder %s60, 0
      %p170 = por %p168, %p169
      %p171 = scmp.ne.s32.totalorder %s160, %s163
      %p172 = scmp.eq.s32.totalorder %s65, 3
      %p173 = por %p171, %p172
      %p174 = scmp.ne.s32.totalorder %s163, %s164
      %p175 = scmp.eq.s32.totalorder %s65, 0
      %p176 = por %p174, %p175
      %p177 = scmp.ne.s32.totalorder %s163, %s164
      %p178 = scmp.eq.s32.totalorder %s66, 3
      %p179 = por %p177, %p178
      %p181 = scmp.ne.s32.totalorder %s164, %s180
      %p182 = scmp.eq.s32.totalorder %s66, 0
      %p183 = por %p181, %p182
      %s184 = ssub.s32 %s68, %s75
      %p185 = scmp.eq.s32.totalorder %s184, 0
      %s187 = sadd.s32 %s186, 1
      %s188 = scalar_select %p185, %s186, %s187
      %p191 = pneg %p185
      %p192 = scmp.eq.s32.totalorder %s60, 3
      %p193 = por %p191, %p192
      %p194 = scmp.ne.s32.totalorder %s186, %s189
      %p195 = scmp.eq.s32.totalorder %s60, 0
      %p196 = por %p194, %p195
      %p197 = scmp.ne.s32.totalorder %s186, %s189
      %p198 = scmp.eq.s32.totalorder %s65, 3
      %p199 = por %p197, %p198
      %p200 = scmp.ne.s32.totalorder %s189, %s190
      %p201 = scmp.eq.s32.totalorder %s65, 0
      %p202 = por %p200, %p201
      %p203 = scmp.ne.s32.totalorder %s189, %s190
      %p204 = scmp.eq.s32.totalorder %s66, 3
      %p205 = por %p203, %p204
      %p207 = scmp.ne.s32.totalorder %s190, %s206
      %p208 = scmp.eq.s32.totalorder %s66, 0
      %p209 = por %p207, %p208
      %s210 = ssub.s32 %s68, %s75
      %p211 = scmp.eq.s32.totalorder %s210, 0
      %s213 = sadd.s32 %s212, 1
      %s214 = scalar_select %p211, %s212, %s213
      %p217 = pneg %p211
      %p218 = scmp.eq.s32.totalorder %s60, 3
      %p219 = por %p217, %p218
      %p220 = scmp.ne.s32.totalorder %s212, %s215
      %p221 = scmp.eq.s32.totalorder %s60, 0
      %p222 = por %p220, %p221
      %p223 = scmp.ne.s32.totalorder %s212, %s215
      %p224 = scmp.eq.s32.totalorder %s65, 3
      %p225 = por %p223, %p224
      %p226 = scmp.ne.s32.totalorder %s215, %s216
      %p227 = scmp.eq.s32.totalorder %s65, 0
      %p228 = por %p226, %p227
      %p229 = scmp.ne.s32.totalorder %s215, %s216
      %p230 = scmp.eq.s32.totalorder %s66, 3
      %p231 = por %p229, %p230
      %p233 = scmp.ne.s32.totalorder %s216, %s232
      %p234 = scmp.eq.s32.totalorder %s66, 0
      %p235 = por %p233, %p234
      %s236 = ssub.s32 %s68, %s75
      %p237 = scmp.eq.s32.totalorder %s236, 0
      %s239 = sadd.s32 %s238, 1
      %s240 = scalar_select %p237, %s238, %s239
      %p243 = pneg %p237
      %p244 = scmp.eq.s32.totalorder %s60, 3
      %p245 = por %p243, %p244
      %p246 = scmp.ne.s32.totalorder %s238, %s241
      %p247 = scmp.eq.s32.totalorder %s60, 0
      %p248 = por %p246, %p247
      %p249 = scmp.ne.s32.totalorder %s238, %s241
      %p250 = scmp.eq.s32.totalorder %s65, 3
      %p251 = por %p249, %p250
      %p252 = scmp.ne.s32.totalorder %s241, %s242
      %p253 = scmp.eq.s32.totalorder %s65, 0
      %p254 = por %p252, %p253
      %p255 = scmp.ne.s32.totalorder %s241, %s242
      %p256 = scmp.eq.s32.totalorder %s66, 3
      %p257 = por %p255, %p256
      %p259 = scmp.ne.s32.totalorder %s242, %s258
      %p260 = scmp.eq.s32.totalorder %s66, 0
      %p261 = por %p259, %p260
      %s262 = ssub.s32 %s68, %s75
      %p263 = scmp.eq.s32.totalorder %s262, 0
      %s265 = sadd.s32 %s264, 1
      %s266 = scalar_select %p263, %s264, %s265
      %p269 = pneg %p263
      %p270 = scmp.eq.s32.totalorder %s60, 3
      %p271 = por %p269, %p270
      %p272 = scmp.ne.s32.totalorder %s264, %s267
      %p273 = scmp.eq.s32.totalorder %s60, 0
      %p274 = por %p272, %p273
      %p275 = scmp.ne.s32.totalorder %s264, %s267
      %p276 = scmp.eq.s32.totalorder %s65, 3
      %p277 = por %p275, %p276
      %p278 = scmp.ne.s32.totalorder %s267, %s268
      %p279 = scmp.eq.s32.totalorder %s65, 0
      %p280 = por %p278, %p279
      %p281 = scmp.ne.s32.totalorder %s267, %s268
      %p282 = scmp.eq.s32.totalorder %s66, 3
      %p283 = por %p281, %p282
      %p285 = scmp.ne.s32.totalorder %s268, %s284
      %p286 = scmp.eq.s32.totalorder %s66, 0
      %p287 = por %p285, %p286
      %s288 = ssub.s32 %s68, %s75
      %p289 = scmp.eq.s32.totalorder %s288, 0
      %s291 = sadd.s32 %s290, 1
      %s292 = scalar_select %p289, %s290, %s291
      %p295 = pneg %p289
      %p296 = scmp.eq.s32.totalorder %s60, 3
      %p297 = por %p295, %p296
      %p298 = scmp.ne.s32.totalorder %s290, %s293
      %p299 = scmp.eq.s32.totalorder %s60, 0
      %p300 = por %p298, %p299
      %p301 = scmp.ne.s32.totalorder %s290, %s293
      %p302 = scmp.eq.s32.totalorder %s65, 3
      %p303 = por %p301, %p302
      %p304 = scmp.ne.s32.totalorder %s293, %s294
      %p305 = scmp.eq.s32.totalorder %s65, 0
      %p306 = por %p304, %p305
      %p307 = scmp.ne.s32.totalorder %s293, %s294
      %p308 = scmp.eq.s32.totalorder %s66, 3
      %p309 = por %p307, %p308
      %p311 = scmp.ne.s32.totalorder %s294, %s310
      %p312 = scmp.eq.s32.totalorder %s66, 0
      %p313 = por %p311, %p312
      %s314 = ssub.s32 %s68, %s75
      %p315 = scmp.eq.s32.totalorder %s314, 0
      %s317 = sadd.s32 %s316, 1
      %s318 = scalar_select %p315, %s316, %s317
      %p321 = pneg %p315
      %p322 = scmp.eq.s32.totalorder %s60, 3
      %p323 = por %p321, %p322
      %p324 = scmp.ne.s32.totalorder %s316, %s319
      %p325 = scmp.eq.s32.totalorder %s60, 0
      %p326 = por %p324, %p325
      %p327 = scmp.ne.s32.totalorder %s316, %s319
      %p328 = scmp.eq.s32.totalorder %s65, 3
      %p329 = por %p327, %p328
      %p330 = scmp.ne.s32.totalorder %s319, %s320
      %p331 = scmp.eq.s32.totalorder %s65, 0
      %p332 = por %p330, %p331
      %p333 = scmp.ne.s32.totalorder %s319, %s320
      %p334 = scmp.eq.s32.totalorder %s66, 3
      %p335 = por %p333, %p334
      %p337 = scmp.ne.s32.totalorder %s320, %s336
      %p338 = scmp.eq.s32.totalorder %s66, 0
      %p339 = por %p337, %p338
      %s340 = ssub.s32 %s68, %s75
      %p341 = scmp.eq.s32.totalorder %s340, 0
      %s343 = sadd.s32 %s342, 1
      %s344 = scalar_select %p341, %s342, %s343
      %p347 = pneg %p341
      %p348 = scmp.eq.s32.totalorder %s60, 3
      %p349 = por %p347, %p348
      %p350 = scmp.ne.s32.totalorder %s342, %s345
      %p351 = scmp.eq.s32.totalorder %s60, 0
      %p352 = por %p350, %p351
      %p353 = scmp.ne.s32.totalorder %s342, %s345
      %p354 = scmp.eq.s32.totalorder %s65, 3
      %p355 = por %p353, %p354
      %p356 = scmp.ne.s32.totalorder %s345, %s346
      %p357 = scmp.eq.s32.totalorder %s65, 0
      %p358 = por %p356, %p357
      %p359 = scmp.ne.s32.totalorder %s345, %s346
      %p360 = scmp.eq.s32.totalorder %s66, 3
      %p361 = por %p359, %p360
      %p363 = scmp.ne.s32.totalorder %s346, %s362
      %p364 = scmp.eq.s32.totalorder %s66, 0
      %p365 = por %p363, %p364
      %s366 = ssub.s32 %s68, %s75
      %p367 = scmp.eq.s32.totalorder %s366, 0
      %s369 = sadd.s32 %s368, 1
      %s370 = scalar_select %p367, %s368, %s369
      %p373 = pneg %p367
      %p374 = scmp.eq.s32.totalorder %s60, 3
      %p375 = por %p373, %p374
      %p376 = scmp.ne.s32.totalorder %s368, %s371
      %p377 = scmp.eq.s32.totalorder %s60, 0
      %p378 = por %p376, %p377
      %p379 = scmp.ne.s32.totalorder %s368, %s371
      %p380 = scmp.eq.s32.totalorder %s65, 3
      %p381 = por %p379, %p380
      %p382 = scmp.ne.s32.totalorder %s371, %s372
      %p383 = scmp.eq.s32.totalorder %s65, 0
      %p384 = por %p382, %p383
      %p385 = scmp.ne.s32.totalorder %s371, %s372
      %p386 = scmp.eq.s32.totalorder %s66, 3
      %p387 = por %p385, %p386
      %p389 = scmp.ne.s32.totalorder %s372, %s388
      %p390 = scmp.eq.s32.totalorder %s66, 0
      %p391 = por %p389, %p390
      %s392 = ssub.s32 %s68, %s75
      %p393 = scmp.eq.s32.totalorder %s392, 0
      %s395 = sadd.s32 %s394, 1
      %s396 = scalar_select %p393, %s394, %s395
      %p399 = pneg %p393
      %p400 = scmp.eq.s32.totalorder %s60, 3
      %p401 = por %p399, %p400
      %p402 = scmp.ne.s32.totalorder %s394, %s397
      %p403 = scmp.eq.s32.totalorder %s60, 0
      %p404 = por %p402, %p403
      %p405 = scmp.ne.s32.totalorder %s394, %s397
      %p406 = scmp.eq.s32.totalorder %s65, 3
      %p407 = por %p405, %p406
      %p408 = scmp.ne.s32.totalorder %s397, %s398
      %p409 = scmp.eq.s32.totalorder %s65, 0
      %p410 = por %p408, %p409
      %p411 = scmp.ne.s32.totalorder %s397, %s398
      %p412 = scmp.eq.s32.totalorder %s66, 3
      %p413 = por %p411, %p412
      %p415 = scmp.ne.s32.totalorder %s398, %s414
      %p416 = scmp.eq.s32.totalorder %s66, 0
      %p417 = por %p415, %p416
      %s418 = ssub.s32 %s68, %s75
      %p419 = scmp.eq.s32.totalorder %s418, 0
      %s421 = sadd.s32 %s420, 1
      %s422 = scalar_select %p419, %s420, %s421
      %p425 = pneg %p419
      %p426 = scmp.eq.s32.totalorder %s60, 3
      %p427 = por %p425, %p426
      %p428 = scmp.ne.s32.totalorder %s420, %s423
      %p429 = scmp.eq.s32.totalorder %s60, 0
      %p430 = por %p428, %p429
      %p431 = scmp.ne.s32.totalorder %s420, %s423
      %p432 = scmp.eq.s32.totalorder %s65, 3
      %p433 = por %p431, %p432
      %p434 = scmp.ne.s32.totalorder %s423, %s424
      %p435 = scmp.eq.s32.totalorder %s65, 0
      %p436 = por %p434, %p435
      %p437 = scmp.ne.s32.totalorder %s423, %s424
      %p438 = scmp.eq.s32.totalorder %s66, 3
      %p439 = por %p437, %p438
      %p441 = scmp.ne.s32.totalorder %s424, %s440
      %p442 = scmp.eq.s32.totalorder %s66, 0
      %p443 = por %p441, %p442
      %s444 = ssub.s32 %s68, %s75
      %p445 = scmp.eq.s32.totalorder %s444, 0
      %s447 = sadd.s32 %s446, 1
      %s448 = scalar_select %p445, %s446, %s447
      %p451 = pneg %p445
      %p452 = scmp.eq.s32.totalorder %s60, 3
      %p453 = por %p451, %p452
      %p454 = scmp.ne.s32.totalorder %s446, %s449
      %p455 = scmp.eq.s32.totalorder %s60, 0
      %p456 = por %p454, %p455
      %p457 = scmp.ne.s32.totalorder %s446, %s449
      %p458 = scmp.eq.s32.totalorder %s65, 3
      %p459 = por %p457, %p458
      %p460 = scmp.ne.s32.totalorder %s449, %s450
      %p461 = scmp.eq.s32.totalorder %s65, 0
      %p462 = por %p460, %p461
      %p463 = scmp.ne.s32.totalorder %s449, %s450
      %p464 = scmp.eq.s32.totalorder %s66, 3
      %p465 = por %p463, %p464
      %p467 = scmp.ne.s32.totalorder %s450, %s466
      %p468 = scmp.eq.s32.totalorder %s66, 0
      %p469 = por %p467, %p468
      %s470 = ssub.s32 %s68, %s75
      %p471 = scmp.eq.s32.totalorder %s470, 0
      %s473 = sadd.s32 %s472, 1
      %s474 = scalar_select %p471, %s472, %s473
      %p477 = pneg %p471
      %p478 = scmp.eq.s32.totalorder %s60, 3
      %p479 = por %p477, %p478
      %p480 = scmp.ne.s32.totalorder %s472, %s475
      %p481 = scmp.eq.s32.totalorder %s60, 0
      %p482 = por %p480, %p481
      %p483 = scmp.ne.s32.totalorder %s472, %s475
      %p484 = scmp.eq.s32.totalorder %s65, 3
      %p485 = por %p483, %p484
      %p486 = scmp.ne.s32.totalorder %s475, %s476
      %p487 = scmp.eq.s32.totalorder %s65, 0
      %p488 = por %p486, %p487
      %p489 = scmp.ne.s32.totalorder %s475, %s476
      %p490 = scmp.eq.s32.totalorder %s66, 3
      %p491 = por %p489, %p490
      %p493 = scmp.ne.s32.totalorder %s476, %s492
      %p494 = scmp.eq.s32.totalorder %s66, 0
      %p495 = por %p493, %p494
      %s496 = ssub.s32 %s68, %s75
      %p497 = scmp.eq.s32.totalorder %s496, 0
      %s499 = sadd.s32 %s498, 1
      %s500 = scalar_select %p497, %s498, %s499
      %p503 = pneg %p497
      %p504 = scmp.eq.s32.totalorder %s60, 3
      %p505 = por %p503, %p504
      %p506 = scmp.ne.s32.totalorder %s498, %s501
      %p507 = scmp.eq.s32.totalorder %s60, 0
      %p508 = por %p506, %p507
      %p509 = scmp.ne.s32.totalorder %s498, %s501
      %p510 = scmp.eq.s32.totalorder %s65, 3
      %p511 = por %p509, %p510
      %p512 = scmp.ne.s32.totalorder %s501, %s502
      %p513 = scmp.eq.s32.totalorder %s65, 0
      %p514 = por %p512, %p513
      %p515 = scmp.ne.s32.totalorder %s501, %s502
      %p516 = scmp.eq.s32.totalorder %s66, 3
      %p517 = por %p515, %p516
      %p519 = scmp.ne.s32.totalorder %s502, %s518
      %p520 = scmp.eq.s32.totalorder %s66, 0
      %p521 = por %p519, %p520
      %s522 = ssub.s32 %s68, %s75
      %p523 = scmp.eq.s32.totalorder %s522, 0
      %s525 = sadd.s32 %s524, 1
      %s526 = scalar_select %p523, %s524, %s525
      %p529 = pneg %p523
      %p530 = scmp.eq.s32.totalorder %s60, 3
      %p531 = por %p529, %p530
      %p532 = scmp.ne.s32.totalorder %s524, %s527
      %p533 = scmp.eq.s32.totalorder %s60, 0
      %p534 = por %p532, %p533
      %p535 = scmp.ne.s32.totalorder %s524, %s527
      %p536 = scmp.eq.s32.totalorder %s65, 3
      %p537 = por %p535, %p536
      %p538 = scmp.ne.s32.totalorder %s527, %s528
      %p539 = scmp.eq.s32.totalorder %s65, 0
      %p540 = por %p538, %p539
      %p541 = scmp.ne.s32.totalorder %s527, %s528
      %p542 = scmp.eq.s32.totalorder %s66, 3
      %p543 = por %p541, %p542
      %p545 = scmp.ne.s32.totalorder %s528, %s544
      %p546 = scmp.eq.s32.totalorder %s66, 0
      %p547 = por %p545, %p546
      %s549 = sadd.s32 %s548, 1
      %p552 = scmp.eq.s32.totalorder %s60, 3
      %p553 = scmp.ne.s32.totalorder %s548, %s550
      %p554 = scmp.eq.s32.totalorder %s60, 0
      %p555 = por %p553, %p554
      %p556 = scmp.ne.s32.totalorder %s548, %s550
      %p557 = scmp.eq.s32.totalorder %s65, 3
      %p558 = por %p556, %p557
      %p559 = scmp.ne.s32.totalorder %s550, %s551
      %p560 = scmp.eq.s32.totalorder %s65, 0
      %p561 = por %p559, %p560
      %p562 = scmp.ne.s32.totalorder %s550, %s551
      %p563 = scmp.eq.s32.totalorder %s66, 3
      %p564 = por %p562, %p563
      %p566 = scmp.ne.s32.totalorder %s551, %s565
      %p567 = scmp.eq.s32.totalorder %s66, 0
      %p568 = por %p566, %p567
      %s570 = sadd.s32 %s569, 1
      %p573 = scmp.eq.s32.totalorder %s60, 3
      %p574 = scmp.ne.s32.totalorder %s569, %s571
      %p575 = scmp.eq.s32.totalorder %s60, 0
      %p576 = por %p574, %p575
      %p577 = scmp.ne.s32.totalorder %s569, %s571
      %p578 = scmp.eq.s32.totalorder %s65, 3
      %p579 = por %p577, %p578
      %p580 = scmp.ne.s32.totalorder %s571, %s572
      %p581 = scmp.eq.s32.totalorder %s65, 0
      %p582 = por %p580, %p581
      %p583 = scmp.ne.s32.totalorder %s571, %s572
      %p584 = scmp.eq.s32.totalorder %s66, 3
      %p585 = por %p583, %p584
      %p587 = scmp.ne.s32.totalorder %s572, %s586
      %p588 = scmp.eq.s32.totalorder %s66, 0
      %p589 = por %p587, %p588
      %s590 = ssub.s32 %s67, %s79
      %p591 = scmp.eq.s32.totalorder %s590, 0
      %s593 = sadd.s32 %s592, 1
      %s594 = scalar_select %p591, %s592, %s593
      %p597 = pneg %p591
      %p598 = scmp.eq.s32.totalorder %s60, 3
      %p599 = por %p597, %p598
      %p600 = scmp.ne.s32.totalorder %s592, %s595
      %p601 = scmp.eq.s32.totalorder %s60, 0
      %p602 = por %p600, %p601
      %p603 = scmp.ne.s32.totalorder %s592, %s595
      %p604 = scmp.eq.s32.totalorder %s65, 3
      %p605 = por %p603, %p604
      %p606 = scmp.ne.s32.totalorder %s595, %s596
      %p607 = scmp.eq.s32.totalorder %s65, 0
      %p608 = por %p606, %p607
      %p609 = scmp.ne.s32.totalorder %s595, %s596
      %p610 = scmp.eq.s32.totalorder %s66, 3
      %p611 = por %p609, %p610
      %p613 = scmp.ne.s32.totalorder %s596, %s612
      %p614 = scmp.eq.s32.totalorder %s66, 0
      %p615 = por %p613, %p614
      %p616 = scmp.le.s32.totalorder 1, %s60
      %p617 = scmp.lt.s32.totalorder %s60, 5
      %p618 = pnand %p616, %p617
      %p619 = pneg %p618
      // Predicated region
      $region9: #{tpu_custom_call.1} parent=5 // pred_check
        _
      $region10: #{tpu_custom_call.1} parent=5 // pred_check_branch
        %621 = sbr.rel (%p618) target = $region12
      $region11: #{tpu_custom_call.1} parent=5 // pred_region
        %s622 = ssub.s32 %s60, 1
        // Predicated region
        $region13: #{tpu_custom_call.1} parent=11 // pred_check
          %p623 = pneg %p561
        $region14: #{tpu_custom_call.1} parent=11 // pred_check_branch
          %625 = sbr.rel (%p623) target = $region16
        $region15: #{tpu_custom_call.1} parent=11 // pred_region
          %s627 = ssub.s32 512, 512
          %628 = vsyncadd [#allocation31], %s627
          %s629 = sshll.u32 [#allocation32], 4
          %s630 = int_to_ptr.vmem [resolvable:$true] %s629
          %635 = dma.hbm_to_vmem [thread:$0]  %s18, 512, %s630, [#allocation31], 128, 128, 8
        $region16: #{tpu_custom_call.1} parent=11 // pred_fallthru
          _
        // Predicated region
        $region17: #{tpu_custom_call.1} parent=11 // pred_check
          %p636 = pneg %p582
        $region18: #{tpu_custom_call.1} parent=11 // pred_check_branch
          %638 = sbr.rel (%p636) target = $region20
        $region19: #{tpu_custom_call.1} parent=11 // pred_region
          %s640 = ssub.s32 16, 16
          %641 = vsyncadd [#allocation34], %s640
          %s643 = sshll.u32 [#allocation33], 4
          %s644 = int_to_ptr.vmem [resolvable:$true] %s643
          %646 = dma.hbm_to_vmem [thread:$0]  %s19, 16, %s644, [#allocation34]
        $region20: #{tpu_custom_call.1} parent=11 // pred_fallthru
          _
      $region12: #{tpu_custom_call.1} parent=5 // pred_fallthru
        _
      %p647 = scmp.lt.s32.totalorder %s60, 4
      // Predicated region
      $region21: #{tpu_custom_call.1} parent=5 // pred_check
        %p648 = pneg %p647
      $region22: #{tpu_custom_call.1} parent=5 // pred_check_branch
        %650 = sbr.rel (%p648) target = $region24
      $region23: #{tpu_custom_call.1} parent=5 // pred_region
        // Predicated region
        $region25: #{tpu_custom_call.1} parent=23 // pred_check
          %p651 = pneg %p92
        $region26: #{tpu_custom_call.1} parent=23 // pred_check_branch
          %653 = sbr.rel (%p651) target = $region28
        $region27: #{tpu_custom_call.1} parent=23 // pred_region
          %s654 = sand.u32 %s82, 1
          %s655 = scalar_lea.sflag [#allocation4], %s654
          %s656 = sand.u32 %s82, 1
          %s657 = smul.addr %s656, 8
          %s658 = scalar_lea.vmem [#allocation3], %s657
          %s660 = ssub.s32 128, 128
          %661 = vsyncadd %s655, %s660
          %s662 = smul.addr %s67, 128
          %s663 = scalar_lea.hbm %s0, %s662
          %s665 = sshll.u32 %s658, 4
          %s666 = int_to_ptr.vmem [resolvable:$true] %s665
          %668 = dma.hbm_to_vmem [thread:$0]  %s663, 128, %s666, %s655
        $region28: #{tpu_custom_call.1} parent=23 // pred_fallthru
          _
        // Predicated region
        $region29: #{tpu_custom_call.1} parent=23 // pred_check
          %p669 = pneg %p118
        $region30: #{tpu_custom_call.1} parent=23 // pred_check_branch
          %671 = sbr.rel (%p669) target = $region32
        $region31: #{tpu_custom_call.1} parent=23 // pred_region
          %s672 = sand.u32 %s60, 1
          %s673 = scalar_lea.sflag [#allocation7], %s672
          %s674 = sand.u32 %s108, 1
          %s675 = smul.addr %s674, 8
          %s676 = scalar_lea.vmem [#allocation6], %s675
          %s678 = ssub.s32 128, 128
          %679 = vsyncadd %s673, %s678
          %s680 = smul.addr %s67, 128
          %s681 = scalar_lea.hbm %s1, %s680
          %s683 = sshll.u32 %s676, 4
          %s684 = int_to_ptr.vmem [resolvable:$true] %s683
          %686 = dma.hbm_to_vmem [thread:$0]  %s681, 128, %s684, %s673
        $region32: #{tpu_custom_call.1} parent=23 // pred_fallthru
          _
        // Predicated region
        $region33: #{tpu_custom_call.1} parent=23 // pred_check
          %p687 = pneg %p144
        $region34: #{tpu_custom_call.1} parent=23 // pred_check_branch
          %689 = sbr.rel (%p687) target = $region36
        $region35: #{tpu_custom_call.1} parent=23 // pred_region
          %s690 = sand.u32 %s60, 1
          %s691 = scalar_lea.sflag [#allocation7], %s690
          %s692 = sand.u32 %s134, 1
          %s693 = smul.addr %s692, 32
          %s694 = scalar_lea.vmem [#allocation8], %s693
          %s696 = ssub.s32 512, 512
          %697 = vsyncadd %s691, %s696
          %s698 = smul.addr %s68, 4
          %s699 = smul.addr %s698, 128
          %s700 = scalar_lea.hbm %s2, %s699
          %s701 = sshll.u32 %s694, 4
          %s702 = int_to_ptr.vmem [resolvable:$true] %s701
          %707 = dma.hbm_to_vmem [thread:$0]  %s700, 512, %s702, %s691, 128, 128, 8
        $region36: #{tpu_custom_call.1} parent=23 // pred_fallthru
          _
        // Predicated region
        $region37: #{tpu_custom_call.1} parent=23 // pred_check
          %p708 = pneg %p170
        $region38: #{tpu_custom_call.1} parent=23 // pred_check_branch
          %710 = sbr.rel (%p708) target = $region40
        $region39: #{tpu_custom_call.1} parent=23 // pred_region
          %s711 = sand.u32 %s60, 1
          %s712 = scalar_lea.sflag [#allocation10], %s711
          %s713 = sand.u32 %s160, 1
          %s714 = scalar_lea.vmem [#allocation9], %s713
          %s716 = ssub.s32 16, 16
          %717 = vsyncadd %s712, %s716
          %s718 = smul.addr %s68, 16
          %s719 = scalar_lea.hbm %s3, %s718
          %s721 = sshll.u32 %s714, 4
          %s722 = int_to_ptr.vmem [resolvable:$true] %s721
          %724 = dma.hbm_to_vmem [thread:$0]  %s719, 16, %s722, %s712
        $region40: #{tpu_custom_call.1} parent=23 // pred_fallthru
          _
        // Predicated region
        $region41: #{tpu_custom_call.1} parent=23 // pred_check
          %p725 = pneg %p196
        $region42: #{tpu_custom_call.1} parent=23 // pred_check_branch
          %727 = sbr.rel (%p725) target = $region44
        $region43: #{tpu_custom_call.1} parent=23 // pred_region
          %s728 = sand.u32 %s60, 1
          %s729 = scalar_lea.sflag [#allocation10], %s728
          %s730 = sand.u32 %s186, 1
          %s731 = smul.addr %s730, 32
          %s732 = scalar_lea.vmem [#allocation11], %s731
          %s734 = ssub.s32 512, 512
          %735 = vsyncadd %s729, %s734
          %s736 = smul.addr %s68, 4
          %s737 = smul.addr %s736, 128
          %s738 = scalar_lea.hbm %s4, %s737
          %s739 = sshll.u32 %s732, 4
          %s740 = int_to_ptr.vmem [resolvable:$true] %s739
          %745 = dma.hbm_to_vmem [thread:$0]  %s738, 512, %s740, %s729, 128, 128, 8
        $region44: #{tpu_custom_call.1} parent=23 // pred_fallthru
          _
        // Predicated region
        $region45: #{tpu_custom_call.1} parent=23 // pred_check
          %p746 = pneg %p222
        $region46: #{tpu_custom_call.1} parent=23 // pred_check_branch
          %748 = sbr.rel (%p746) target = $region48
        $region47: #{tpu_custom_call.1} parent=23 // pred_region
          %s749 = sand.u32 %s60, 1
          %s750 = scalar_lea.sflag [#allocation13], %s749
          %s751 = sand.u32 %s212, 1
          %s752 = scalar_lea.vmem [#allocation12], %s751
          %s754 = ssub.s32 16, 16
          %755 = vsyncadd %s750, %s754
          %s756 = smul.addr %s68, 16
          %s757 = scalar_lea.hbm %s5, %s756
          %s759 = sshll.u32 %s752, 4
          %s760 = int_to_ptr.vmem [resolvable:$true] %s759
          %762 = dma.hbm_to_vmem [thread:$0]  %s757, 16, %s760, %s750
        $region48: #{tpu_custom_call.1} parent=23 // pred_fallthru
          _
        // Predicated region
        $region49: #{tpu_custom_call.1} parent=23 // pred_check
          %p763 = pneg %p248
        $region50: #{tpu_custom_call.1} parent=23 // pred_check_branch
          %765 = sbr.rel (%p763) target = $region52
        $region51: #{tpu_custom_call.1} parent=23 // pred_region
          %s766 = sand.u32 %s60, 1
          %s767 = scalar_lea.sflag [#allocation13], %s766
          %s768 = sand.u32 %s238, 1
          %s769 = smul.addr %s768, 32
          %s770 = scalar_lea.vmem [#allocation14], %s769
          %s772 = ssub.s32 512, 512
          %773 = vsyncadd %s767, %s772
          %s774 = smul.addr %s68, 4
          %s775 = smul.addr %s774, 128
          %s776 = scalar_lea.hbm %s6, %s775
          %s777 = sshll.u32 %s770, 4
          %s778 = int_to_ptr.vmem [resolvable:$true] %s777
          %783 = dma.hbm_to_vmem [thread:$0]  %s776, 512, %s778, %s767, 128, 128, 8
        $region52: #{tpu_custom_call.1} parent=23 // pred_fallthru
          _
        // Predicated region
        $region53: #{tpu_custom_call.1} parent=23 // pred_check
          %p784 = pneg %p274
        $region54: #{tpu_custom_call.1} parent=23 // pred_check_branch
          %786 = sbr.rel (%p784) target = $region56
        $region55: #{tpu_custom_call.1} parent=23 // pred_region
          %s787 = sand.u32 %s60, 1
          %s788 = scalar_lea.sflag [#allocation16], %s787
          %s789 = sand.u32 %s264, 1
          %s790 = scalar_lea.vmem [#allocation15], %s789
          %s792 = ssub.s32 16, 16
          %793 = vsyncadd %s788, %s792
          %s794 = smul.addr %s68, 16
          %s795 = scalar_lea.hbm %s7, %s794
          %s797 = sshll.u32 %s790, 4
          %s798 = int_to_ptr.vmem [resolvable:$true] %s797
          %800 = dma.hbm_to_vmem [thread:$0]  %s795, 16, %s798, %s788
        $region56: #{tpu_custom_call.1} parent=23 // pred_fallthru
          _
        // Predicated region
        $region57: #{tpu_custom_call.1} parent=23 // pred_check
          %p801 = pneg %p300
        $region58: #{tpu_custom_call.1} parent=23 // pred_check_branch
          %803 = sbr.rel (%p801) target = $region60
        $region59: #{tpu_custom_call.1} parent=23 // pred_region
          %s804 = sand.u32 %s60, 1
          %s805 = scalar_lea.sflag [#allocation16], %s804
          %s806 = sand.u32 %s290, 1
          %s807 = smul.addr %s806, 32
          %s808 = scalar_lea.vmem [#allocation17], %s807
          %s810 = ssub.s32 512, 512
          %811 = vsyncadd %s805, %s810
          %s812 = smul.addr %s68, 4
          %s813 = smul.addr %s812, 128
          %s814 = scalar_lea.hbm %s8, %s813
          %s815 = sshll.u32 %s808, 4
          %s816 = int_to_ptr.vmem [resolvable:$true] %s815
          %821 = dma.hbm_to_vmem [thread:$0]  %s814, 512, %s816, %s805, 128, 128, 8
        $region60: #{tpu_custom_call.1} parent=23 // pred_fallthru
          _
        // Predicated region
        $region61: #{tpu_custom_call.1} parent=23 // pred_check
          %p822 = pneg %p326
        $region62: #{tpu_custom_call.1} parent=23 // pred_check_branch
          %824 = sbr.rel (%p822) target = $region64
        $region63: #{tpu_custom_call.1} parent=23 // pred_region
          %s825 = sand.u32 %s60, 1
          %s826 = scalar_lea.sflag [#allocation19], %s825
          %s827 = sand.u32 %s316, 1
          %s828 = scalar_lea.vmem [#allocation18], %s827
          %s830 = ssub.s32 16, 16
          %831 = vsyncadd %s826, %s830
          %s832 = smul.addr %s68, 16
          %s833 = scalar_lea.hbm %s9, %s832
          %s835 = sshll.u32 %s828, 4
          %s836 = int_to_ptr.vmem [resolvable:$true] %s835
          %838 = dma.hbm_to_vmem [thread:$0]  %s833, 16, %s836, %s826
        $region64: #{tpu_custom_call.1} parent=23 // pred_fallthru
          _
        // Predicated region
        $region65: #{tpu_custom_call.1} parent=23 // pred_check
          %p839 = pneg %p352
        $region66: #{tpu_custom_call.1} parent=23 // pred_check_branch
          %841 = sbr.rel (%p839) target = $region68
        $region67: #{tpu_custom_call.1} parent=23 // pred_region
          %s842 = sand.u32 %s60, 1
          %s843 = scalar_lea.sflag [#allocation19], %s842
          %s844 = sand.u32 %s342, 1
          %s845 = scalar_lea.vmem [#allocation20], %s844
          %s847 = ssub.s32 16, 16
          %848 = vsyncadd %s843, %s847
          %s849 = smul.addr %s68, 16
          %s850 = scalar_lea.hbm %s10, %s849
          %s852 = sshll.u32 %s845, 4
          %s853 = int_to_ptr.vmem [resolvable:$true] %s852
          %855 = dma.hbm_to_vmem [thread:$0]  %s850, 16, %s853, %s843
        $region68: #{tpu_custom_call.1} parent=23 // pred_fallthru
          _
        // Predicated region
        $region69: #{tpu_custom_call.1} parent=23 // pred_check
          %p856 = pneg %p378
        $region70: #{tpu_custom_call.1} parent=23 // pred_check_branch
          %858 = sbr.rel (%p856) target = $region72
        $region71: #{tpu_custom_call.1} parent=23 // pred_region
          %s859 = sand.u32 %s60, 1
          %s860 = scalar_lea.sflag [#allocation22], %s859
          %s861 = sand.u32 %s368, 1
          %s862 = scalar_lea.vmem [#allocation21], %s861
          %s864 = ssub.s32 16, 16
          %865 = vsyncadd %s860, %s864
          %s866 = smul.addr %s68, 16
          %s867 = scalar_lea.hbm %s11, %s866
          %s869 = sshll.u32 %s862, 4
          %s870 = int_to_ptr.vmem [resolvable:$true] %s869
          %872 = dma.hbm_to_vmem [thread:$0]  %s867, 16, %s870, %s860
        $region72: #{tpu_custom_call.1} parent=23 // pred_fallthru
          _
        // Predicated region
        $region73: #{tpu_custom_call.1} parent=23 // pred_check
          %p873 = pneg %p404
        $region74: #{tpu_custom_call.1} parent=23 // pred_check_branch
          %875 = sbr.rel (%p873) target = $region76
        $region75: #{tpu_custom_call.1} parent=23 // pred_region
          %s876 = sand.u32 %s60, 1
          %s877 = scalar_lea.sflag [#allocation22], %s876
          %s878 = sand.u32 %s394, 1
          %s879 = smul.addr %s878, 32
          %s880 = scalar_lea.vmem [#allocation23], %s879
          %s882 = ssub.s32 512, 512
          %883 = vsyncadd %s877, %s882
          %s884 = smul.addr %s68, 4
          %s885 = smul.addr %s884, 128
          %s886 = scalar_lea.hbm %s12, %s885
          %s887 = sshll.u32 %s880, 4
          %s888 = int_to_ptr.vmem [resolvable:$true] %s887
          %893 = dma.hbm_to_vmem [thread:$0]  %s886, 512, %s888, %s877, 128, 128, 8
        $region76: #{tpu_custom_call.1} parent=23 // pred_fallthru
          _
        // Predicated region
        $region77: #{tpu_custom_call.1} parent=23 // pred_check
          %p894 = pneg %p430
        $region78: #{tpu_custom_call.1} parent=23 // pred_check_branch
          %896 = sbr.rel (%p894) target = $region80
        $region79: #{tpu_custom_call.1} parent=23 // pred_region
          %s897 = sand.u32 %s60, 1
          %s898 = scalar_lea.sflag [#allocation25], %s897
          %s899 = sand.u32 %s420, 1
          %s900 = scalar_lea.vmem [#allocation24], %s899
          %s902 = ssub.s32 16, 16
          %903 = vsyncadd %s898, %s902
          %s904 = smul.addr %s68, 16
          %s905 = scalar_lea.hbm %s13, %s904
          %s907 = sshll.u32 %s900, 4
          %s908 = int_to_ptr.vmem [resolvable:$true] %s907
          %910 = dma.hbm_to_vmem [thread:$0]  %s905, 16, %s908, %s898
        $region80: #{tpu_custom_call.1} parent=23 // pred_fallthru
          _
        // Predicated region
        $region81: #{tpu_custom_call.1} parent=23 // pred_check
          %p911 = pneg %p456
        $region82: #{tpu_custom_call.1} parent=23 // pred_check_branch
          %913 = sbr.rel (%p911) target = $region84
        $region83: #{tpu_custom_call.1} parent=23 // pred_region
          %s914 = sand.u32 %s60, 1
          %s915 = scalar_lea.sflag [#allocation25], %s914
          %s916 = sand.u32 %s446, 1
          %s917 = smul.addr %s916, 64
          %s918 = scalar_lea.vmem [#allocation26], %s917
          %s920 = ssub.s32 1024, 1024
          %921 = vsyncadd %s915, %s920
          %s922 = smul.addr %s68, 8
          %s923 = smul.addr %s922, 128
          %s924 = scalar_lea.hbm %s14, %s923
          %s925 = sshll.u32 %s918, 4
          %s926 = int_to_ptr.vmem [resolvable:$true] %s925
          %931 = dma.hbm_to_vmem [thread:$0]  %s924, 1024, %s926, %s915, 128, 128, 8
        $region84: #{tpu_custom_call.1} parent=23 // pred_fallthru
          _
        // Predicated region
        $region85: #{tpu_custom_call.1} parent=23 // pred_check
          %p932 = pneg %p482
        $region86: #{tpu_custom_call.1} parent=23 // pred_check_branch
          %934 = sbr.rel (%p932) target = $region88
        $region87: #{tpu_custom_call.1} parent=23 // pred_region
          %s935 = sand.u32 %s60, 1
          %s936 = scalar_lea.sflag [#allocation28], %s935
          %s937 = sand.u32 %s472, 1
          %s938 = scalar_lea.vmem [#allocation27], %s937
          %s940 = ssub.s32 16, 16
          %941 = vsyncadd %s936, %s940
          %s942 = smul.addr %s68, 16
          %s943 = scalar_lea.hbm %s15, %s942
          %s945 = sshll.u32 %s938, 4
          %s946 = int_to_ptr.vmem [resolvable:$true] %s945
          %948 = dma.hbm_to_vmem [thread:$0]  %s943, 16, %s946, %s936
        $region88: #{tpu_custom_call.1} parent=23 // pred_fallthru
          _
        // Predicated region
        $region89: #{tpu_custom_call.1} parent=23 // pred_check
          %p949 = pneg %p508
        $region90: #{tpu_custom_call.1} parent=23 // pred_check_branch
          %951 = sbr.rel (%p949) target = $region92
        $region91: #{tpu_custom_call.1} parent=23 // pred_region
          %s952 = sand.u32 %s60, 1
          %s953 = scalar_lea.sflag [#allocation28], %s952
          %s954 = sand.u32 %s498, 1
          %s955 = scalar_lea.vmem [#allocation29], %s954
          %s957 = ssub.s32 16, 16
          %958 = vsyncadd %s953, %s957
          %s959 = smul.addr %s68, 16
          %s960 = scalar_lea.hbm %s16, %s959
          %s962 = sshll.u32 %s955, 4
          %s963 = int_to_ptr.vmem [resolvable:$true] %s962
          %965 = dma.hbm_to_vmem [thread:$0]  %s960, 16, %s963, %s953
        $region92: #{tpu_custom_call.1} parent=23 // pred_fallthru
          _
        // Predicated region
        $region93: #{tpu_custom_call.1} parent=23 // pred_check
          %p966 = pneg %p534
        $region94: #{tpu_custom_call.1} parent=23 // pred_check_branch
          %968 = sbr.rel (%p966) target = $region96
        $region95: #{tpu_custom_call.1} parent=23 // pred_region
          %s969 = sand.u32 %s60, 1
          %s970 = scalar_lea.sflag [#allocation31], %s969
          %s971 = sand.u32 %s524, 1
          %s972 = scalar_lea.vmem [#allocation30], %s971
          %s974 = ssub.s32 16, 16
          %975 = vsyncadd %s970, %s974
          %s976 = smul.addr %s68, 16
          %s977 = scalar_lea.hbm %s17, %s976
          %s979 = sshll.u32 %s972, 4
          %s980 = int_to_ptr.vmem [resolvable:$true] %s979
          %982 = dma.hbm_to_vmem [thread:$0]  %s977, 16, %s980, %s970
        $region96: #{tpu_custom_call.1} parent=23 // pred_fallthru
          _
      $region24: #{tpu_custom_call.1} parent=5 // pred_fallthru
        _
      %p983 = scmp.le.s32.totalorder 1, %s60
      %p984 = scmp.lt.s32.totalorder %s60, 5
      %p985 = pnand %p983, %p984
      %p986 = pneg %p985
      // Predicated region
      $region97: #{tpu_custom_call.1} parent=5 // pred_check
        _
      $region98: #{tpu_custom_call.1} parent=5 // pred_check_branch
        %988 = sbr.rel (%p985) target = $region100
      $region99: #{tpu_custom_call.1} parent=5 // pred_region
        %s989 = ssub.s32 %s60, 1
        %s990 = sand.u32 %s85, 1
        %s991 = scalar_lea.sflag [#allocation4], %s990
        %s992 = sand.u32 %s85, 1
        %s993 = smul.addr %s992, 8
        %s994 = scalar_lea.vmem [#allocation3], %s993
        // Predicated region
        $region101: #{tpu_custom_call.1} parent=99 // pred_check
          %p995 = pneg %p98
        $region102: #{tpu_custom_call.1} parent=99 // pred_check_branch
          %997 = sbr.rel (%p995) target = $region104
        $region103: #{tpu_custom_call.1} parent=99 // pred_region
          %998 = dma.done %s991, 128
        $region104: #{tpu_custom_call.1} parent=99 // pred_fallthru
          _
        %s999 = sand.u32 %s65, 1
        %s1000 = scalar_lea.sflag [#allocation7], %s999
        %s1001 = sand.u32 %s111, 1
        %s1002 = smul.addr %s1001, 8
        %s1003 = scalar_lea.vmem [#allocation6], %s1002
        // Predicated region
        $region105: #{tpu_custom_call.1} parent=99 // pred_check
          %p1004 = pneg %p124
        $region106: #{tpu_custom_call.1} parent=99 // pred_check_branch
          %1006 = sbr.rel (%p1004) target = $region108
        $region107: #{tpu_custom_call.1} parent=99 // pred_region
          %1007 = dma.done %s1000, 128
        $region108: #{tpu_custom_call.1} parent=99 // pred_fallthru
          _
        %s1008 = sand.u32 %s65, 1
        %s1009 = scalar_lea.sflag [#allocation7], %s1008
        %s1010 = sand.u32 %s137, 1
        %s1011 = smul.addr %s1010, 32
        %s1012 = scalar_lea.vmem [#allocation8], %s1011
        // Predicated region
        $region109: #{tpu_custom_call.1} parent=99 // pred_check
          %p1013 = pneg %p150
        $region110: #{tpu_custom_call.1} parent=99 // pred_check_branch
          %1015 = sbr.rel (%p1013) target = $region112
        $region111: #{tpu_custom_call.1} parent=99 // pred_region
          %1016 = dma.done %s1009, 512
        $region112: #{tpu_custom_call.1} parent=99 // pred_fallthru
          _
        %s1017 = sand.u32 %s65, 1
        %s1018 = scalar_lea.sflag [#allocation10], %s1017
        %s1019 = sand.u32 %s163, 1
        %s1020 = scalar_lea.vmem [#allocation9], %s1019
        // Predicated region
        $region113: #{tpu_custom_call.1} parent=99 // pred_check
          %p1021 = pneg %p176
        $region114: #{tpu_custom_call.1} parent=99 // pred_check_branch
          %1023 = sbr.rel (%p1021) target = $region116
        $region115: #{tpu_custom_call.1} parent=99 // pred_region
          %1024 = dma.done %s1018, 16
        $region116: #{tpu_custom_call.1} parent=99 // pred_fallthru
          _
        %s1025 = sand.u32 %s65, 1
        %s1026 = scalar_lea.sflag [#allocation10], %s1025
        %s1027 = sand.u32 %s189, 1
        %s1028 = smul.addr %s1027, 32
        %s1029 = scalar_lea.vmem [#allocation11], %s1028
        // Predicated region
        $region117: #{tpu_custom_call.1} parent=99 // pred_check
          %p1030 = pneg %p202
        $region118: #{tpu_custom_call.1} parent=99 // pred_check_branch
          %1032 = sbr.rel (%p1030) target = $region120
        $region119: #{tpu_custom_call.1} parent=99 // pred_region
          %1033 = dma.done %s1026, 512
        $region120: #{tpu_custom_call.1} parent=99 // pred_fallthru
          _
        %s1034 = sand.u32 %s65, 1
        %s1035 = scalar_lea.sflag [#allocation13], %s1034
        %s1036 = sand.u32 %s215, 1
        %s1037 = scalar_lea.vmem [#allocation12], %s1036
        // Predicated region
        $region121: #{tpu_custom_call.1} parent=99 // pred_check
          %p1038 = pneg %p228
        $region122: #{tpu_custom_call.1} parent=99 // pred_check_branch
          %1040 = sbr.rel (%p1038) target = $region124
        $region123: #{tpu_custom_call.1} parent=99 // pred_region
          %1041 = dma.done %s1035, 16
        $region124: #{tpu_custom_call.1} parent=99 // pred_fallthru
          _
        %s1042 = sand.u32 %s65, 1
        %s1043 = scalar_lea.sflag [#allocation13], %s1042
        %s1044 = sand.u32 %s241, 1
        %s1045 = smul.addr %s1044, 32
        %s1046 = scalar_lea.vmem [#allocation14], %s1045
        // Predicated region
        $region125: #{tpu_custom_call.1} parent=99 // pred_check
          %p1047 = pneg %p254
        $region126: #{tpu_custom_call.1} parent=99 // pred_check_branch
          %1049 = sbr.rel (%p1047) target = $region128
        $region127: #{tpu_custom_call.1} parent=99 // pred_region
          %1050 = dma.done %s1043, 512
        $region128: #{tpu_custom_call.1} parent=99 // pred_fallthru
          _
        %s1051 = sand.u32 %s65, 1
        %s1052 = scalar_lea.sflag [#allocation16], %s1051
        %s1053 = sand.u32 %s267, 1
        %s1054 = scalar_lea.vmem [#allocation15], %s1053
        // Predicated region
        $region129: #{tpu_custom_call.1} parent=99 // pred_check
          %p1055 = pneg %p280
        $region130: #{tpu_custom_call.1} parent=99 // pred_check_branch
          %1057 = sbr.rel (%p1055) target = $region132
        $region131: #{tpu_custom_call.1} parent=99 // pred_region
          %1058 = dma.done %s1052, 16
        $region132: #{tpu_custom_call.1} parent=99 // pred_fallthru
          _
        %s1059 = sand.u32 %s65, 1
        %s1060 = scalar_lea.sflag [#allocation16], %s1059
        %s1061 = sand.u32 %s293, 1
        %s1062 = smul.addr %s1061, 32
        %s1063 = scalar_lea.vmem [#allocation17], %s1062
        // Predicated region
        $region133: #{tpu_custom_call.1} parent=99 // pred_check
          %p1064 = pneg %p306
        $region134: #{tpu_custom_call.1} parent=99 // pred_check_branch
          %1066 = sbr.rel (%p1064) target = $region136
        $region135: #{tpu_custom_call.1} parent=99 // pred_region
          %1067 = dma.done %s1060, 512
        $region136: #{tpu_custom_call.1} parent=99 // pred_fallthru
          _
        %s1068 = sand.u32 %s65, 1
        %s1069 = scalar_lea.sflag [#allocation19], %s1068
        %s1070 = sand.u32 %s319, 1
        %s1071 = scalar_lea.vmem [#allocation18], %s1070
        // Predicated region
        $region137: #{tpu_custom_call.1} parent=99 // pred_check
          %p1072 = pneg %p332
        $region138: #{tpu_custom_call.1} parent=99 // pred_check_branch
          %1074 = sbr.rel (%p1072) target = $region140
        $region139: #{tpu_custom_call.1} parent=99 // pred_region
          %1075 = dma.done %s1069, 16
        $region140: #{tpu_custom_call.1} parent=99 // pred_fallthru
          _
        %s1076 = sand.u32 %s65, 1
        %s1077 = scalar_lea.sflag [#allocation19], %s1076
        %s1078 = sand.u32 %s345, 1
        %s1079 = scalar_lea.vmem [#allocation20], %s1078
        // Predicated region
        $region141: #{tpu_custom_call.1} parent=99 // pred_check
          %p1080 = pneg %p358
        $region142: #{tpu_custom_call.1} parent=99 // pred_check_branch
          %1082 = sbr.rel (%p1080) target = $region144
        $region143: #{tpu_custom_call.1} parent=99 // pred_region
          %1083 = dma.done %s1077, 16
        $region144: #{tpu_custom_call.1} parent=99 // pred_fallthru
          _
        %s1084 = sand.u32 %s65, 1
        %s1085 = scalar_lea.sflag [#allocation22], %s1084
        %s1086 = sand.u32 %s371, 1
        %s1087 = scalar_lea.vmem [#allocation21], %s1086
        // Predicated region
        $region145: #{tpu_custom_call.1} parent=99 // pred_check
          %p1088 = pneg %p384
        $region146: #{tpu_custom_call.1} parent=99 // pred_check_branch
          %1090 = sbr.rel (%p1088) target = $region148
        $region147: #{tpu_custom_call.1} parent=99 // pred_region
          %1091 = dma.done %s1085, 16
        $region148: #{tpu_custom_call.1} parent=99 // pred_fallthru
          _
        %s1092 = sand.u32 %s65, 1
        %s1093 = scalar_lea.sflag [#allocation22], %s1092
        %s1094 = sand.u32 %s397, 1
        %s1095 = smul.addr %s1094, 32
        %s1096 = scalar_lea.vmem [#allocation23], %s1095
        // Predicated region
        $region149: #{tpu_custom_call.1} parent=99 // pred_check
          %p1097 = pneg %p410
        $region150: #{tpu_custom_call.1} parent=99 // pred_check_branch
          %1099 = sbr.rel (%p1097) target = $region152
        $region151: #{tpu_custom_call.1} parent=99 // pred_region
          %1100 = dma.done %s1093, 512
        $region152: #{tpu_custom_call.1} parent=99 // pred_fallthru
          _
        %s1101 = sand.u32 %s65, 1
        %s1102 = scalar_lea.sflag [#allocation25], %s1101
        %s1103 = sand.u32 %s423, 1
        %s1104 = scalar_lea.vmem [#allocation24], %s1103
        // Predicated region
        $region153: #{tpu_custom_call.1} parent=99 // pred_check
          %p1105 = pneg %p436
        $region154: #{tpu_custom_call.1} parent=99 // pred_check_branch
          %1107 = sbr.rel (%p1105) target = $region156
        $region155: #{tpu_custom_call.1} parent=99 // pred_region
          %1108 = dma.done %s1102, 16
        $region156: #{tpu_custom_call.1} parent=99 // pred_fallthru
          _
        %s1109 = sand.u32 %s65, 1
        %s1110 = scalar_lea.sflag [#allocation25], %s1109
        %s1111 = sand.u32 %s449, 1
        %s1112 = smul.addr %s1111, 64
        %s1113 = scalar_lea.vmem [#allocation26], %s1112
        // Predicated region
        $region157: #{tpu_custom_call.1} parent=99 // pred_check
          %p1114 = pneg %p462
        $region158: #{tpu_custom_call.1} parent=99 // pred_check_branch
          %1116 = sbr.rel (%p1114) target = $region160
        $region159: #{tpu_custom_call.1} parent=99 // pred_region
          %1117 = dma.done %s1110, 1024
        $region160: #{tpu_custom_call.1} parent=99 // pred_fallthru
          _
        %s1118 = sand.u32 %s65, 1
        %s1119 = scalar_lea.sflag [#allocation28], %s1118
        %s1120 = sand.u32 %s475, 1
        %s1121 = scalar_lea.vmem [#allocation27], %s1120
        // Predicated region
        $region161: #{tpu_custom_call.1} parent=99 // pred_check
          %p1122 = pneg %p488
        $region162: #{tpu_custom_call.1} parent=99 // pred_check_branch
          %1124 = sbr.rel (%p1122) target = $region164
        $region163: #{tpu_custom_call.1} parent=99 // pred_region
          %1125 = dma.done %s1119, 16
        $region164: #{tpu_custom_call.1} parent=99 // pred_fallthru
          _
        %s1126 = sand.u32 %s65, 1
        %s1127 = scalar_lea.sflag [#allocation28], %s1126
        %s1128 = sand.u32 %s501, 1
        %s1129 = scalar_lea.vmem [#allocation29], %s1128
        // Predicated region
        $region165: #{tpu_custom_call.1} parent=99 // pred_check
          %p1130 = pneg %p514
        $region166: #{tpu_custom_call.1} parent=99 // pred_check_branch
          %1132 = sbr.rel (%p1130) target = $region168
        $region167: #{tpu_custom_call.1} parent=99 // pred_region
          %1133 = dma.done %s1127, 16
        $region168: #{tpu_custom_call.1} parent=99 // pred_fallthru
          _
        %s1134 = sand.u32 %s65, 1
        %s1135 = scalar_lea.sflag [#allocation31], %s1134
        %s1136 = sand.u32 %s527, 1
        %s1137 = scalar_lea.vmem [#allocation30], %s1136
        // Predicated region
        $region169: #{tpu_custom_call.1} parent=99 // pred_check
          %p1138 = pneg %p540
        $region170: #{tpu_custom_call.1} parent=99 // pred_check_branch
          %1140 = sbr.rel (%p1138) target = $region172
        $region171: #{tpu_custom_call.1} parent=99 // pred_region
          %1141 = dma.done %s1135, 16
        $region172: #{tpu_custom_call.1} parent=99 // pred_fallthru
          _
        // Predicated region
        $region173: #{tpu_custom_call.1} parent=99 // pred_check
          %p1142 = pneg %p561
        $region174: #{tpu_custom_call.1} parent=99 // pred_check_branch
          %1144 = sbr.rel (%p1142) target = $region176
        $region175: #{tpu_custom_call.1} parent=99 // pred_region
          %1145 = dma.done [#allocation31], 512
        $region176: #{tpu_custom_call.1} parent=99 // pred_fallthru
          _
        // Predicated region
        $region177: #{tpu_custom_call.1} parent=99 // pred_check
          %p1146 = pneg %p582
        $region178: #{tpu_custom_call.1} parent=99 // pred_check_branch
          %1148 = sbr.rel (%p1146) target = $region180
        $region179: #{tpu_custom_call.1} parent=99 // pred_region
          %1149 = dma.done [#allocation34], 16
        $region180: #{tpu_custom_call.1} parent=99 // pred_fallthru
          _
        %s1150 = sand.u32 %s85, 1
        %s1151 = scalar_lea.sflag [#allocation4], %s1150
        %s1152 = sand.u32 %s85, 1
        %s1153 = smul.addr %s1152, 8
        %s1154 = scalar_lea.vmem [#allocation3], %s1153
        %p1155 = pneg %p98
        %p1156 = pneg %p95
        %s1157 = sand.u32 %s65, 1
        %s1158 = scalar_lea.sflag [#allocation7], %s1157
        %s1159 = sand.u32 %s111, 1
        %s1160 = smul.addr %s1159, 8
        %s1161 = scalar_lea.vmem [#allocation6], %s1160
        %p1162 = pneg %p124
        %p1163 = pneg %p121
        %s1164 = sand.u32 %s65, 1
        %s1165 = scalar_lea.sflag [#allocation7], %s1164
        %s1166 = sand.u32 %s137, 1
        %s1167 = smul.addr %s1166, 32
        %s1168 = scalar_lea.vmem [#allocation8], %s1167
        %p1169 = pneg %p150
        %p1170 = pneg %p147
        %s1171 = sand.u32 %s65, 1
        %s1172 = scalar_lea.sflag [#allocation10], %s1171
        %s1173 = sand.u32 %s163, 1
        %s1174 = scalar_lea.vmem [#allocation9], %s1173
        %p1175 = pneg %p176
        %p1176 = pneg %p173
        %s1177 = sand.u32 %s65, 1
        %s1178 = scalar_lea.sflag [#allocation10], %s1177
        %s1179 = sand.u32 %s189, 1
        %s1180 = smul.addr %s1179, 32
        %s1181 = scalar_lea.vmem [#allocation11], %s1180
        %p1182 = pneg %p202
        %p1183 = pneg %p199
        %s1184 = sand.u32 %s65, 1
        %s1185 = scalar_lea.sflag [#allocation13], %s1184
        %s1186 = sand.u32 %s215, 1
        %s1187 = scalar_lea.vmem [#allocation12], %s1186
        %p1188 = pneg %p228
        %p1189 = pneg %p225
        %s1190 = sand.u32 %s65, 1
        %s1191 = scalar_lea.sflag [#allocation13], %s1190
        %s1192 = sand.u32 %s241, 1
        %s1193 = smul.addr %s1192, 32
        %s1194 = scalar_lea.vmem [#allocation14], %s1193
        %p1195 = pneg %p254
        %p1196 = pneg %p251
        %s1197 = sand.u32 %s65, 1
        %s1198 = scalar_lea.sflag [#allocation16], %s1197
        %s1199 = sand.u32 %s267, 1
        %s1200 = scalar_lea.vmem [#allocation15], %s1199
        %p1201 = pneg %p280
        %p1202 = pneg %p277
        %s1203 = sand.u32 %s65, 1
        %s1204 = scalar_lea.sflag [#allocation16], %s1203
        %s1205 = sand.u32 %s293, 1
        %s1206 = smul.addr %s1205, 32
        %s1207 = scalar_lea.vmem [#allocation17], %s1206
        %p1208 = pneg %p306
        %p1209 = pneg %p303
        %s1210 = sand.u32 %s65, 1
        %s1211 = scalar_lea.sflag [#allocation19], %s1210
        %s1212 = sand.u32 %s319, 1
        %s1213 = scalar_lea.vmem [#allocation18], %s1212
        %p1214 = pneg %p332
        %p1215 = pneg %p329
        %s1216 = sand.u32 %s65, 1
        %s1217 = scalar_lea.sflag [#allocation19], %s1216
        %s1218 = sand.u32 %s345, 1
        %s1219 = scalar_lea.vmem [#allocation20], %s1218
        %p1220 = pneg %p358
        %p1221 = pneg %p355
        %s1222 = sand.u32 %s65, 1
        %s1223 = scalar_lea.sflag [#allocation22], %s1222
        %s1224 = sand.u32 %s371, 1
        %s1225 = scalar_lea.vmem [#allocation21], %s1224
        %p1226 = pneg %p384
        %p1227 = pneg %p381
        %s1228 = sand.u32 %s65, 1
        %s1229 = scalar_lea.sflag [#allocation22], %s1228
        %s1230 = sand.u32 %s397, 1
        %s1231 = smul.addr %s1230, 32
        %s1232 = scalar_lea.vmem [#allocation23], %s1231
        %p1233 = pneg %p410
        %p1234 = pneg %p407
        %s1235 = sand.u32 %s65, 1
        %s1236 = scalar_lea.sflag [#allocation25], %s1235
        %s1237 = sand.u32 %s423, 1
        %s1238 = scalar_lea.vmem [#allocation24], %s1237
        %p1239 = pneg %p436
        %p1240 = pneg %p433
        %s1241 = sand.u32 %s65, 1
        %s1242 = scalar_lea.sflag [#allocation25], %s1241
        %s1243 = sand.u32 %s449, 1
        %s1244 = smul.addr %s1243, 64
        %s1245 = scalar_lea.vmem [#allocation26], %s1244
        %p1246 = pneg %p462
        %p1247 = pneg %p459
        %s1248 = sand.u32 %s65, 1
        %s1249 = scalar_lea.sflag [#allocation28], %s1248
        %s1250 = sand.u32 %s475, 1
        %s1251 = scalar_lea.vmem [#allocation27], %s1250
        %p1252 = pneg %p488
        %p1253 = pneg %p485
        %s1254 = sand.u32 %s65, 1
        %s1255 = scalar_lea.sflag [#allocation28], %s1254
        %s1256 = sand.u32 %s501, 1
        %s1257 = scalar_lea.vmem [#allocation29], %s1256
        %p1258 = pneg %p514
        %p1259 = pneg %p511
        %s1260 = sand.u32 %s65, 1
        %s1261 = scalar_lea.sflag [#allocation31], %s1260
        %s1262 = sand.u32 %s527, 1
        %s1263 = scalar_lea.vmem [#allocation30], %s1262
        %p1264 = pneg %p540
        %p1265 = pneg %p537
        %p1266 = pneg %p561
        %p1267 = pneg %p558
        %p1268 = pneg %p582
        %p1269 = pneg %p579
        %p1270 = pneg %p608
        %p1271 = pneg %p605
        %s1272 = sand.u32 %s595, 1
        %s1273 = scalar_lea.sflag [#allocation5], %s1272
        %s1274 = sand.u32 %s595, 1
        %s1275 = smul.addr %s1274, 8
        %s1276 = scalar_lea.vmem [#allocation35], %s1275
        %p1277 = scmp.eq.s32.totalorder %s70, 0
        // Predicated region
        $region181: #{tpu_custom_call.1} parent=99 // pred_check
          %p1278 = pneg %p1277
        $region182: #{tpu_custom_call.1} parent=99 // pred_check_branch
          %1280 = sbr.rel (%p1278) target = $region184
        $region183: #{tpu_custom_call.1} parent=99 // pred_region
          %v1281 = vld [vmem:[%s994] sm:$0xff]
          %vm1282 = vcmask 261120
          %1283 = vst.msk [vmem:[#allocation2] sm:$0xff] %vm1282, %v1281
        $region184: #{tpu_custom_call.1} parent=99 // pred_fallthru
          _
        %v1284 = vld [vmem:[#allocation2] sm:$0xff]
        %v1285 = vld [vmem:[%s1003] sm:$0xff]
        %v1286 = vld [vmem:[%s1012] sm:$0xff]
        %v1287 = vld [vmem:[%s1012 + $0x8] sm:$0xff]
        %v1288 = vld [vmem:[%s1012 + $0x10] sm:$0xff]
        %v1289 = vld [vmem:[%s1012 + $0x18] sm:$0xff]
        %v1290 = vld [vmem:[%s1020] sm:$0x1]
        %v1292 = vlaneseq
        %v1293 = vshrl.u32 %v1292, 7
        %v1294 = vsub.s32 0, %v1293
        %v1295 = vrot.slane %v1290, %v1294
        %vm1297 = vcmask 261120
        %v1299 = vsel %vm1297, %v1284, 0
        %1301 = vmatprep.subr.mxu0 0.0
        %1302 = vmatpush1.msra.mxu0 %v1286
        %1303 = vmatprep.subr.mxu0 0.0
        %1304 = vmatpush1.msra.mxu0 %v1287
        %1305 = vmatprep.subr.mxu0 0.0
        %1306 = vmatpush1.msra.mxu0 %v1288
        %1307 = vmatprep.subr.mxu0 0.0
        %1308 = vmatpush1.msra.mxu0 %v1289
        %1309 = vmatprep.subr.mxu0 0.0
        %1310 = vmatpush1.msra.mxu0 0.0
        %1311 = vmatprep.subr.mxu0 0.0
        %1312 = vmatpush1.msra.mxu0 0.0
        %1313 = vmatprep.subr.mxu0 0.0
        %1314 = vmatpush1.msra.mxu0 0.0
        %1315 = vmatprep.subr.mxu0 0.0
        %1316 = vmatpush1.msra.mxu0 0.0
        %1317 = vmatprep.subr.mxu0 0.0
        %1318 = vmatpush1.msra.mxu0 0.0
        %1319 = vmatprep.subr.mxu0 0.0
        %1320 = vmatpush1.msra.mxu0 0.0
        %1321 = vmatprep.subr.mxu0 0.0
        %1322 = vmatpush1.msra.mxu0 0.0
        %1323 = vmatprep.subr.mxu0 0.0
        %1324 = vmatpush1.msra.mxu0 0.0
        %1325 = vmatprep.subr.mxu0 0.0
        %1326 = vmatpush1.msra.mxu0 0.0
        %1327 = vmatprep.subr.mxu0 0.0
        %1328 = vmatpush1.msra.mxu0 0.0
        %1329 = vmatprep.subr.mxu0 0.0
        %1330 = vmatpush1.msra.mxu0 0.0
        %1331 = vmatprep.subr.mxu0 0.0
        %1332 = vmatpush1.msra.mxu0 0.0
        %1333 = vmatprep.subr.mxu0 0.0
        %1334 = vmatpush1.msra.mxu0 0.0
        %1335 = vmatprep.subr.mxu0 0.0
        %1336 = vmatpush1.msra.mxu0 0.0
        %1337 = vmatprep.subr.mxu0 0.0
        %1338 = vmatpush1.msra.mxu0 0.0
        %1339 = vmatprep.subr.mxu0 0.0
        %1340 = vmatpush1.msra.mxu0 0.0
        %1341 = vmatprep.subr.mxu0 0.0
        %1342 = vmatpush1.msra.mxu0 0.0
        %1343 = vmatprep.subr.mxu0 0.0
        %1344 = vmatpush1.msra.mxu0 0.0
        %1345 = vmatprep.subr.mxu0 0.0
        %1346 = vmatpush1.msra.mxu0 0.0
        %1347 = vmatprep.subr.mxu0 0.0
        %1348 = vmatpush1.msra.mxu0 0.0
        %1349 = vmatprep.subr.mxu0 0.0
        %1350 = vmatpush1.msra.mxu0 0.0
        %1351 = vmatprep.subr.mxu0 0.0
        %1352 = vmatpush1.msra.mxu0 0.0
        %1353 = vmatprep.subr.mxu0 0.0
        %1354 = vmatpush1.msra.mxu0 0.0
        %1355 = vmatprep.subr.mxu0 0.0
        %1356 = vmatpush1.msra.mxu0 0.0
        %1357 = vmatprep.subr.mxu0 0.0
        %1358 = vmatpush1.msra.mxu0 0.0
        %1359 = vmatprep.subr.mxu0 0.0
        %1360 = vmatpush1.msra.mxu0 0.0
        %1361 = vmatprep.subr.mxu0 0.0
        %1362 = vmatpush1.msra.mxu0 0.0
        %1363 = vmatprep.subr.mxu0 0.0
        %1364 = vmatpush1.msra.mxu0 0.0
        %1365 = vmatprep.mubr.f32.mxu0 0.0
        %1366 = vmatmul.mubr.f32.gmra.mrb[0].mxu0 %v1299
        %v1367 = vpop.f32.mrb[0].mxu0
        %v1368 = vadd.f32 %v1295, %v1367
        %v1369 = vpop.f32.mrb[0].mxu0
        %1370 = vdwg.mxu0
        %v1371 = vld [vmem:[%s1029] sm:$0xff]
        %v1372 = vld [vmem:[%s1029 + $0x8] sm:$0xff]
        %v1373 = vld [vmem:[%s1029 + $0x10] sm:$0xff]
        %v1374 = vld [vmem:[%s1029 + $0x18] sm:$0xff]
        %v1375 = vld [vmem:[%s1037] sm:$0x1]
        %v1377 = vlaneseq
        %v1378 = vshrl.u32 %v1377, 7
        %v1379 = vsub.s32 0, %v1378
        %v1380 = vrot.slane %v1375, %v1379
        %v1383 = vsel %vm1297, %v1285, 0
        %1385 = vmatprep.subr.mxu0 0.0
        %1386 = vmatpush1.msra.mxu0 %v1371
        %1387 = vmatprep.subr.mxu0 0.0
        %1388 = vmatpush1.msra.mxu0 %v1372
        %1389 = vmatprep.subr.mxu0 0.0
        %1390 = vmatpush1.msra.mxu0 %v1373
        %1391 = vmatprep.subr.mxu0 0.0
        %1392 = vmatpush1.msra.mxu0 %v1374
        %1393 = vmatprep.subr.mxu0 0.0
        %1394 = vmatpush1.msra.mxu0 0.0
        %1395 = vmatprep.subr.mxu0 0.0
        %1396 = vmatpush1.msra.mxu0 0.0
        %1397 = vmatprep.subr.mxu0 0.0
        %1398 = vmatpush1.msra.mxu0 0.0
        %1399 = vmatprep.subr.mxu0 0.0
        %1400 = vmatpush1.msra.mxu0 0.0
        %1401 = vmatprep.subr.mxu0 0.0
        %1402 = vmatpush1.msra.mxu0 0.0
        %1403 = vmatprep.subr.mxu0 0.0
        %1404 = vmatpush1.msra.mxu0 0.0
        %1405 = vmatprep.subr.mxu0 0.0
        %1406 = vmatpush1.msra.mxu0 0.0
        %1407 = vmatprep.subr.mxu0 0.0
        %1408 = vmatpush1.msra.mxu0 0.0
        %1409 = vmatprep.subr.mxu0 0.0
        %1410 = vmatpush1.msra.mxu0 0.0
        %1411 = vmatprep.subr.mxu0 0.0
        %1412 = vmatpush1.msra.mxu0 0.0
        %1413 = vmatprep.subr.mxu0 0.0
        %1414 = vmatpush1.msra.mxu0 0.0
        %1415 = vmatprep.subr.mxu0 0.0
        %1416 = vmatpush1.msra.mxu0 0.0
        %1417 = vmatprep.subr.mxu0 0.0
        %1418 = vmatpush1.msra.mxu0 0.0
        %1419 = vmatprep.subr.mxu0 0.0
        %1420 = vmatpush1.msra.mxu0 0.0
        %1421 = vmatprep.subr.mxu0 0.0
        %1422 = vmatpush1.msra.mxu0 0.0
        %1423 = vmatprep.subr.mxu0 0.0
        %1424 = vmatpush1.msra.mxu0 0.0
        %1425 = vmatprep.subr.mxu0 0.0
        %1426 = vmatpush1.msra.mxu0 0.0
        %1427 = vmatprep.subr.mxu0 0.0
        %1428 = vmatpush1.msra.mxu0 0.0
        %1429 = vmatprep.subr.mxu0 0.0
        %1430 = vmatpush1.msra.mxu0 0.0
        %1431 = vmatprep.subr.mxu0 0.0
        %1432 = vmatpush1.msra.mxu0 0.0
        %1433 = vmatprep.subr.mxu0 0.0
        %1434 = vmatpush1.msra.mxu0 0.0
        %1435 = vmatprep.subr.mxu0 0.0
        %1436 = vmatpush1.msra.mxu0 0.0
        %1437 = vmatprep.subr.mxu0 0.0
        %1438 = vmatpush1.msra.mxu0 0.0
        %1439 = vmatprep.subr.mxu0 0.0
        %1440 = vmatpush1.msra.mxu0 0.0
        %1441 = vmatprep.subr.mxu0 0.0
        %1442 = vmatpush1.msra.mxu0 0.0
        %1443 = vmatprep.subr.mxu0 0.0
        %1444 = vmatpush1.msra.mxu0 0.0
        %1445 = vmatprep.subr.mxu0 0.0
        %1446 = vmatpush1.msra.mxu0 0.0
        %1447 = vmatprep.subr.mxu0 0.0
        %1448 = vmatpush1.msra.mxu0 0.0
        %1449 = vmatprep.mubr.f32.mxu0 0.0
        %1450 = vmatmul.mubr.f32.gmra.mrb[0].mxu0 %v1383
        %v1451 = vpop.f32.mrb[0].mxu0
        %v1452 = vadd.f32 %v1380, %v1451
        %v1453 = vpop.f32.mrb[0].mxu0
        %1454 = vdwg.mxu0
        %v1455 = vld [vmem:[%s1046] sm:$0xff]
        %v1456 = vld [vmem:[%s1046 + $0x8] sm:$0xff]
        %v1457 = vld [vmem:[%s1046 + $0x10] sm:$0xff]
        %v1458 = vld [vmem:[%s1046 + $0x18] sm:$0xff]
        %v1459 = vld [vmem:[%s1054] sm:$0x1]
        %v1461 = vlaneseq
        %v1462 = vshrl.u32 %v1461, 7
        %v1463 = vsub.s32 0, %v1462
        %v1464 = vrot.slane %v1459, %v1463
        %1466 = vmatprep.subr.mxu0 0.0
        %1467 = vmatpush1.msra.mxu0 %v1455
        %1468 = vmatprep.subr.mxu0 0.0
        %1469 = vmatpush1.msra.mxu0 %v1456
        %1470 = vmatprep.subr.mxu0 0.0
        %1471 = vmatpush1.msra.mxu0 %v1457
        %1472 = vmatprep.subr.mxu0 0.0
        %1473 = vmatpush1.msra.mxu0 %v1458
        %1474 = vmatprep.subr.mxu0 0.0
        %1475 = vmatpush1.msra.mxu0 0.0
        %1476 = vmatprep.subr.mxu0 0.0
        %1477 = vmatpush1.msra.mxu0 0.0
        %1478 = vmatprep.subr.mxu0 0.0
        %1479 = vmatpush1.msra.mxu0 0.0
        %1480 = vmatprep.subr.mxu0 0.0
        %1481 = vmatpush1.msra.mxu0 0.0
        %1482 = vmatprep.subr.mxu0 0.0
        %1483 = vmatpush1.msra.mxu0 0.0
        %1484 = vmatprep.subr.mxu0 0.0
        %1485 = vmatpush1.msra.mxu0 0.0
        %1486 = vmatprep.subr.mxu0 0.0
        %1487 = vmatpush1.msra.mxu0 0.0
        %1488 = vmatprep.subr.mxu0 0.0
        %1489 = vmatpush1.msra.mxu0 0.0
        %1490 = vmatprep.subr.mxu0 0.0
        %1491 = vmatpush1.msra.mxu0 0.0
        %1492 = vmatprep.subr.mxu0 0.0
        %1493 = vmatpush1.msra.mxu0 0.0
        %1494 = vmatprep.subr.mxu0 0.0
        %1495 = vmatpush1.msra.mxu0 0.0
        %1496 = vmatprep.subr.mxu0 0.0
        %1497 = vmatpush1.msra.mxu0 0.0
        %1498 = vmatprep.subr.mxu0 0.0
        %1499 = vmatpush1.msra.mxu0 0.0
        %1500 = vmatprep.subr.mxu0 0.0
        %1501 = vmatpush1.msra.mxu0 0.0
        %1502 = vmatprep.subr.mxu0 0.0
        %1503 = vmatpush1.msra.mxu0 0.0
        %1504 = vmatprep.subr.mxu0 0.0
        %1505 = vmatpush1.msra.mxu0 0.0
        %1506 = vmatprep.subr.mxu0 0.0
        %1507 = vmatpush1.msra.mxu0 0.0
        %1508 = vmatprep.subr.mxu0 0.0
        %1509 = vmatpush1.msra.mxu0 0.0
        %1510 = vmatprep.subr.mxu0 0.0
        %1511 = vmatpush1.msra.mxu0 0.0
        %1512 = vmatprep.subr.mxu0 0.0
        %1513 = vmatpush1.msra.mxu0 0.0
        %1514 = vmatprep.subr.mxu0 0.0
        %1515 = vmatpush1.msra.mxu0 0.0
        %1516 = vmatprep.subr.mxu0 0.0
        %1517 = vmatpush1.msra.mxu0 0.0
        %1518 = vmatprep.subr.mxu0 0.0
        %1519 = vmatpush1.msra.mxu0 0.0
        %1520 = vmatprep.subr.mxu0 0.0
        %1521 = vmatpush1.msra.mxu0 0.0
        %1522 = vmatprep.subr.mxu0 0.0
        %1523 = vmatpush1.msra.mxu0 0.0
        %1524 = vmatprep.subr.mxu0 0.0
        %1525 = vmatpush1.msra.mxu0 0.0
        %1526 = vmatprep.subr.mxu0 0.0
        %1527 = vmatpush1.msra.mxu0 0.0
        %1528 = vmatprep.subr.mxu0 0.0
        %1529 = vmatpush1.msra.mxu0 0.0
        %1530 = vmatprep.mubr.f32.mxu0 0.0
        %1531 = vmatmul.mubr.f32.gmra.mrb[0].mxu0 %v1383
        %v1532 = vpop.f32.mrb[0].mxu0
        %v1533 = vadd.f32 %v1464, %v1532
        %v1534 = vpop.f32.mrb[0].mxu0
        %1535 = vdwg.mxu0
        %vm1536 = vcmask 64512
        %v1538 = vsel %vm1536, %v1368, 0
        %v1541 = vsel %vm1536, %v1452, 0
        %1543 = vmatprep.subr.mxu0 0.0
        %1544 = vmatpush1.xpose.msra.mxu0 %v1541
        %1545 = vmatprep.subr.mxu0 0.0
        %1546 = vmatpush1.xpose.msra.mxu0 0.0
        %1547 = vmatprep.subr.mxu0 0.0
        %1548 = vmatpush1.xpose.msra.mxu0 0.0
        %1549 = vmatprep.subr.mxu0 0.0
        %1550 = vmatpush1.xpose.msra.mxu0 0.0
        %1551 = vmatprep.subr.mxu0 0.0
        %1552 = vmatpush1.xpose.msra.mxu0 0.0
        %1553 = vmatprep.subr.mxu0 0.0
        %1554 = vmatpush1.xpose.msra.mxu0 0.0
        %1555 = vmatprep.subr.mxu0 0.0
        %1556 = vmatpush1.xpose.msra.mxu0 0.0
        %1557 = vmatprep.subr.mxu0 0.0
        %1558 = vmatpush1.xpose.msra.mxu0 0.0
        %1559 = vmatprep.subr.mxu0 0.0
        %1560 = vmatpush1.xpose.msra.mxu0 0.0
        %1561 = vmatprep.subr.mxu0 0.0
        %1562 = vmatpush1.xpose.msra.mxu0 0.0
        %1563 = vmatprep.subr.mxu0 0.0
        %1564 = vmatpush1.xpose.msra.mxu0 0.0
        %1565 = vmatprep.subr.mxu0 0.0
        %1566 = vmatpush1.xpose.msra.mxu0 0.0
        %1567 = vmatprep.subr.mxu0 0.0
        %1568 = vmatpush1.xpose.msra.mxu0 0.0
        %1569 = vmatprep.subr.mxu0 0.0
        %1570 = vmatpush1.xpose.msra.mxu0 0.0
        %1571 = vmatprep.subr.mxu0 0.0
        %1572 = vmatpush1.xpose.msra.mxu0 0.0
        %1573 = vmatprep.subr.mxu0 0.0
        %1574 = vmatpush1.xpose.msra.mxu0 0.0
        %1575 = vmatprep.subr.mxu0 0.0
        %1576 = vmatpush1.xpose.msra.mxu0 0.0
        %1577 = vmatprep.subr.mxu0 0.0
        %1578 = vmatpush1.xpose.msra.mxu0 0.0
        %1579 = vmatprep.subr.mxu0 0.0
        %1580 = vmatpush1.xpose.msra.mxu0 0.0
        %1581 = vmatprep.subr.mxu0 0.0
        %1582 = vmatpush1.xpose.msra.mxu0 0.0
        %1583 = vmatprep.subr.mxu0 0.0
        %1584 = vmatpush1.xpose.msra.mxu0 0.0
        %1585 = vmatprep.subr.mxu0 0.0
        %1586 = vmatpush1.xpose.msra.mxu0 0.0
        %1587 = vmatprep.subr.mxu0 0.0
        %1588 = vmatpush1.xpose.msra.mxu0 0.0
        %1589 = vmatprep.subr.mxu0 0.0
        %1590 = vmatpush1.xpose.msra.mxu0 0.0
        %1591 = vmatprep.subr.mxu0 0.0
        %1592 = vmatpush1.xpose.msra.mxu0 0.0
        %1593 = vmatprep.subr.mxu0 0.0
        %1594 = vmatpush1.xpose.msra.mxu0 0.0
        %1595 = vmatprep.subr.mxu0 0.0
        %1596 = vmatpush1.xpose.msra.mxu0 0.0
        %1597 = vmatprep.subr.mxu0 0.0
        %1598 = vmatpush1.xpose.msra.mxu0 0.0
        %1599 = vmatprep.subr.mxu0 0.0
        %1600 = vmatpush1.xpose.msra.mxu0 0.0
        %1601 = vmatprep.subr.mxu0 0.0
        %1602 = vmatpush1.xpose.msra.mxu0 0.0
        %1603 = vmatprep.subr.mxu0 0.0
        %1604 = vmatpush1.xpose.msra.mxu0 0.0
        %1605 = vmatprep.subr.mxu0 0.0
        %1606 = vmatpush1.xpose.msra.mxu0 0.0
        %1607 = vmatprep.mubr.f32.mxu0 0.0
        %1608 = vmatmul.mubr.f32.gmra.mrb[0].mxu0 %v1538
        %v1609 = vpop.f32.mrb[0].mxu0
        %v1610 = vadd.f32 0.0, %v1609
        %v1611 = vpop.f32.mrb[0].mxu0
        %1612 = vdwg.mxu0
        %v1613 = vmul.f32 %v1610, 0.35355338
        %v1614 = vsel %vm1536, %v1613, -inf
        %1615 = vmax.xlane.f32.xlu0 %v1614
        %v1616 = vpop.xlane.xlu0 %1615
        %v1617 = vsub.f32 %v1613, %v1616
        %v1618 = vmul.f32 %v1617, 1.442695
        %v1619 = vpow.pop %v1618
        %v1620 = vsel %vm1536, %v1619, 0.0
        %1621 = vadd.xlane.f32.xlu0 %v1620
        %v1622 = vpop.xlane.xlu0 %1621
        %v1623 = vrcp.pop %v1622
        %v1624 = vmul.f32 %v1619, %v1623
        %v1626 = vsel %vm1536, %v1624, 0
        %1628 = vmatprep.subr.mxu0 0.0
        %1629 = vmatpush1.msra.mxu0 %v1533
        %1630 = vmatprep.subr.mxu0 0.0
        %1631 = vmatpush1.msra.mxu0 0.0
        %1632 = vmatprep.subr.mxu0 0.0
        %1633 = vmatpush1.msra.mxu0 0.0
        %1634 = vmatprep.subr.mxu0 0.0
        %1635 = vmatpush1.msra.mxu0 0.0
        %1636 = vmatprep.subr.mxu0 0.0
        %1637 = vmatpush1.msra.mxu0 0.0
        %1638 = vmatprep.subr.mxu0 0.0
        %1639 = vmatpush1.msra.mxu0 0.0
        %1640 = vmatprep.subr.mxu0 0.0
        %1641 = vmatpush1.msra.mxu0 0.0
        %1642 = vmatprep.subr.mxu0 0.0
        %1643 = vmatpush1.msra.mxu0 0.0
        %1644 = vmatprep.subr.mxu0 0.0
        %1645 = vmatpush1.msra.mxu0 0.0
        %1646 = vmatprep.subr.mxu0 0.0
        %1647 = vmatpush1.msra.mxu0 0.0
        %1648 = vmatprep.subr.mxu0 0.0
        %1649 = vmatpush1.msra.mxu0 0.0
        %1650 = vmatprep.subr.mxu0 0.0
        %1651 = vmatpush1.msra.mxu0 0.0
        %1652 = vmatprep.subr.mxu0 0.0
        %1653 = vmatpush1.msra.mxu0 0.0
        %1654 = vmatprep.subr.mxu0 0.0
        %1655 = vmatpush1.msra.mxu0 0.0
        %1656 = vmatprep.subr.mxu0 0.0
        %1657 = vmatpush1.msra.mxu0 0.0
        %1658 = vmatprep.subr.mxu0 0.0
        %1659 = vmatpush1.msra.mxu0 0.0
        %1660 = vmatprep.subr.mxu0 0.0
        %1661 = vmatpush1.msra.mxu0 0.0
        %1662 = vmatprep.subr.mxu0 0.0
        %1663 = vmatpush1.msra.mxu0 0.0
        %1664 = vmatprep.subr.mxu0 0.0
        %1665 = vmatpush1.msra.mxu0 0.0
        %1666 = vmatprep.subr.mxu0 0.0
        %1667 = vmatpush1.msra.mxu0 0.0
        %1668 = vmatprep.subr.mxu0 0.0
        %1669 = vmatpush1.msra.mxu0 0.0
        %1670 = vmatprep.subr.mxu0 0.0
        %1671 = vmatpush1.msra.mxu0 0.0
        %1672 = vmatprep.subr.mxu0 0.0
        %1673 = vmatpush1.msra.mxu0 0.0
        %1674 = vmatprep.subr.mxu0 0.0
        %1675 = vmatpush1.msra.mxu0 0.0
        %1676 = vmatprep.subr.mxu0 0.0
        %1677 = vmatpush1.msra.mxu0 0.0
        %1678 = vmatprep.subr.mxu0 0.0
        %1679 = vmatpush1.msra.mxu0 0.0
        %1680 = vmatprep.subr.mxu0 0.0
        %1681 = vmatpush1.msra.mxu0 0.0
        %1682 = vmatprep.subr.mxu0 0.0
        %1683 = vmatpush1.msra.mxu0 0.0
        %1684 = vmatprep.subr.mxu0 0.0
        %1685 = vmatpush1.msra.mxu0 0.0
        %1686 = vmatprep.subr.mxu0 0.0
        %1687 = vmatpush1.msra.mxu0 0.0
        %1688 = vmatprep.subr.mxu0 0.0
        %1689 = vmatpush1.msra.mxu0 0.0
        %1690 = vmatprep.subr.mxu0 0.0
        %1691 = vmatpush1.msra.mxu0 0.0
        %1692 = vmatprep.mubr.f32.mxu0 0.0
        %1693 = vmatmul.mubr.f32.gmra.mrb[0].mxu0 %v1626
        %v1694 = vpop.f32.mrb[0].mxu0
        %v1695 = vadd.f32 0.0, %v1694
        %v1696 = vpop.f32.mrb[0].mxu0
        %1697 = vdwg.mxu0
        %1698 = vrot.lane.b32.xlu0 %v1368, 120
        %v1699 = vpop.permute.xlu0 %1698
        %1700 = vrot.lane.b32.xlu0 %v1452, 120
        %v1701 = vpop.permute.xlu0 %1700
        %v1702 = vsel %vm1536, %v1699, 0
        %v1704 = vsel %vm1536, %v1701, 0
        %1706 = vmatprep.subr.mxu0 0.0
        %1707 = vmatpush1.xpose.msra.mxu0 %v1704
        %1708 = vmatprep.subr.mxu0 0.0
        %1709 = vmatpush1.xpose.msra.mxu0 0.0
        %1710 = vmatprep.subr.mxu0 0.0
        %1711 = vmatpush1.xpose.msra.mxu0 0.0
        %1712 = vmatprep.subr.mxu0 0.0
        %1713 = vmatpush1.xpose.msra.mxu0 0.0
        %1714 = vmatprep.subr.mxu0 0.0
        %1715 = vmatpush1.xpose.msra.mxu0 0.0
        %1716 = vmatprep.subr.mxu0 0.0
        %1717 = vmatpush1.xpose.msra.mxu0 0.0
        %1718 = vmatprep.subr.mxu0 0.0
        %1719 = vmatpush1.xpose.msra.mxu0 0.0
        %1720 = vmatprep.subr.mxu0 0.0
        %1721 = vmatpush1.xpose.msra.mxu0 0.0
        %1722 = vmatprep.subr.mxu0 0.0
        %1723 = vmatpush1.xpose.msra.mxu0 0.0
        %1724 = vmatprep.subr.mxu0 0.0
        %1725 = vmatpush1.xpose.msra.mxu0 0.0
        %1726 = vmatprep.subr.mxu0 0.0
        %1727 = vmatpush1.xpose.msra.mxu0 0.0
        %1728 = vmatprep.subr.mxu0 0.0
        %1729 = vmatpush1.xpose.msra.mxu0 0.0
        %1730 = vmatprep.subr.mxu0 0.0
        %1731 = vmatpush1.xpose.msra.mxu0 0.0
        %1732 = vmatprep.subr.mxu0 0.0
        %1733 = vmatpush1.xpose.msra.mxu0 0.0
        %1734 = vmatprep.subr.mxu0 0.0
        %1735 = vmatpush1.xpose.msra.mxu0 0.0
        %1736 = vmatprep.subr.mxu0 0.0
        %1737 = vmatpush1.xpose.msra.mxu0 0.0
        %1738 = vmatprep.subr.mxu0 0.0
        %1739 = vmatpush1.xpose.msra.mxu0 0.0
        %1740 = vmatprep.subr.mxu0 0.0
        %1741 = vmatpush1.xpose.msra.mxu0 0.0
        %1742 = vmatprep.subr.mxu0 0.0
        %1743 = vmatpush1.xpose.msra.mxu0 0.0
        %1744 = vmatprep.subr.mxu0 0.0
        %1745 = vmatpush1.xpose.msra.mxu0 0.0
        %1746 = vmatprep.subr.mxu0 0.0
        %1747 = vmatpush1.xpose.msra.mxu0 0.0
        %1748 = vmatprep.subr.mxu0 0.0
        %1749 = vmatpush1.xpose.msra.mxu0 0.0
        %1750 = vmatprep.subr.mxu0 0.0
        %1751 = vmatpush1.xpose.msra.mxu0 0.0
        %1752 = vmatprep.subr.mxu0 0.0
        %1753 = vmatpush1.xpose.msra.mxu0 0.0
        %1754 = vmatprep.subr.mxu0 0.0
        %1755 = vmatpush1.xpose.msra.mxu0 0.0
        %1756 = vmatprep.subr.mxu0 0.0
        %1757 = vmatpush1.xpose.msra.mxu0 0.0
        %1758 = vmatprep.subr.mxu0 0.0
        %1759 = vmatpush1.xpose.msra.mxu0 0.0
        %1760 = vmatprep.subr.mxu0 0.0
        %1761 = vmatpush1.xpose.msra.mxu0 0.0
        %1762 = vmatprep.subr.mxu0 0.0
        %1763 = vmatpush1.xpose.msra.mxu0 0.0
        %1764 = vmatprep.subr.mxu0 0.0
        %1765 = vmatpush1.xpose.msra.mxu0 0.0
        %1766 = vmatprep.subr.mxu0 0.0
        %1767 = vmatpush1.xpose.msra.mxu0 0.0
        %1768 = vmatprep.subr.mxu0 0.0
        %1769 = vmatpush1.xpose.msra.mxu0 0.0
        %1770 = vmatprep.mubr.f32.mxu0 0.0
        %1771 = vmatmul.mubr.f32.gmra.mrb[0].mxu0 %v1702
        %v1772 = vpop.f32.mrb[0].mxu0
        %v1773 = vadd.f32 0.0, %v1772
        %v1774 = vpop.f32.mrb[0].mxu0
        %1775 = vdwg.mxu0
        %v1776 = vmul.f32 %v1773, 0.35355338
        %v1777 = vsel %vm1536, %v1776, -inf
        %1778 = vmax.xlane.f32.xlu0 %v1777
        %v1779 = vpop.xlane.xlu0 %1778
        %v1780 = vsub.f32 %v1776, %v1779
        %v1781 = vmul.f32 %v1780, 1.442695
        %v1782 = vpow.pop %v1781
        %v1783 = vsel %vm1536, %v1782, 0.0
        %1784 = vadd.xlane.f32.xlu0 %v1783
        %v1785 = vpop.xlane.xlu0 %1784
        %v1786 = vrcp.pop %v1785
        %v1787 = vmul.f32 %v1782, %v1786
        %1789 = vrot.lane.b32.xlu0 %v1533, 120
        %v1790 = vpop.permute.xlu0 %1789
        %v1793 = vsel %vm1536, %v1787, 0
        %1795 = vmatprep.subr.mxu0 0.0
        %1796 = vmatpush1.msra.mxu0 %v1790
        %1797 = vmatprep.subr.mxu0 0.0
        %1798 = vmatpush1.msra.mxu0 0.0
        %1799 = vmatprep.subr.mxu0 0.0
        %1800 = vmatpush1.msra.mxu0 0.0
        %1801 = vmatprep.subr.mxu0 0.0
        %1802 = vmatpush1.msra.mxu0 0.0
        %1803 = vmatprep.subr.mxu0 0.0
        %1804 = vmatpush1.msra.mxu0 0.0
        %1805 = vmatprep.subr.mxu0 0.0
        %1806 = vmatpush1.msra.mxu0 0.0
        %1807 = vmatprep.subr.mxu0 0.0
        %1808 = vmatpush1.msra.mxu0 0.0
        %1809 = vmatprep.subr.mxu0 0.0
        %1810 = vmatpush1.msra.mxu0 0.0
        %1811 = vmatprep.subr.mxu0 0.0
        %1812 = vmatpush1.msra.mxu0 0.0
        %1813 = vmatprep.subr.mxu0 0.0
        %1814 = vmatpush1.msra.mxu0 0.0
        %1815 = vmatprep.subr.mxu0 0.0
        %1816 = vmatpush1.msra.mxu0 0.0
        %1817 = vmatprep.subr.mxu0 0.0
        %1818 = vmatpush1.msra.mxu0 0.0
        %1819 = vmatprep.subr.mxu0 0.0
        %1820 = vmatpush1.msra.mxu0 0.0
        %1821 = vmatprep.subr.mxu0 0.0
        %1822 = vmatpush1.msra.mxu0 0.0
        %1823 = vmatprep.subr.mxu0 0.0
        %1824 = vmatpush1.msra.mxu0 0.0
        %1825 = vmatprep.subr.mxu0 0.0
        %1826 = vmatpush1.msra.mxu0 0.0
        %1827 = vmatprep.subr.mxu0 0.0
        %1828 = vmatpush1.msra.mxu0 0.0
        %1829 = vmatprep.subr.mxu0 0.0
        %1830 = vmatpush1.msra.mxu0 0.0
        %1831 = vmatprep.subr.mxu0 0.0
        %1832 = vmatpush1.msra.mxu0 0.0
        %1833 = vmatprep.subr.mxu0 0.0
        %1834 = vmatpush1.msra.mxu0 0.0
        %1835 = vmatprep.subr.mxu0 0.0
        %1836 = vmatpush1.msra.mxu0 0.0
        %1837 = vmatprep.subr.mxu0 0.0
        %1838 = vmatpush1.msra.mxu0 0.0
        %1839 = vmatprep.subr.mxu0 0.0
        %1840 = vmatpush1.msra.mxu0 0.0
        %1841 = vmatprep.subr.mxu0 0.0
        %1842 = vmatpush1.msra.mxu0 0.0
        %1843 = vmatprep.subr.mxu0 0.0
        %1844 = vmatpush1.msra.mxu0 0.0
        %1845 = vmatprep.subr.mxu0 0.0
        %1846 = vmatpush1.msra.mxu0 0.0
        %1847 = vmatprep.subr.mxu0 0.0
        %1848 = vmatpush1.msra.mxu0 0.0
        %1849 = vmatprep.subr.mxu0 0.0
        %1850 = vmatpush1.msra.mxu0 0.0
        %1851 = vmatprep.subr.mxu0 0.0
        %1852 = vmatpush1.msra.mxu0 0.0
        %1853 = vmatprep.subr.mxu0 0.0
        %1854 = vmatpush1.msra.mxu0 0.0
        %1855 = vmatprep.subr.mxu0 0.0
        %1856 = vmatpush1.msra.mxu0 0.0
        %1857 = vmatprep.subr.mxu0 0.0
        %1858 = vmatpush1.msra.mxu0 0.0
        %1859 = vmatprep.mubr.f32.mxu0 0.0
        %1860 = vmatmul.mubr.f32.gmra.mrb[0].mxu0 %v1793
        %v1861 = vpop.f32.mrb[0].mxu0
        %v1862 = vadd.f32 0.0, %v1861
        %v1863 = vpop.f32.mrb[0].mxu0
        %1864 = vdwg.mxu0
        %1865 = vrot.lane.b32.xlu0 %v1368, 112
        %v1866 = vpop.permute.xlu0 %1865
        %1867 = vrot.lane.b32.xlu0 %v1452, 112
        %v1868 = vpop.permute.xlu0 %1867
        %v1869 = vsel %vm1536, %v1866, 0
        %v1871 = vsel %vm1536, %v1868, 0
        %1873 = vmatprep.subr.mxu0 0.0
        %1874 = vmatpush1.xpose.msra.mxu0 %v1871
        %1875 = vmatprep.subr.mxu0 0.0
        %1876 = vmatpush1.xpose.msra.mxu0 0.0
        %1877 = vmatprep.subr.mxu0 0.0
        %1878 = vmatpush1.xpose.msra.mxu0 0.0
        %1879 = vmatprep.subr.mxu0 0.0
        %1880 = vmatpush1.xpose.msra.mxu0 0.0
        %1881 = vmatprep.subr.mxu0 0.0
        %1882 = vmatpush1.xpose.msra.mxu0 0.0
        %1883 = vmatprep.subr.mxu0 0.0
        %1884 = vmatpush1.xpose.msra.mxu0 0.0
        %1885 = vmatprep.subr.mxu0 0.0
        %1886 = vmatpush1.xpose.msra.mxu0 0.0
        %1887 = vmatprep.subr.mxu0 0.0
        %1888 = vmatpush1.xpose.msra.mxu0 0.0
        %1889 = vmatprep.subr.mxu0 0.0
        %1890 = vmatpush1.xpose.msra.mxu0 0.0
        %1891 = vmatprep.subr.mxu0 0.0
        %1892 = vmatpush1.xpose.msra.mxu0 0.0
        %1893 = vmatprep.subr.mxu0 0.0
        %1894 = vmatpush1.xpose.msra.mxu0 0.0
        %1895 = vmatprep.subr.mxu0 0.0
        %1896 = vmatpush1.xpose.msra.mxu0 0.0
        %1897 = vmatprep.subr.mxu0 0.0
        %1898 = vmatpush1.xpose.msra.mxu0 0.0
        %1899 = vmatprep.subr.mxu0 0.0
        %1900 = vmatpush1.xpose.msra.mxu0 0.0
        %1901 = vmatprep.subr.mxu0 0.0
        %1902 = vmatpush1.xpose.msra.mxu0 0.0
        %1903 = vmatprep.subr.mxu0 0.0
        %1904 = vmatpush1.xpose.msra.mxu0 0.0
        %1905 = vmatprep.subr.mxu0 0.0
        %1906 = vmatpush1.xpose.msra.mxu0 0.0
        %1907 = vmatprep.subr.mxu0 0.0
        %1908 = vmatpush1.xpose.msra.mxu0 0.0
        %1909 = vmatprep.subr.mxu0 0.0
        %1910 = vmatpush1.xpose.msra.mxu0 0.0
        %1911 = vmatprep.subr.mxu0 0.0
        %1912 = vmatpush1.xpose.msra.mxu0 0.0
        %1913 = vmatprep.subr.mxu0 0.0
        %1914 = vmatpush1.xpose.msra.mxu0 0.0
        %1915 = vmatprep.subr.mxu0 0.0
        %1916 = vmatpush1.xpose.msra.mxu0 0.0
        %1917 = vmatprep.subr.mxu0 0.0
        %1918 = vmatpush1.xpose.msra.mxu0 0.0
        %1919 = vmatprep.subr.mxu0 0.0
        %1920 = vmatpush1.xpose.msra.mxu0 0.0
        %1921 = vmatprep.subr.mxu0 0.0
        %1922 = vmatpush1.xpose.msra.mxu0 0.0
        %1923 = vmatprep.subr.mxu0 0.0
        %1924 = vmatpush1.xpose.msra.mxu0 0.0
        %1925 = vmatprep.subr.mxu0 0.0
        %1926 = vmatpush1.xpose.msra.mxu0 0.0
        %1927 = vmatprep.subr.mxu0 0.0
        %1928 = vmatpush1.xpose.msra.mxu0 0.0
        %1929 = vmatprep.subr.mxu0 0.0
        %1930 = vmatpush1.xpose.msra.mxu0 0.0
        %1931 = vmatprep.subr.mxu0 0.0
        %1932 = vmatpush1.xpose.msra.mxu0 0.0
        %1933 = vmatprep.subr.mxu0 0.0
        %1934 = vmatpush1.xpose.msra.mxu0 0.0
        %1935 = vmatprep.subr.mxu0 0.0
        %1936 = vmatpush1.xpose.msra.mxu0 0.0
        %1937 = vmatprep.mubr.f32.mxu0 0.0
        %1938 = vmatmul.mubr.f32.gmra.mrb[0].mxu0 %v1869
        %v1939 = vpop.f32.mrb[0].mxu0
        %v1940 = vadd.f32 0.0, %v1939
        %v1941 = vpop.f32.mrb[0].mxu0
        %1942 = vdwg.mxu0
        %v1943 = vmul.f32 %v1940, 0.35355338
        %v1944 = vsel %vm1536, %v1943, -inf
        %1945 = vmax.xlane.f32.xlu0 %v1944
        %v1946 = vpop.xlane.xlu0 %1945
        %v1947 = vsub.f32 %v1943, %v1946
        %v1948 = vmul.f32 %v1947, 1.442695
        %v1949 = vpow.pop %v1948
        %v1950 = vsel %vm1536, %v1949, 0.0
        %1951 = vadd.xlane.f32.xlu0 %v1950
        %v1952 = vpop.xlane.xlu0 %1951
        %v1953 = vrcp.pop %v1952
        %v1954 = vmul.f32 %v1949, %v1953
        %1955 = vrot.lane.b32.xlu0 %v1533, 112
        %v1956 = vpop.permute.xlu0 %1955
        %v1959 = vsel %vm1536, %v1954, 0
        %1961 = vmatprep.subr.mxu0 0.0
        %1962 = vmatpush1.msra.mxu0 %v1956
        %1963 = vmatprep.subr.mxu0 0.0
        %1964 = vmatpush1.msra.mxu0 0.0
        %1965 = vmatprep.subr.mxu0 0.0
        %1966 = vmatpush1.msra.mxu0 0.0
        %1967 = vmatprep.subr.mxu0 0.0
        %1968 = vmatpush1.msra.mxu0 0.0
        %1969 = vmatprep.subr.mxu0 0.0
        %1970 = vmatpush1.msra.mxu0 0.0
        %1971 = vmatprep.subr.mxu0 0.0
        %1972 = vmatpush1.msra.mxu0 0.0
        %1973 = vmatprep.subr.mxu0 0.0
        %1974 = vmatpush1.msra.mxu0 0.0
        %1975 = vmatprep.subr.mxu0 0.0
        %1976 = vmatpush1.msra.mxu0 0.0
        %1977 = vmatprep.subr.mxu0 0.0
        %1978 = vmatpush1.msra.mxu0 0.0
        %1979 = vmatprep.subr.mxu0 0.0
        %1980 = vmatpush1.msra.mxu0 0.0
        %1981 = vmatprep.subr.mxu0 0.0
        %1982 = vmatpush1.msra.mxu0 0.0
        %1983 = vmatprep.subr.mxu0 0.0
        %1984 = vmatpush1.msra.mxu0 0.0
        %1985 = vmatprep.subr.mxu0 0.0
        %1986 = vmatpush1.msra.mxu0 0.0
        %1987 = vmatprep.subr.mxu0 0.0
        %1988 = vmatpush1.msra.mxu0 0.0
        %1989 = vmatprep.subr.mxu0 0.0
        %1990 = vmatpush1.msra.mxu0 0.0
        %1991 = vmatprep.subr.mxu0 0.0
        %1992 = vmatpush1.msra.mxu0 0.0
        %1993 = vmatprep.subr.mxu0 0.0
        %1994 = vmatpush1.msra.mxu0 0.0
        %1995 = vmatprep.subr.mxu0 0.0
        %1996 = vmatpush1.msra.mxu0 0.0
        %1997 = vmatprep.subr.mxu0 0.0
        %1998 = vmatpush1.msra.mxu0 0.0
        %1999 = vmatprep.subr.mxu0 0.0
        %2000 = vmatpush1.msra.mxu0 0.0
        %2001 = vmatprep.subr.mxu0 0.0
        %2002 = vmatpush1.msra.mxu0 0.0
        %2003 = vmatprep.subr.mxu0 0.0
        %2004 = vmatpush1.msra.mxu0 0.0
        %2005 = vmatprep.subr.mxu0 0.0
        %2006 = vmatpush1.msra.mxu0 0.0
        %2007 = vmatprep.subr.mxu0 0.0
        %2008 = vmatpush1.msra.mxu0 0.0
        %2009 = vmatprep.subr.mxu0 0.0
        %2010 = vmatpush1.msra.mxu0 0.0
        %2011 = vmatprep.subr.mxu0 0.0
        %2012 = vmatpush1.msra.mxu0 0.0
        %2013 = vmatprep.subr.mxu0 0.0
        %2014 = vmatpush1.msra.mxu0 0.0
        %2015 = vmatprep.subr.mxu0 0.0
        %2016 = vmatpush1.msra.mxu0 0.0
        %2017 = vmatprep.subr.mxu0 0.0
        %2018 = vmatpush1.msra.mxu0 0.0
        %2019 = vmatprep.subr.mxu0 0.0
        %2020 = vmatpush1.msra.mxu0 0.0
        %2021 = vmatprep.subr.mxu0 0.0
        %2022 = vmatpush1.msra.mxu0 0.0
        %2023 = vmatprep.subr.mxu0 0.0
        %2024 = vmatpush1.msra.mxu0 0.0
        %2025 = vmatprep.mubr.f32.mxu0 0.0
        %2026 = vmatmul.mubr.f32.gmra.mrb[0].mxu0 %v1959
        %v2027 = vpop.f32.mrb[0].mxu0
        %v2028 = vadd.f32 0.0, %v2027
        %v2029 = vpop.f32.mrb[0].mxu0
        %2030 = vdwg.mxu0
        %2031 = vrot.lane.b32.xlu0 %v1368, 104
        %v2032 = vpop.permute.xlu0 %2031
        %2033 = vrot.lane.b32.xlu0 %v1452, 104
        %v2034 = vpop.permute.xlu0 %2033
        %v2035 = vsel %vm1536, %v2032, 0
        %v2037 = vsel %vm1536, %v2034, 0
        %2039 = vmatprep.subr.mxu0 0.0
        %2040 = vmatpush1.xpose.msra.mxu0 %v2037
        %2041 = vmatprep.subr.mxu0 0.0
        %2042 = vmatpush1.xpose.msra.mxu0 0.0
        %2043 = vmatprep.subr.mxu0 0.0
        %2044 = vmatpush1.xpose.msra.mxu0 0.0
        %2045 = vmatprep.subr.mxu0 0.0
        %2046 = vmatpush1.xpose.msra.mxu0 0.0
        %2047 = vmatprep.subr.mxu0 0.0
        %2048 = vmatpush1.xpose.msra.mxu0 0.0
        %2049 = vmatprep.subr.mxu0 0.0
        %2050 = vmatpush1.xpose.msra.mxu0 0.0
        %2051 = vmatprep.subr.mxu0 0.0
        %2052 = vmatpush1.xpose.msra.mxu0 0.0
        %2053 = vmatprep.subr.mxu0 0.0
        %2054 = vmatpush1.xpose.msra.mxu0 0.0
        %2055 = vmatprep.subr.mxu0 0.0
        %2056 = vmatpush1.xpose.msra.mxu0 0.0
        %2057 = vmatprep.subr.mxu0 0.0
        %2058 = vmatpush1.xpose.msra.mxu0 0.0
        %2059 = vmatprep.subr.mxu0 0.0
        %2060 = vmatpush1.xpose.msra.mxu0 0.0
        %2061 = vmatprep.subr.mxu0 0.0
        %2062 = vmatpush1.xpose.msra.mxu0 0.0
        %2063 = vmatprep.subr.mxu0 0.0
        %2064 = vmatpush1.xpose.msra.mxu0 0.0
        %2065 = vmatprep.subr.mxu0 0.0
        %2066 = vmatpush1.xpose.msra.mxu0 0.0
        %2067 = vmatprep.subr.mxu0 0.0
        %2068 = vmatpush1.xpose.msra.mxu0 0.0
        %2069 = vmatprep.subr.mxu0 0.0
        %2070 = vmatpush1.xpose.msra.mxu0 0.0
        %2071 = vmatprep.subr.mxu0 0.0
        %2072 = vmatpush1.xpose.msra.mxu0 0.0
        %2073 = vmatprep.subr.mxu0 0.0
        %2074 = vmatpush1.xpose.msra.mxu0 0.0
        %2075 = vmatprep.subr.mxu0 0.0
        %2076 = vmatpush1.xpose.msra.mxu0 0.0
        %2077 = vmatprep.subr.mxu0 0.0
        %2078 = vmatpush1.xpose.msra.mxu0 0.0
        %2079 = vmatprep.subr.mxu0 0.0
        %2080 = vmatpush1.xpose.msra.mxu0 0.0
        %2081 = vmatprep.subr.mxu0 0.0
        %2082 = vmatpush1.xpose.msra.mxu0 0.0
        %2083 = vmatprep.subr.mxu0 0.0
        %2084 = vmatpush1.xpose.msra.mxu0 0.0
        %2085 = vmatprep.subr.mxu0 0.0
        %2086 = vmatpush1.xpose.msra.mxu0 0.0
        %2087 = vmatprep.subr.mxu0 0.0
        %2088 = vmatpush1.xpose.msra.mxu0 0.0
        %2089 = vmatprep.subr.mxu0 0.0
        %2090 = vmatpush1.xpose.msra.mxu0 0.0
        %2091 = vmatprep.subr.mxu0 0.0
        %2092 = vmatpush1.xpose.msra.mxu0 0.0
        %2093 = vmatprep.subr.mxu0 0.0
        %2094 = vmatpush1.xpose.msra.mxu0 0.0
        %2095 = vmatprep.subr.mxu0 0.0
        %2096 = vmatpush1.xpose.msra.mxu0 0.0
        %2097 = vmatprep.subr.mxu0 0.0
        %2098 = vmatpush1.xpose.msra.mxu0 0.0
        %2099 = vmatprep.subr.mxu0 0.0
        %2100 = vmatpush1.xpose.msra.mxu0 0.0
        %2101 = vmatprep.subr.mxu0 0.0
        %2102 = vmatpush1.xpose.msra.mxu0 0.0
        %2103 = vmatprep.mubr.f32.mxu0 0.0
        %2104 = vmatmul.mubr.f32.gmra.mrb[0].mxu0 %v2035
        %v2105 = vpop.f32.mrb[0].mxu0
        %v2106 = vadd.f32 0.0, %v2105
        %v2107 = vpop.f32.mrb[0].mxu0
        %2108 = vdwg.mxu0
        %v2109 = vmul.f32 %v2106, 0.35355338
        %v2110 = vsel %vm1536, %v2109, -inf
        %2111 = vmax.xlane.f32.xlu0 %v2110
        %v2112 = vpop.xlane.xlu0 %2111
        %v2113 = vsub.f32 %v2109, %v2112
        %v2114 = vmul.f32 %v2113, 1.442695
        %v2115 = vpow.pop %v2114
        %v2116 = vsel %vm1536, %v2115, 0.0
        %2117 = vadd.xlane.f32.xlu0 %v2116
        %v2118 = vpop.xlane.xlu0 %2117
        %v2119 = vrcp.pop %v2118
        %v2120 = vmul.f32 %v2115, %v2119
        %2121 = vrot.lane.b32.xlu0 %v1533, 104
        %v2122 = vpop.permute.xlu0 %2121
        %v2125 = vsel %vm1536, %v2120, 0
        %2127 = vmatprep.subr.mxu0 0.0
        %2128 = vmatpush1.msra.mxu0 %v2122
        %2129 = vmatprep.subr.mxu0 0.0
        %2130 = vmatpush1.msra.mxu0 0.0
        %2131 = vmatprep.subr.mxu0 0.0
        %2132 = vmatpush1.msra.mxu0 0.0
        %2133 = vmatprep.subr.mxu0 0.0
        %2134 = vmatpush1.msra.mxu0 0.0
        %2135 = vmatprep.subr.mxu0 0.0
        %2136 = vmatpush1.msra.mxu0 0.0
        %2137 = vmatprep.subr.mxu0 0.0
        %2138 = vmatpush1.msra.mxu0 0.0
        %2139 = vmatprep.subr.mxu0 0.0
        %2140 = vmatpush1.msra.mxu0 0.0
        %2141 = vmatprep.subr.mxu0 0.0
        %2142 = vmatpush1.msra.mxu0 0.0
        %2143 = vmatprep.subr.mxu0 0.0
        %2144 = vmatpush1.msra.mxu0 0.0
        %2145 = vmatprep.subr.mxu0 0.0
        %2146 = vmatpush1.msra.mxu0 0.0
        %2147 = vmatprep.subr.mxu0 0.0
        %2148 = vmatpush1.msra.mxu0 0.0
        %2149 = vmatprep.subr.mxu0 0.0
        %2150 = vmatpush1.msra.mxu0 0.0
        %2151 = vmatprep.subr.mxu0 0.0
        %2152 = vmatpush1.msra.mxu0 0.0
        %2153 = vmatprep.subr.mxu0 0.0
        %2154 = vmatpush1.msra.mxu0 0.0
        %2155 = vmatprep.subr.mxu0 0.0
        %2156 = vmatpush1.msra.mxu0 0.0
        %2157 = vmatprep.subr.mxu0 0.0
        %2158 = vmatpush1.msra.mxu0 0.0
        %2159 = vmatprep.subr.mxu0 0.0
        %2160 = vmatpush1.msra.mxu0 0.0
        %2161 = vmatprep.subr.mxu0 0.0
        %2162 = vmatpush1.msra.mxu0 0.0
        %2163 = vmatprep.subr.mxu0 0.0
        %2164 = vmatpush1.msra.mxu0 0.0
        %2165 = vmatprep.subr.mxu0 0.0
        %2166 = vmatpush1.msra.mxu0 0.0
        %2167 = vmatprep.subr.mxu0 0.0
        %2168 = vmatpush1.msra.mxu0 0.0
        %2169 = vmatprep.subr.mxu0 0.0
        %2170 = vmatpush1.msra.mxu0 0.0
        %2171 = vmatprep.subr.mxu0 0.0
        %2172 = vmatpush1.msra.mxu0 0.0
        %2173 = vmatprep.subr.mxu0 0.0
        %2174 = vmatpush1.msra.mxu0 0.0
        %2175 = vmatprep.subr.mxu0 0.0
        %2176 = vmatpush1.msra.mxu0 0.0
        %2177 = vmatprep.subr.mxu0 0.0
        %2178 = vmatpush1.msra.mxu0 0.0
        %2179 = vmatprep.subr.mxu0 0.0
        %2180 = vmatpush1.msra.mxu0 0.0
        %2181 = vmatprep.subr.mxu0 0.0
        %2182 = vmatpush1.msra.mxu0 0.0
        %2183 = vmatprep.subr.mxu0 0.0
        %2184 = vmatpush1.msra.mxu0 0.0
        %2185 = vmatprep.subr.mxu0 0.0
        %2186 = vmatpush1.msra.mxu0 0.0
        %2187 = vmatprep.subr.mxu0 0.0
        %2188 = vmatpush1.msra.mxu0 0.0
        %2189 = vmatprep.subr.mxu0 0.0
        %2190 = vmatpush1.msra.mxu0 0.0
        %2191 = vmatprep.mubr.f32.mxu0 0.0
        %2192 = vmatmul.mubr.f32.gmra.mrb[0].mxu0 %v2125
        %v2193 = vpop.f32.mrb[0].mxu0
        %v2194 = vadd.f32 0.0, %v2193
        %v2195 = vpop.f32.mrb[0].mxu0
        %2196 = vdwg.mxu0
        %2198 = vrot.lane.b32.xlu0 %v1862, 8
        %v2199 = vpop.permute.xlu0 %2198
        %2202 = vrot.lane.b32.xlu0 %v2028, 16
        %v2203 = vpop.permute.xlu0 %2202
        %2206 = vrot.lane.b32.xlu0 %v2194, 24
        %v2207 = vpop.permute.xlu0 %2206
        %v2209 = vsel %vm1536, %v1695, %v2199
        %vm2210 = vcmask 130048
        %v2211 = vsel %vm2210, %v2209, %v2203
        %vm2212 = vcmask 195584
        %v2213 = vsel %vm2212, %v2211, %v2207
        %v2214 = vld [vmem:[%s1063] sm:$0xff]
        %v2215 = vld [vmem:[%s1063 + $0x8] sm:$0xff]
        %v2216 = vld [vmem:[%s1063 + $0x10] sm:$0xff]
        %v2217 = vld [vmem:[%s1063 + $0x18] sm:$0xff]
        %v2218 = vld [vmem:[%s1071] sm:$0x1]
        %v2220 = vlaneseq
        %v2221 = vshrl.u32 %v2220, 7
        %v2222 = vsub.s32 0, %v2221
        %v2223 = vrot.slane %v2218, %v2222
        %v2226 = vsel %vm1297, %v2213, 0
        %2228 = vmatprep.subr.mxu0 0.0
        %2229 = vmatpush1.msra.mxu0 %v2214
        %2230 = vmatprep.subr.mxu0 0.0
        %2231 = vmatpush1.msra.mxu0 %v2215
        %2232 = vmatprep.subr.mxu0 0.0
        %2233 = vmatpush1.msra.mxu0 %v2216
        %2234 = vmatprep.subr.mxu0 0.0
        %2235 = vmatpush1.msra.mxu0 %v2217
        %2236 = vmatprep.subr.mxu0 0.0
        %2237 = vmatpush1.msra.mxu0 0.0
        %2238 = vmatprep.subr.mxu0 0.0
        %2239 = vmatpush1.msra.mxu0 0.0
        %2240 = vmatprep.subr.mxu0 0.0
        %2241 = vmatpush1.msra.mxu0 0.0
        %2242 = vmatprep.subr.mxu0 0.0
        %2243 = vmatpush1.msra.mxu0 0.0
        %2244 = vmatprep.subr.mxu0 0.0
        %2245 = vmatpush1.msra.mxu0 0.0
        %2246 = vmatprep.subr.mxu0 0.0
        %2247 = vmatpush1.msra.mxu0 0.0
        %2248 = vmatprep.subr.mxu0 0.0
        %2249 = vmatpush1.msra.mxu0 0.0
        %2250 = vmatprep.subr.mxu0 0.0
        %2251 = vmatpush1.msra.mxu0 0.0
        %2252 = vmatprep.subr.mxu0 0.0
        %2253 = vmatpush1.msra.mxu0 0.0
        %2254 = vmatprep.subr.mxu0 0.0
        %2255 = vmatpush1.msra.mxu0 0.0
        %2256 = vmatprep.subr.mxu0 0.0
        %2257 = vmatpush1.msra.mxu0 0.0
        %2258 = vmatprep.subr.mxu0 0.0
        %2259 = vmatpush1.msra.mxu0 0.0
        %2260 = vmatprep.subr.mxu0 0.0
        %2261 = vmatpush1.msra.mxu0 0.0
        %2262 = vmatprep.subr.mxu0 0.0
        %2263 = vmatpush1.msra.mxu0 0.0
        %2264 = vmatprep.subr.mxu0 0.0
        %2265 = vmatpush1.msra.mxu0 0.0
        %2266 = vmatprep.subr.mxu0 0.0
        %2267 = vmatpush1.msra.mxu0 0.0
        %2268 = vmatprep.subr.mxu0 0.0
        %2269 = vmatpush1.msra.mxu0 0.0
        %2270 = vmatprep.subr.mxu0 0.0
        %2271 = vmatpush1.msra.mxu0 0.0
        %2272 = vmatprep.subr.mxu0 0.0
        %2273 = vmatpush1.msra.mxu0 0.0
        %2274 = vmatprep.subr.mxu0 0.0
        %2275 = vmatpush1.msra.mxu0 0.0
        %2276 = vmatprep.subr.mxu0 0.0
        %2277 = vmatpush1.msra.mxu0 0.0
        %2278 = vmatprep.subr.mxu0 0.0
        %2279 = vmatpush1.msra.mxu0 0.0
        %2280 = vmatprep.subr.mxu0 0.0
        %2281 = vmatpush1.msra.mxu0 0.0
        %2282 = vmatprep.subr.mxu0 0.0
        %2283 = vmatpush1.msra.mxu0 0.0
        %2284 = vmatprep.subr.mxu0 0.0
        %2285 = vmatpush1.msra.mxu0 0.0
        %2286 = vmatprep.subr.mxu0 0.0
        %2287 = vmatpush1.msra.mxu0 0.0
        %2288 = vmatprep.subr.mxu0 0.0
        %2289 = vmatpush1.msra.mxu0 0.0
        %2290 = vmatprep.subr.mxu0 0.0
        %2291 = vmatpush1.msra.mxu0 0.0
        %2292 = vmatprep.mubr.f32.mxu0 0.0
        %2293 = vmatmul.mubr.f32.gmra.mrb[0].mxu0 %v2226
        %v2294 = vpop.f32.mrb[0].mxu0
        %v2295 = vadd.f32 %v2223, %v2294
        %v2296 = vpop.f32.mrb[0].mxu0
        %2297 = vdwg.mxu0
        %v2298 = vadd.f32 %v1284, %v2295
        %v2299 = vsel %vm1297, %v2298, 0.0
        %2300 = vadd.xlane.f32.xlu0 %v2299
        %v2301 = vpop.xlane.xlu0 %2300
        %v2302 = vrcp.pop 32.0
        %v2303 = vmul.f32 %v2301, %v2302
        %v2304 = vsub.f32 %v2298, %v2303
        %v2305 = vmul.f32 %v2304, %v2304
        %v2306 = vsel %vm1297, %v2305, 0.0
        %2307 = vadd.xlane.f32.xlu0 %v2306
        %v2308 = vpop.xlane.xlu0 %2307
        %v2309 = vmul.f32 %v2308, %v2302
        %v2310 = vadd.f32 %v2309, 1e-05
        %v2311 = vrsqrt.pop %v2310
        %v2312 = vmul.f32 %v2304, %v2311
        %v2313 = vld [vmem:[%s1079] sm:$0x1]
        %v2315 = vlaneseq
        %v2316 = vshrl.u32 %v2315, 7
        %v2317 = vsub.s32 0, %v2316
        %v2318 = vrot.slane %v2313, %v2317
        %v2320 = vmul.f32 %v2312, %v2318
        %v2321 = vld [vmem:[%s1087] sm:$0x1]
        %v2323 = vlaneseq
        %v2324 = vshrl.u32 %v2323, 7
        %v2325 = vsub.s32 0, %v2324
        %v2326 = vrot.slane %v2321, %v2325
        %v2328 = vadd.f32 %v2320, %v2326
        %v2329 = vld [vmem:[%s1096] sm:$0xff]
        %v2330 = vld [vmem:[%s1096 + $0x8] sm:$0xff]
        %v2331 = vld [vmem:[%s1096 + $0x10] sm:$0xff]
        %v2332 = vld [vmem:[%s1096 + $0x18] sm:$0xff]
        %v2333 = vld [vmem:[%s1104] sm:$0x1]
        %v2335 = vlaneseq
        %v2336 = vshrl.u32 %v2335, 7
        %v2337 = vsub.s32 0, %v2336
        %v2338 = vrot.slane %v2333, %v2337
        %v2341 = vsel %vm1297, %v2328, 0
        %2343 = vmatprep.subr.mxu0 0.0
        %2344 = vmatpush1.msra.mxu0 %v2329
        %2345 = vmatprep.subr.mxu0 0.0
        %2346 = vmatpush1.msra.mxu0 %v2330
        %2347 = vmatprep.subr.mxu0 0.0
        %2348 = vmatpush1.msra.mxu0 %v2331
        %2349 = vmatprep.subr.mxu0 0.0
        %2350 = vmatpush1.msra.mxu0 %v2332
        %2351 = vmatprep.subr.mxu0 0.0
        %2352 = vmatpush1.msra.mxu0 0.0
        %2353 = vmatprep.subr.mxu0 0.0
        %2354 = vmatpush1.msra.mxu0 0.0
        %2355 = vmatprep.subr.mxu0 0.0
        %2356 = vmatpush1.msra.mxu0 0.0
        %2357 = vmatprep.subr.mxu0 0.0
        %2358 = vmatpush1.msra.mxu0 0.0
        %2359 = vmatprep.subr.mxu0 0.0
        %2360 = vmatpush1.msra.mxu0 0.0
        %2361 = vmatprep.subr.mxu0 0.0
        %2362 = vmatpush1.msra.mxu0 0.0
        %2363 = vmatprep.subr.mxu0 0.0
        %2364 = vmatpush1.msra.mxu0 0.0
        %2365 = vmatprep.subr.mxu0 0.0
        %2366 = vmatpush1.msra.mxu0 0.0
        %2367 = vmatprep.subr.mxu0 0.0
        %2368 = vmatpush1.msra.mxu0 0.0
        %2369 = vmatprep.subr.mxu0 0.0
        %2370 = vmatpush1.msra.mxu0 0.0
        %2371 = vmatprep.subr.mxu0 0.0
        %2372 = vmatpush1.msra.mxu0 0.0
        %2373 = vmatprep.subr.mxu0 0.0
        %2374 = vmatpush1.msra.mxu0 0.0
        %2375 = vmatprep.subr.mxu0 0.0
        %2376 = vmatpush1.msra.mxu0 0.0
        %2377 = vmatprep.subr.mxu0 0.0
        %2378 = vmatpush1.msra.mxu0 0.0
        %2379 = vmatprep.subr.mxu0 0.0
        %2380 = vmatpush1.msra.mxu0 0.0
        %2381 = vmatprep.subr.mxu0 0.0
        %2382 = vmatpush1.msra.mxu0 0.0
        %2383 = vmatprep.subr.mxu0 0.0
        %2384 = vmatpush1.msra.mxu0 0.0
        %2385 = vmatprep.subr.mxu0 0.0
        %2386 = vmatpush1.msra.mxu0 0.0
        %2387 = vmatprep.subr.mxu0 0.0
        %2388 = vmatpush1.msra.mxu0 0.0
        %2389 = vmatprep.subr.mxu0 0.0
        %2390 = vmatpush1.msra.mxu0 0.0
        %2391 = vmatprep.subr.mxu0 0.0
        %2392 = vmatpush1.msra.mxu0 0.0
        %2393 = vmatprep.subr.mxu0 0.0
        %2394 = vmatpush1.msra.mxu0 0.0
        %2395 = vmatprep.subr.mxu0 0.0
        %2396 = vmatpush1.msra.mxu0 0.0
        %2397 = vmatprep.subr.mxu0 0.0
        %2398 = vmatpush1.msra.mxu0 0.0
        %2399 = vmatprep.subr.mxu0 0.0
        %2400 = vmatpush1.msra.mxu0 0.0
        %2401 = vmatprep.subr.mxu0 0.0
        %2402 = vmatpush1.msra.mxu0 0.0
        %2403 = vmatprep.subr.mxu0 0.0
        %2404 = vmatpush1.msra.mxu0 0.0
        %2405 = vmatprep.subr.mxu0 0.0
        %2406 = vmatpush1.msra.mxu0 0.0
        %2407 = vmatprep.mubr.f32.mxu0 0.0
        %2408 = vmatmul.mubr.f32.gmra.mrb[0].mxu0 %v2341
        %v2409 = vpop.f32.mrb[0].mxu0
        %v2410 = vadd.f32 %v2338, %v2409
        %v2411 = vpop.f32.mrb[0].mxu0
        %2412 = vdwg.mxu0
        %v2413 = vmax.f32 %v2410, 0.0
        %v2414 = vld [vmem:[%s1113] sm:$0xff]
        %v2415 = vld [vmem:[%s1113 + $0x8] sm:$0xff]
        %v2416 = vld [vmem:[%s1113 + $0x10] sm:$0xff]
        %v2417 = vld [vmem:[%s1113 + $0x18] sm:$0xff]
        %v2418 = vld [vmem:[%s1113 + $0x20] sm:$0xff]
        %v2419 = vld [vmem:[%s1113 + $0x28] sm:$0xff]
        %v2420 = vld [vmem:[%s1113 + $0x30] sm:$0xff]
        %v2421 = vld [vmem:[%s1113 + $0x38] sm:$0xff]
        %v2422 = vld [vmem:[%s1121] sm:$0x1]
        %v2424 = vlaneseq
        %v2425 = vshrl.u32 %v2424, 7
        %v2426 = vsub.s32 0, %v2425
        %v2427 = vrot.slane %v2422, %v2426
        %vm2429 = vcmask 523264
        %v2431 = vsel %vm2429, %v2413, 0
        %2433 = vmatprep.subr.mxu0 0.0
        %2434 = vmatpush1.msra.mxu0 %v2414
        %2435 = vmatprep.subr.mxu0 0.0
        %2436 = vmatpush1.msra.mxu0 %v2415
        %2437 = vmatprep.subr.mxu0 0.0
        %2438 = vmatpush1.msra.mxu0 %v2416
        %2439 = vmatprep.subr.mxu0 0.0
        %2440 = vmatpush1.msra.mxu0 %v2417
        %2441 = vmatprep.subr.mxu0 0.0
        %2442 = vmatpush1.msra.mxu0 %v2418
        %2443 = vmatprep.subr.mxu0 0.0
        %2444 = vmatpush1.msra.mxu0 %v2419
        %2445 = vmatprep.subr.mxu0 0.0
        %2446 = vmatpush1.msra.mxu0 %v2420
        %2447 = vmatprep.subr.mxu0 0.0
        %2448 = vmatpush1.msra.mxu0 %v2421
        %2449 = vmatprep.subr.mxu0 0.0
        %2450 = vmatpush1.msra.mxu0 0.0
        %2451 = vmatprep.subr.mxu0 0.0
        %2452 = vmatpush1.msra.mxu0 0.0
        %2453 = vmatprep.subr.mxu0 0.0
        %2454 = vmatpush1.msra.mxu0 0.0
        %2455 = vmatprep.subr.mxu0 0.0
        %2456 = vmatpush1.msra.mxu0 0.0
        %2457 = vmatprep.subr.mxu0 0.0
        %2458 = vmatpush1.msra.mxu0 0.0
        %2459 = vmatprep.subr.mxu0 0.0
        %2460 = vmatpush1.msra.mxu0 0.0
        %2461 = vmatprep.subr.mxu0 0.0
        %2462 = vmatpush1.msra.mxu0 0.0
        %2463 = vmatprep.subr.mxu0 0.0
        %2464 = vmatpush1.msra.mxu0 0.0
        %2465 = vmatprep.subr.mxu0 0.0
        %2466 = vmatpush1.msra.mxu0 0.0
        %2467 = vmatprep.subr.mxu0 0.0
        %2468 = vmatpush1.msra.mxu0 0.0
        %2469 = vmatprep.subr.mxu0 0.0
        %2470 = vmatpush1.msra.mxu0 0.0
        %2471 = vmatprep.subr.mxu0 0.0
        %2472 = vmatpush1.msra.mxu0 0.0
        %2473 = vmatprep.subr.mxu0 0.0
        %2474 = vmatpush1.msra.mxu0 0.0
        %2475 = vmatprep.subr.mxu0 0.0
        %2476 = vmatpush1.msra.mxu0 0.0
        %2477 = vmatprep.subr.mxu0 0.0
        %2478 = vmatpush1.msra.mxu0 0.0
        %2479 = vmatprep.subr.mxu0 0.0
        %2480 = vmatpush1.msra.mxu0 0.0
        %2481 = vmatprep.subr.mxu0 0.0
        %2482 = vmatpush1.msra.mxu0 0.0
        %2483 = vmatprep.subr.mxu0 0.0
        %2484 = vmatpush1.msra.mxu0 0.0
        %2485 = vmatprep.subr.mxu0 0.0
        %2486 = vmatpush1.msra.mxu0 0.0
        %2487 = vmatprep.subr.mxu0 0.0
        %2488 = vmatpush1.msra.mxu0 0.0
        %2489 = vmatprep.subr.mxu0 0.0
        %2490 = vmatpush1.msra.mxu0 0.0
        %2491 = vmatprep.subr.mxu0 0.0
        %2492 = vmatpush1.msra.mxu0 0.0
        %2493 = vmatprep.subr.mxu0 0.0
        %2494 = vmatpush1.msra.mxu0 0.0
        %2495 = vmatprep.subr.mxu0 0.0
        %2496 = vmatpush1.msra.mxu0 0.0
        %2497 = vmatprep.mubr.f32.mxu0 0.0
        %2498 = vmatmul.mubr.f32.gmra.mrb[0].mxu0 %v2431
        %v2499 = vpop.f32.mrb[0].mxu0
        %v2500 = vadd.f32 %v2427, %v2499
        %v2501 = vpop.f32.mrb[0].mxu0
        %2502 = vdwg.mxu0
        %v2503 = vadd.f32 %v2328, %v2500
        %v2504 = vsel %vm1297, %v2503, 0.0
        %2505 = vadd.xlane.f32.xlu0 %v2504
        %v2506 = vpop.xlane.xlu0 %2505
        %v2507 = vmul.f32 %v2506, %v2302
        %v2508 = vsub.f32 %v2503, %v2507
        %v2509 = vmul.f32 %v2508, %v2508
        %v2510 = vsel %vm1297, %v2509, 0.0
        %2511 = vadd.xlane.f32.xlu0 %v2510
        %v2512 = vpop.xlane.xlu0 %2511
        %v2513 = vmul.f32 %v2512, %v2302
        %v2514 = vadd.f32 %v2513, 1e-05
        %v2515 = vrsqrt.pop %v2514
        %v2516 = vmul.f32 %v2508, %v2515
        %v2517 = vld [vmem:[%s1129] sm:$0x1]
        %v2519 = vlaneseq
        %v2520 = vshrl.u32 %v2519, 7
        %v2521 = vsub.s32 0, %v2520
        %v2522 = vrot.slane %v2517, %v2521
        %v2524 = vmul.f32 %v2516, %v2522
        %v2525 = vld [vmem:[%s1137] sm:$0x1]
        %v2527 = vlaneseq
        %v2528 = vshrl.u32 %v2527, 7
        %v2529 = vsub.s32 0, %v2528
        %v2530 = vrot.slane %v2525, %v2529
        %v2532 = vadd.f32 %v2524, %v2530
        %2533 = vst.msk [vmem:[#allocation2] sm:$0xff] %vm1297, %v2532
        %p2534 = scmp.eq.s32.totalorder %s70, 1
        // Predicated region
        $region185: #{tpu_custom_call.1} parent=99 // pred_check
          %p2535 = pneg %p2534
        $region186: #{tpu_custom_call.1} parent=99 // pred_check_branch
          %2537 = sbr.rel (%p2535) target = $region188
        $region187: #{tpu_custom_call.1} parent=99 // pred_region
          %v2538 = vld [vmem:[#allocation32] sm:$0xff]
          %v2539 = vld [vmem:[#allocation32 + $0x8] sm:$0xff]
          %v2540 = vld [vmem:[#allocation32 + $0x10] sm:$0xff]
          %v2541 = vld [vmem:[#allocation32 + $0x18] sm:$0xff]
          %v2542 = vld [vmem:[#allocation33] sm:$0x1]
          %v2544 = vlaneseq
          %v2545 = vshrl.u32 %v2544, 7
          %v2546 = vsub.s32 0, %v2545
          %v2547 = vrot.slane %v2542, %v2546
          %v2550 = vsel %vm1297, %v2532, 0
          %2552 = vmatprep.subr.mxu0 0.0
          %2553 = vmatpush1.msra.mxu0 %v2538
          %2554 = vmatprep.subr.mxu0 0.0
          %2555 = vmatpush1.msra.mxu0 %v2539
          %2556 = vmatprep.subr.mxu0 0.0
          %2557 = vmatpush1.msra.mxu0 %v2540
          %2558 = vmatprep.subr.mxu0 0.0
          %2559 = vmatpush1.msra.mxu0 %v2541
          %2560 = vmatprep.subr.mxu0 0.0
          %2561 = vmatpush1.msra.mxu0 0.0
          %2562 = vmatprep.subr.mxu0 0.0
          %2563 = vmatpush1.msra.mxu0 0.0
          %2564 = vmatprep.subr.mxu0 0.0
          %2565 = vmatpush1.msra.mxu0 0.0
          %2566 = vmatprep.subr.mxu0 0.0
          %2567 = vmatpush1.msra.mxu0 0.0
          %2568 = vmatprep.subr.mxu0 0.0
          %2569 = vmatpush1.msra.mxu0 0.0
          %2570 = vmatprep.subr.mxu0 0.0
          %2571 = vmatpush1.msra.mxu0 0.0
          %2572 = vmatprep.subr.mxu0 0.0
          %2573 = vmatpush1.msra.mxu0 0.0
          %2574 = vmatprep.subr.mxu0 0.0
          %2575 = vmatpush1.msra.mxu0 0.0
          %2576 = vmatprep.subr.mxu0 0.0
          %2577 = vmatpush1.msra.mxu0 0.0
          %2578 = vmatprep.subr.mxu0 0.0
          %2579 = vmatpush1.msra.mxu0 0.0
          %2580 = vmatprep.subr.mxu0 0.0
          %2581 = vmatpush1.msra.mxu0 0.0
          %2582 = vmatprep.subr.mxu0 0.0
          %2583 = vmatpush1.msra.mxu0 0.0
          %2584 = vmatprep.subr.mxu0 0.0
          %2585 = vmatpush1.msra.mxu0 0.0
          %2586 = vmatprep.subr.mxu0 0.0
          %2587 = vmatpush1.msra.mxu0 0.0
          %2588 = vmatprep.subr.mxu0 0.0
          %2589 = vmatpush1.msra.mxu0 0.0
          %2590 = vmatprep.subr.mxu0 0.0
          %2591 = vmatpush1.msra.mxu0 0.0
          %2592 = vmatprep.subr.mxu0 0.0
          %2593 = vmatpush1.msra.mxu0 0.0
          %2594 = vmatprep.subr.mxu0 0.0
          %2595 = vmatpush1.msra.mxu0 0.0
          %2596 = vmatprep.subr.mxu0 0.0
          %2597 = vmatpush1.msra.mxu0 0.0
          %2598 = vmatprep.subr.mxu0 0.0
          %2599 = vmatpush1.msra.mxu0 0.0
          %2600 = vmatprep.subr.mxu0 0.0
          %2601 = vmatpush1.msra.mxu0 0.0
          %2602 = vmatprep.subr.mxu0 0.0
          %2603 = vmatpush1.msra.mxu0 0.0
          %2604 = vmatprep.subr.mxu0 0.0
          %2605 = vmatpush1.msra.mxu0 0.0
          %2606 = vmatprep.subr.mxu0 0.0
          %2607 = vmatpush1.msra.mxu0 0.0
          %2608 = vmatprep.subr.mxu0 0.0
          %2609 = vmatpush1.msra.mxu0 0.0
          %2610 = vmatprep.subr.mxu0 0.0
          %2611 = vmatpush1.msra.mxu0 0.0
          %2612 = vmatprep.subr.mxu0 0.0
          %2613 = vmatpush1.msra.mxu0 0.0
          %2614 = vmatprep.subr.mxu0 0.0
          %2615 = vmatpush1.msra.mxu0 0.0
          %2616 = vmatprep.mubr.f32.mxu0 0.0
          %2617 = vmatmul.mubr.f32.gmra.mrb[0].mxu0 %v2550
          %v2618 = vpop.f32.mrb[0].mxu0
          %v2619 = vadd.f32 %v2547, %v2618
          %v2620 = vpop.f32.mrb[0].mxu0
          %2621 = vdwg.mxu0
          %2622 = vst [vmem:[%s1276] sm:$0xff] %v2619
        $region188: #{tpu_custom_call.1} parent=99 // pred_fallthru
          _
        %s2623 = sand.u32 %s595, 1
        %s2624 = scalar_lea.sflag [#allocation5], %s2623
        %s2625 = sand.u32 %s595, 1
        %s2626 = smul.addr %s2625, 8
        %s2627 = scalar_lea.vmem [#allocation35], %s2626
        // Predicated region
        $region189: #{tpu_custom_call.1} parent=99 // pred_check
          %p2628 = pneg %p605
        $region190: #{tpu_custom_call.1} parent=99 // pred_check_branch
          %2630 = sbr.rel (%p2628) target = $region192
        $region191: #{tpu_custom_call.1} parent=99 // pred_region
          %s2632 = ssub.s32 128, 128
          %2633 = vsyncadd %s2624, %s2632
          %s2634 = smul.addr %s69, 128
          %s2635 = scalar_lea.hbm %s20, %s2634
          %s2637 = sshll.u32 %s2627, 4
          %s2638 = int_to_ptr.vmem [resolvable:$true] %s2637
          %2640 = dma.vmem_to_hbm [thread:$0]  %s2638, 128, %s2635, %s2624
        $region192: #{tpu_custom_call.1} parent=99 // pred_fallthru
          _
      $region100: #{tpu_custom_call.1} parent=5 // pred_fallthru
        _
      %p2641 = scmp.le.s32.totalorder 2, %s60
      // Predicated region
      $region193: #{tpu_custom_call.1} parent=5 // pred_check
        %p2642 = pneg %p2641
      $region194: #{tpu_custom_call.1} parent=5 // pred_check_branch
        %2644 = sbr.rel (%p2642) target = $region196
      $region195: #{tpu_custom_call.1} parent=5 // pred_region
        %s2645 = ssub.s32 %s60, 2
        // Predicated region
        $region197: #{tpu_custom_call.1} parent=195 // pred_check
          %p2646 = pneg %p611
        $region198: #{tpu_custom_call.1} parent=195 // pred_check_branch
          %2648 = sbr.rel (%p2646) target = $region200
        $region199: #{tpu_custom_call.1} parent=195 // pred_region
          %s2649 = sand.u32 %s596, 1
          %s2650 = scalar_lea.sflag [#allocation5], %s2649
          %s2651 = sand.u32 %s596, 1
          %s2652 = smul.addr %s2651, 8
          %s2653 = scalar_lea.vmem [#allocation35], %s2652
          %2654 = dma.done %s2650, 128
        $region200: #{tpu_custom_call.1} parent=195 // pred_fallthru
          _
      $region196: #{tpu_custom_call.1} parent=5 // pred_fallthru
        _
    $region6: #{tpu_custom_call.1} parent=1 // loop_footer
      %s64 = sadd.s32 1, %s60
    $region7: #{tpu_custom_call.1} parent=1 // loop_footer_branch
      %59 = sbr.rel target = $region3
    $region8: #{tpu_custom_call.1} parent=1 // loop_exit
      _
    %2655 = vsyncpa [#allocation4], 1
    %s2656 = scalar_lea.sflag [#allocation4], 1
    %2657 = vsyncpa %s2656, 1
    %2658 = vsyncpa [#allocation7], 1
    %s2659 = scalar_lea.sflag [#allocation7], 1
    %2660 = vsyncpa %s2659, 1
    %2661 = vsyncpa [#allocation10], 1
    %s2662 = scalar_lea.sflag [#allocation10], 1
    %2663 = vsyncpa %s2662, 1
    %2664 = vsyncpa [#allocation13], 1
    %s2665 = scalar_lea.sflag [#allocation13], 1
    %2666 = vsyncpa %s2665, 1
    %2667 = vsyncpa [#allocation16], 1
    %s2668 = scalar_lea.sflag [#allocation16], 1
    %2669 = vsyncpa %s2668, 1
    %2670 = vsyncpa [#allocation19], 1
    %s2671 = scalar_lea.sflag [#allocation19], 1
    %2672 = vsyncpa %s2671, 1
    %2673 = vsyncpa [#allocation22], 1
    %s2674 = scalar_lea.sflag [#allocation22], 1
    %2675 = vsyncpa %s2674, 1
    %2676 = vsyncpa [#allocation25], 1
    %s2677 = scalar_lea.sflag [#allocation25], 1
    %2678 = vsyncpa %s2677, 1
    %2679 = vsyncpa [#allocation28], 1
    %s2680 = scalar_lea.sflag [#allocation28], 1
    %2681 = vsyncpa %s2680, 1
    %2682 = vsyncpa [#allocation31], 1
    %s2683 = scalar_lea.sflag [#allocation31], 1
    %2684 = vsyncpa %s2683, 1
    %2685 = vsyncpa [#allocation34], 1
    %2686 = vsyncpa [#allocation5], 1
    %s2687 = scalar_lea.sflag [#allocation5], 1
    %2688 = vsyncpa %s2687, 1

</llo_original>
